<compile_context>
chip_gen: v5e
topology: v5e:2x2
jax: 0.10.0
libtpu: 0.0.40
codegen_flags: <defaults>
</compile_context>

<pallas_src>
import functools

import jax
import jax.numpy as jnp
from jax.experimental import pallas as pl
from jax.experimental.pallas import tpu as pltpu

# Real / padded (lane-dense) dimensions.
PIX = 784                  # kept unpadded (full-extent last dim is legal)
HID, HID_P = 400, 512      # 512 = 4 * 128
LAT, LAT_P = 20, 128       # 128 = 1 * 128


def _round_up(n, m):
    return (n + m - 1) // m * m


def vae_kernel(
    x_ref, eps_ref,
    w1_ref, b1_ref,
    wh_ref, bh_ref,          # fused mu|logvar heads, (HID_P, 2*LAT_P) bf16
    w3_ref, b3_ref,
    w4_ref, b4_ref,
    xrec_ref, heads_ref,
):
    # encode: fc1 -> relu   (bf16 MXU, f32 accumulation + f32 elementwise)
    x = x_ref[...].astype(jnp.bfloat16)                        # (TB, 784)
    fc1 = jnp.dot(x, w1_ref[...],
                  preferred_element_type=jnp.float32) + b1_ref[...]
    h1 = jnp.maximum(fc1, 0.0)                                 # (TB, HID_P) f32

    # fused mu / logvar heads: one lane-dense matmul, split at 128-lane edge
    heads = jnp.dot(h1.astype(jnp.bfloat16), wh_ref[...],
                    preferred_element_type=jnp.float32) + bh_ref[...]
    mu = heads[:, :LAT_P]                                      # (TB, LAT_P)
    logvar = heads[:, LAT_P:]                                  # (TB, LAT_P)

    # reparameterize: z = mu + eps * exp(0.5 * logvar)   (all f32)
    # padded lanes: mu=0, logvar=0 -> std=1; harmless (w3 padded rows are 0)
    std = jnp.exp(0.5 * logvar)
    z = mu + eps_ref[...] * std                                # (TB, LAT_P)

    # decode: fc3 -> relu -> fc4 -> sigmoid
    fc3 = jnp.dot(z.astype(jnp.bfloat16), w3_ref[...],
                  preferred_element_type=jnp.float32) + b3_ref[...]
    h3 = jnp.maximum(fc3, 0.0)                                 # (TB, HID_P) f32
    fc4 = jnp.dot(h3.astype(jnp.bfloat16), w4_ref[...],
                  preferred_element_type=jnp.float32) + b4_ref[...]
    xrec_ref[...] = jax.nn.sigmoid(fc4)                        # (TB, 784) f32
    heads_ref[...] = heads                                     # (TB, 2*LAT_P)


def _prep_params(params):
    """Zero-pad weights to lane-dense output shapes, fuse mu/logvar heads,
    store weights as bf16 (biases stay f32 and are added post-accumulation)."""
    bf16, f32 = jnp.bfloat16, jnp.float32

    w1 = jnp.pad(params["w1"].astype(f32),
                 ((0, 0), (0, HID_P - HID))).astype(bf16)          # (784, 512)
    b1 = jnp.pad(params["b1"].astype(f32), ((0, 0), (0, HID_P - HID)))

    wh = jnp.zeros((HID, 2 * LAT_P), f32)
    wh = wh.at[:, :LAT].set(params["w21"].astype(f32))
    wh = wh.at[:, LAT_P:LAT_P + LAT].set(params["w22"].astype(f32))
    wh = jnp.pad(wh, ((0, HID_P - HID), (0, 0))).astype(bf16)      # (512, 256)
    bh = jnp.zeros((1, 2 * LAT_P), f32)
    bh = bh.at[:, :LAT].set(params["b21"].astype(f32))
    bh = bh.at[:, LAT_P:LAT_P + LAT].set(params["b22"].astype(f32))

    w3 = jnp.pad(params["w3"].astype(f32),
                 ((0, LAT_P - LAT), (0, HID_P - HID))).astype(bf16)  # (128, 512)
    b3 = jnp.pad(params["b3"].astype(f32), ((0, 0), (0, HID_P - HID)))
    w4 = jnp.pad(params["w4"].astype(f32),
                 ((0, HID_P - HID), (0, 0))).astype(bf16)            # (512, 784)
    b4 = params["b4"].astype(f32)                                     # (1, 784)
    return w1, b1, wh, bh, w3, b3, w4, b4


@functools.partial(jax.jit, static_argnames=("max_tile",))
def vae_forward(x, eps, params, *, max_tile=512):
    """x: (B, 1, 28, 28) or (B, 784) float32; eps: (B, 20) float32.
    Returns (x_reconstr (B, 784), mu (B, 20), logvar (B, 20))."""
    x2d = x.reshape(-1, PIX).astype(jnp.float32)    # mirrors x.view(-1, 784)
    B = x2d.shape[0]

    # Batch tiling: TB multiple of 8 (sublane).  Aim for >= 2 grid steps so
    # the "parallel" axis shards across both v7x TensorCores; cap TB so the
    # double-buffered working set stays well under v7x's 64 MiB VMEM.
    half = _round_up(max(1, (B + 1) // 2), 8)
    TB = min(max_tile, half)
    B_pad = _round_up(B, TB)
    grid = (B_pad // TB,)

    # Row-pad only (no column pad, no dtype pass over x); no-op when B==B_pad.
    x_p = jnp.pad(x2d, ((0, B_pad - B), (0, 0)))
    eps_p = jnp.zeros((B_pad, LAT_P), jnp.float32).at[:B, :LAT].set(
        eps.astype(jnp.float32))

    w1, b1, wh, bh, w3, b3, w4, b4 = _prep_params(params)

    tile_spec = lambda cols: pl.BlockSpec((TB, cols), lambda i: (i, 0))
    const_spec = lambda r, c: pl.BlockSpec((r, c), lambda i: (0, 0))

    in_specs = [
        tile_spec(PIX),                   # x      (TB, 784) f32
        tile_spec(LAT_P),                 # eps    (TB, 128) f32
        const_spec(PIX, HID_P),           # w1     bf16
        const_spec(1, HID_P),             # b1     f32
        const_spec(HID_P, 2 * LAT_P),     # fused heads weight, bf16
        const_spec(1, 2 * LAT_P),         # fused heads bias, f32
        const_spec(LAT_P, HID_P),         # w3     bf16
        const_spec(1, HID_P),             # b3     f32
        const_spec(HID_P, PIX),           # w4     bf16
        const_spec(1, PIX),               # b4     f32
    ]
    out_specs = (tile_spec(PIX), tile_spec(2 * LAT_P))

    flops = 2 * B_pad * (PIX * HID_P + HID_P * 2 * LAT_P
                         + LAT_P * HID_P + HID_P * PIX)
    bytes_accessed = (
        4 * B_pad * (PIX + LAT_P)                                  # x, eps in
        + 2 * (PIX * HID_P + HID_P * 2 * LAT_P
               + LAT_P * HID_P + HID_P * PIX)                      # bf16 weights
        + 4 * (2 * HID_P + 2 * LAT_P + PIX)                        # f32 biases
        + 4 * B_pad * (PIX + 2 * LAT_P))                           # outputs
    cost = pl.CostEstimate(flops=flops,
                           transcendentals=B_pad * (LAT_P + PIX),
                           bytes_accessed=bytes_accessed)

    xrec_p, heads_p = pl.pallas_call(
        vae_kernel,
        out_shape=(
            jax.ShapeDtypeStruct((B_pad, PIX), jnp.float32),
            jax.ShapeDtypeStruct((B_pad, 2 * LAT_P), jnp.float32),
        ),
        grid=grid,
        in_specs=in_specs,
        out_specs=out_specs,
        compiler_params=pltpu.CompilerParams(
            dimension_semantics=("parallel",),
            vmem_limit_bytes=48 << 20,
        ),
        cost_estimate=cost,
    )(x_p, eps_p, w1, b1, wh, bh, w3, b3, w4, b4)

    x_reconstr = xrec_p[:B]                         # (B, 784), no column slice
    mu = heads_p[:B, :LAT]
    logvar = heads_p[:B, LAT_P:LAT_P + LAT]
    return x_reconstr, mu, logvar


def init_params(key):
    """Deterministic init matching PyTorch Linear shapes.
    Stored pre-transposed: w has shape (in_features, out_features)."""
    def linear(key, fan_in, fan_out):
        kw, kb = jax.random.split(key)
        bound = 1.0 / jnp.sqrt(fan_in)
        w = jax.random.uniform(kw, (fan_in, fan_out), jnp.float32, -bound, bound)
        b = jax.random.uniform(kb, (1, fan_out), jnp.float32, -bound, bound)
        return w, b

    k1, k21, k22, k3, k4 = jax.random.split(key, 5)
    w1, b1 = linear(k1, PIX, HID)
    w21, b21 = linear(k21, HID, LAT)
    w22, b22 = linear(k22, HID, LAT)
    w3, b3 = linear(k3, LAT, HID)
    w4, b4 = linear(k4, HID, PIX)
    return dict(w1=w1, b1=b1, w21=w21, b21=b21, w22=w22, b22=b22,
                w3=w3, b3=b3, w4=w4, b4=b4)


if __name__ == "__main__":
    key = jax.random.PRNGKey(0)
    k_params, k_x, k_eps = jax.random.split(key, 3)

    params = init_params(k_params)

    B = 2
    x = jax.random.uniform(k_x, (B, 1, 28, 28), jnp.float32)   # NCHW, like MNIST
    eps = jax.random.normal(k_eps, (B, LAT), jnp.float32)      # torch.randn_like(std)

    x_reconstr, mu, logvar = jax.block_until_ready(vae_forward(x, eps, params))

    # sanity check against plain-JAX f32 reference (tolerances relaxed for the
    # bf16 matmuls; accumulation / elementwise math in the kernel is f32)
    x2d = x.reshape(-1, PIX)
    h1 = jnp.maximum(x2d @ params["w1"] + params["b1"], 0.0)
    mu_ref = h1 @ params["w21"] + params["b21"]
    lv_ref = h1 @ params["w22"] + params["b22"]
    z_ref = mu_ref + eps * jnp.exp(0.5 * lv_ref)
    h3 = jnp.maximum(z_ref @ params["w3"] + params["b3"], 0.0)
    xr_ref = jax.nn.sigmoid(h3 @ params["w4"] + params["b4"])

    assert x_reconstr.shape == (B, PIX)
    assert mu.shape == (B, LAT) and logvar.shape == (B, LAT)
    assert jnp.allclose(x_reconstr, xr_ref, atol=2e-2, rtol=2e-2)
    assert jnp.allclose(mu, mu_ref, atol=2e-2, rtol=2e-2)
    assert jnp.allclose(logvar, lv_ref, atol=2e-2, rtol=2e-2)
    print("KERNEL_OK")
</pallas_src>

<mosaic_0001>
module attributes {stable_mosaic.version = 11 : i64} {
  func.func @vae_kernel(%arg0: i32, %arg1: memref<8x784xf32, #tpu.memory_space<vmem>>, %arg2: memref<8x128xf32, #tpu.memory_space<vmem>>, %arg3: memref<784x512xbf16, #tpu.memory_space<vmem>>, %arg4: memref<1x512xf32, #tpu.memory_space<vmem>>, %arg5: memref<512x256xbf16, #tpu.memory_space<vmem>>, %arg6: memref<1x256xf32, #tpu.memory_space<vmem>>, %arg7: memref<128x512xbf16, #tpu.memory_space<vmem>>, %arg8: memref<1x512xf32, #tpu.memory_space<vmem>>, %arg9: memref<512x784xbf16, #tpu.memory_space<vmem>>, %arg10: memref<1x784xf32, #tpu.memory_space<vmem>>, %arg11: memref<8x784xf32, #tpu.memory_space<vmem>>, %arg12: memref<8x256xf32, #tpu.memory_space<vmem>>) attributes {dimension_semantics = [#tpu.dimension_semantics<parallel>], iteration_bounds = array<i64: 1>, scalar_prefetch = 0 : i64, scratch_operands = 0 : i64, tpu.core_type = #tpu.core_type<tc>, window_params = [{transform_indices = @transform_0, window_bounds = array<i64: 8, 784>}, {transform_indices = @transform_1, window_bounds = array<i64: 8, 128>}, {pipeline_mode = #tpu.pipeline_mode<synchronous>, transform_indices = @transform_2, window_bounds = array<i64: 784, 512>}, {pipeline_mode = #tpu.pipeline_mode<synchronous>, transform_indices = @transform_3, window_bounds = array<i64: 1, 512>}, {pipeline_mode = #tpu.pipeline_mode<synchronous>, transform_indices = @transform_4, window_bounds = array<i64: 512, 256>}, {pipeline_mode = #tpu.pipeline_mode<synchronous>, transform_indices = @transform_5, window_bounds = array<i64: 1, 256>}, {pipeline_mode = #tpu.pipeline_mode<synchronous>, transform_indices = @transform_6, window_bounds = array<i64: 128, 512>}, {pipeline_mode = #tpu.pipeline_mode<synchronous>, transform_indices = @transform_7, window_bounds = array<i64: 1, 512>}, {pipeline_mode = #tpu.pipeline_mode<synchronous>, transform_indices = @transform_8, window_bounds = array<i64: 512, 784>}, {pipeline_mode = #tpu.pipeline_mode<synchronous>, transform_indices = @transform_9, window_bounds = array<i64: 1, 784>}, {transform_indices = @transform_10, window_bounds = array<i64: 8, 784>}, {transform_indices = @transform_11, window_bounds = array<i64: 8, 256>}]} {
    %c0 = arith.constant 0 : index
    %c0_0 = arith.constant 0 : index
    %0 = vector.load %arg1[%c0, %c0_0] : memref<8x784xf32, #tpu.memory_space<vmem>>, vector<8x784xf32>
    %1 = arith.truncf %0 : vector<8x784xf32> to vector<8x784xbf16>
    %c0_1 = arith.constant 0 : index
    %c0_2 = arith.constant 0 : index
    %2 = vector.load %arg3[%c0_1, %c0_2] : memref<784x512xbf16, #tpu.memory_space<vmem>>, vector<784x512xbf16>
    %cst = arith.constant dense<0.000000e+00> : vector<8x512xf32>
    %3 = tpu.matmul %1, %2, %cst {dimension_numbers = #tpu.dot_dimension_numbers<[1], [0], [0], [1], [0, 0, 1, 1], [], []>} : vector<8x784xbf16>, vector<784x512xbf16>, vector<8x512xf32> -> vector<8x512xf32>
    %c0_3 = arith.constant 0 : index
    %c0_4 = arith.constant 0 : index
    %4 = vector.load %arg4[%c0_3, %c0_4] : memref<1x512xf32, #tpu.memory_space<vmem>>, vector<1x512xf32>
    %5 = vector.broadcast %4 : vector<1x512xf32> to vector<8x512xf32>
    %6 = arith.addf %3, %5 : vector<8x512xf32>
    %cst_5 = arith.constant 0.000000e+00 : f32
    %7 = vector.broadcast %cst_5 : f32 to vector<8x512xf32>
    %8 = arith.maximumf %6, %7 : vector<8x512xf32>
    %9 = arith.truncf %8 : vector<8x512xf32> to vector<8x512xbf16>
    %c0_6 = arith.constant 0 : index
    %c0_7 = arith.constant 0 : index
    %10 = vector.load %arg5[%c0_6, %c0_7] : memref<512x256xbf16, #tpu.memory_space<vmem>>, vector<512x256xbf16>
    %cst_8 = arith.constant dense<0.000000e+00> : vector<8x256xf32>
    %11 = tpu.matmul %9, %10, %cst_8 {dimension_numbers = #tpu.dot_dimension_numbers<[1], [0], [0], [1], [0, 0, 1, 1], [], []>} : vector<8x512xbf16>, vector<512x256xbf16>, vector<8x256xf32> -> vector<8x256xf32>
    %c0_9 = arith.constant 0 : index
    %c0_10 = arith.constant 0 : index
    %12 = vector.load %arg6[%c0_9, %c0_10] : memref<1x256xf32, #tpu.memory_space<vmem>>, vector<1x256xf32>
    %13 = vector.broadcast %12 : vector<1x256xf32> to vector<8x256xf32>
    %14 = arith.addf %11, %13 : vector<8x256xf32>
    %15 = vector.extract_strided_slice %14 {offsets = [0, 0], sizes = [8, 128], strides = [1, 1]} : vector<8x256xf32> to vector<8x128xf32>
    %16 = vector.extract_strided_slice %14 {offsets = [0, 128], sizes = [8, 128], strides = [1, 1]} : vector<8x256xf32> to vector<8x128xf32>
    %cst_11 = arith.constant 5.000000e-01 : f32
    %17 = vector.broadcast %cst_11 : f32 to vector<8x128xf32>
    %18 = arith.mulf %17, %16 : vector<8x128xf32>
    %19 = math.exp %18 : vector<8x128xf32>
    %c0_12 = arith.constant 0 : index
    %c0_13 = arith.constant 0 : index
    %20 = vector.load %arg2[%c0_12, %c0_13] : memref<8x128xf32, #tpu.memory_space<vmem>>, vector<8x128xf32>
    %21 = arith.mulf %20, %19 : vector<8x128xf32>
    %22 = arith.addf %15, %21 : vector<8x128xf32>
    %23 = arith.truncf %22 : vector<8x128xf32> to vector<8x128xbf16>
    %c0_14 = arith.constant 0 : index
    %c0_15 = arith.constant 0 : index
    %24 = vector.load %arg7[%c0_14, %c0_15] : memref<128x512xbf16, #tpu.memory_space<vmem>>, vector<128x512xbf16>
    %cst_16 = arith.constant dense<0.000000e+00> : vector<8x512xf32>
    %25 = tpu.matmul %23, %24, %cst_16 {dimension_numbers = #tpu.dot_dimension_numbers<[1], [0], [0], [1], [0, 0, 1, 1], [], []>} : vector<8x128xbf16>, vector<128x512xbf16>, vector<8x512xf32> -> vector<8x512xf32>
    %c0_17 = arith.constant 0 : index
    %c0_18 = arith.constant 0 : index
    %26 = vector.load %arg8[%c0_17, %c0_18] : memref<1x512xf32, #tpu.memory_space<vmem>>, vector<1x512xf32>
    %27 = vector.broadcast %26 : vector<1x512xf32> to vector<8x512xf32>
    %28 = arith.addf %25, %27 : vector<8x512xf32>
    %cst_19 = arith.constant 0.000000e+00 : f32
    %29 = vector.broadcast %cst_19 : f32 to vector<8x512xf32>
    %30 = arith.maximumf %28, %29 : vector<8x512xf32>
    %31 = arith.truncf %30 : vector<8x512xf32> to vector<8x512xbf16>
    %c0_20 = arith.constant 0 : index
    %c0_21 = arith.constant 0 : index
    %32 = vector.load %arg9[%c0_20, %c0_21] : memref<512x784xbf16, #tpu.memory_space<vmem>>, vector<512x784xbf16>
    %cst_22 = arith.constant dense<0.000000e+00> : vector<8x784xf32>
    %33 = tpu.matmul %31, %32, %cst_22 {dimension_numbers = #tpu.dot_dimension_numbers<[1], [0], [0], [1], [0, 0, 1, 1], [], []>} : vector<8x512xbf16>, vector<512x784xbf16>, vector<8x784xf32> -> vector<8x784xf32>
    %c0_23 = arith.constant 0 : index
    %c0_24 = arith.constant 0 : index
    %34 = vector.load %arg10[%c0_23, %c0_24] : memref<1x784xf32, #tpu.memory_space<vmem>>, vector<1x784xf32>
    %35 = vector.broadcast %34 : vector<1x784xf32> to vector<8x784xf32>
    %36 = arith.addf %33, %35 : vector<8x784xf32>
    %37 = arith.negf %36 : vector<8x784xf32>
    %38 = math.exp %37 : vector<8x784xf32>
    %cst_25 = arith.constant 1.000000e+00 : f32
    %39 = vector.broadcast %cst_25 : f32 to vector<8x784xf32>
    %40 = arith.addf %39, %38 : vector<8x784xf32>
    %41 = arith.divf %39, %40 : vector<8x784xf32>
    %c0_26 = arith.constant 0 : index
    %c0_27 = arith.constant 0 : index
    %42 = vector.load %arg11[%c0_26, %c0_27] : memref<8x784xf32, #tpu.memory_space<vmem>>, vector<8x784xf32>
    tpu.vector_store %arg11[%c0_26, %c0_27], %41 {strides = array<i32>} : memref<8x784xf32, #tpu.memory_space<vmem>>, vector<8x784xf32>,
    %c0_28 = arith.constant 0 : index
    %c0_29 = arith.constant 0 : index
    %43 = vector.load %arg12[%c0_28, %c0_29] : memref<8x256xf32, #tpu.memory_space<vmem>>, vector<8x256xf32>
    tpu.vector_store %arg12[%c0_28, %c0_29], %14 {strides = array<i32>} : memref<8x256xf32, #tpu.memory_space<vmem>>, vector<8x256xf32>,
    return
  }
  func.func @transform_0(%arg0: i32) -> (i32, i32) {
    %c0_i32 = arith.constant 0 : i32
    %c0_i32_0 = arith.constant 0 : i32
    return %arg0, %c0_i32 : i32, i32
  }
  func.func @transform_1(%arg0: i32) -> (i32, i32) {
    %c0_i32 = arith.constant 0 : i32
    %c0_i32_0 = arith.constant 0 : i32
    return %arg0, %c0_i32 : i32, i32
  }
  func.func @transform_2(%arg0: i32) -> (i32, i32) {
    %c0_i32 = arith.constant 0 : i32
    %c0_i32_0 = arith.constant 0 : i32
    %c0_i32_1 = arith.constant 0 : i32
    return %c0_i32, %c0_i32_0 : i32, i32
  }
  func.func @transform_3(%arg0: i32) -> (i32, i32) {
    %c0_i32 = arith.constant 0 : i32
    %c0_i32_0 = arith.constant 0 : i32
    %c0_i32_1 = arith.constant 0 : i32
    return %c0_i32, %c0_i32_0 : i32, i32
  }
  func.func @transform_4(%arg0: i32) -> (i32, i32) {
    %c0_i32 = arith.constant 0 : i32
    %c0_i32_0 = arith.constant 0 : i32
    %c0_i32_1 = arith.constant 0 : i32
    return %c0_i32, %c0_i32_0 : i32, i32
  }
  func.func @transform_5(%arg0: i32) -> (i32, i32) {
    %c0_i32 = arith.constant 0 : i32
    %c0_i32_0 = arith.constant 0 : i32
    %c0_i32_1 = arith.constant 0 : i32
    return %c0_i32, %c0_i32_0 : i32, i32
  }
  func.func @transform_6(%arg0: i32) -> (i32, i32) {
    %c0_i32 = arith.constant 0 : i32
    %c0_i32_0 = arith.constant 0 : i32
    %c0_i32_1 = arith.constant 0 : i32
    return %c0_i32, %c0_i32_0 : i32, i32
  }
  func.func @transform_7(%arg0: i32) -> (i32, i32) {
    %c0_i32 = arith.constant 0 : i32
    %c0_i32_0 = arith.constant 0 : i32
    %c0_i32_1 = arith.constant 0 : i32
    return %c0_i32, %c0_i32_0 : i32, i32
  }
  func.func @transform_8(%arg0: i32) -> (i32, i32) {
    %c0_i32 = arith.constant 0 : i32
    %c0_i32_0 = arith.constant 0 : i32
    %c0_i32_1 = arith.constant 0 : i32
    return %c0_i32, %c0_i32_0 : i32, i32
  }
  func.func @transform_9(%arg0: i32) -> (i32, i32) {
    %c0_i32 = arith.constant 0 : i32
    %c0_i32_0 = arith.constant 0 : i32
    %c0_i32_1 = arith.constant 0 : i32
    return %c0_i32, %c0_i32_0 : i32, i32
  }
  func.func @transform_10(%arg0: i32) -> (i32, i32) {
    %c0_i32 = arith.constant 0 : i32
    %c0_i32_0 = arith.constant 0 : i32
    return %arg0, %c0_i32 : i32, i32
  }
  func.func @transform_11(%arg0: i32) -> (i32, i32) {
    %c0_i32 = arith.constant 0 : i32
    %c0_i32_0 = arith.constant 0 : i32
    return %arg0, %c0_i32 : i32, i32
  }
}

</mosaic_0001>

<llo_original>
// kernel: vae_forward.1
$region0: #{vae_forward.1}
  #allocation0 [shape = 'u32[]', space=smem, size = 0x4, offset = 0x4, fixed_abs, tag = 'smem constant byte address 0x4 - core index']
  #allocation1 [shape = 'u32[72,128]{1,0:T(1,128)}', space=vmem, size = 0x9000, scoped, tag = 'internal scratch']
  %s0 = inlined_call_operand.vmem [shape: f32[8,784], index: 0, kind: input, shape index: {}]
  %s1 = inlined_call_operand.vmem [shape: f32[8,128], index: 1, kind: input, shape index: {}]
  %s2 = inlined_call_operand.vmem [shape: bf16[784,512], index: 2, kind: input, shape index: {}]
  %s3 = inlined_call_operand.vmem [shape: f32[1,512], index: 3, kind: input, shape index: {}]
  %s4 = inlined_call_operand.vmem [shape: bf16[512,256], index: 4, kind: input, shape index: {}]
  %s5 = inlined_call_operand.vmem [shape: f32[1,256], index: 5, kind: input, shape index: {}]
  %s6 = inlined_call_operand.vmem [shape: bf16[128,512], index: 6, kind: input, shape index: {}]
  %s7 = inlined_call_operand.vmem [shape: f32[1,512], index: 7, kind: input, shape index: {}]
  %s8 = inlined_call_operand.vmem [shape: bf16[512,784], index: 8, kind: input, shape index: {}]
  %s9 = inlined_call_operand.vmem [shape: f32[1,784], index: 9, kind: input, shape index: {}]
  %s10 = inlined_call_operand.vmem [shape: f32[8,784], index: 10, kind: output, shape index: {0}]
  %s11 = inlined_call_operand.vmem [shape: f32[8,256], index: 11, kind: output, shape index: {1}]
  %12 = xla_tuple %s10, %s11
  %s13 = sld [smem:[#allocation0]]
  $region58: #{vae_forward.1} parent=0
    _
  %s15 = ssub.s32 1, %s13
  %s16 = scalar_select 0, %s15, %s13
  // Predicated region
  $region2: #{vae_forward.1} parent=0 // pred_check
    _
  $region3: #{vae_forward.1} parent=0 // pred_check_branch
    %18 = sbr.rel (0) target = $region5
  $region4: #{vae_forward.1} parent=0 // pred_region
    _
  $region5: #{vae_forward.1} parent=0 // pred_fallthru
    _
  // Predicated region
  $region6: #{vae_forward.1} parent=0 // pred_check
    _
  $region7: #{vae_forward.1} parent=0 // pred_check_branch
    %20 = sbr.rel (0) target = $region9
  $region8: #{vae_forward.1} parent=0 // pred_region
    _
  $region9: #{vae_forward.1} parent=0 // pred_fallthru
    _
  // Predicated region
  $region10: #{vae_forward.1} parent=0 // pred_check
    _
  $region11: #{vae_forward.1} parent=0 // pred_check_branch
    %22 = sbr.rel (0) target = $region13
  $region12: #{vae_forward.1} parent=0 // pred_region
    _
  $region13: #{vae_forward.1} parent=0 // pred_fallthru
    _
  // Predicated region
  $region14: #{vae_forward.1} parent=0 // pred_check
    _
  $region15: #{vae_forward.1} parent=0 // pred_check_branch
    %24 = sbr.rel (0) target = $region17
  $region16: #{vae_forward.1} parent=0 // pred_region
    _
  $region17: #{vae_forward.1} parent=0 // pred_fallthru
    _
  // Predicated region
  $region18: #{vae_forward.1} parent=0 // pred_check
    _
  $region19: #{vae_forward.1} parent=0 // pred_check_branch
    %26 = sbr.rel (0) target = $region21
  $region20: #{vae_forward.1} parent=0 // pred_region
    _
  $region21: #{vae_forward.1} parent=0 // pred_fallthru
    _
  // Predicated region
  $region22: #{vae_forward.1} parent=0 // pred_check
    _
  $region23: #{vae_forward.1} parent=0 // pred_check_branch
    %28 = sbr.rel (0) target = $region25
  $region24: #{vae_forward.1} parent=0 // pred_region
    _
  $region25: #{vae_forward.1} parent=0 // pred_fallthru
    _
  // Predicated region
  $region26: #{vae_forward.1} parent=0 // pred_check
    _
  $region27: #{vae_forward.1} parent=0 // pred_check_branch
    %30 = sbr.rel (0) target = $region29
  $region28: #{vae_forward.1} parent=0 // pred_region
    _
  $region29: #{vae_forward.1} parent=0 // pred_fallthru
    _
  // Predicated region
  $region30: #{vae_forward.1} parent=0 // pred_check
    _
  $region31: #{vae_forward.1} parent=0 // pred_check_branch
    %32 = sbr.rel (0) target = $region33
  $region32: #{vae_forward.1} parent=0 // pred_region
    _
  $region33: #{vae_forward.1} parent=0 // pred_fallthru
    _
  // Predicated region
  $region34: #{vae_forward.1} parent=0 // pred_check
    _
  $region35: #{vae_forward.1} parent=0 // pred_check_branch
    %34 = sbr.rel (0) target = $region37
  $region36: #{vae_forward.1} parent=0 // pred_region
    _
  $region37: #{vae_forward.1} parent=0 // pred_fallthru
    _
  // Predicated region
  $region38: #{vae_forward.1} parent=0 // pred_check
    _
  $region39: #{vae_forward.1} parent=0 // pred_check_branch
    %36 = sbr.rel (0) target = $region41
  $region40: #{vae_forward.1} parent=0 // pred_region
    _
  $region41: #{vae_forward.1} parent=0 // pred_fallthru
    _
  %v38 = vld [vmem:[%s0] sm:$0xff]
  %v39 = vld [vmem:[%s0 + $0x8] sm:$0xff]
  %v40 = vld [vmem:[%s0 + $0x10] sm:$0xff]
  %v41 = vld [vmem:[%s0 + $0x18] sm:$0xff]
  %v42 = vld [vmem:[%s0 + $0x20] sm:$0xff]
  %v43 = vld [vmem:[%s0 + $0x28] sm:$0xff]
  %v44 = vld [vmem:[%s0 + $0x30] sm:$0xff]
  %v45 = vpack.c.bf16 %v38, %v38
  %v46 = vpack.c.bf16 %v39, %v39
  %v47 = vpack.c.bf16 %v40, %v40
  %v48 = vpack.c.bf16 %v41, %v41
  %v49 = vpack.c.bf16 %v42, %v42
  %v50 = vpack.c.bf16 %v43, %v43
  %v51 = vpack.c.bf16 %v44, %v44
  %v52 = vld [vmem:[%s2] sm:$0xff]
  %v53 = vld [vmem:[%s2 + $0x8] sm:$0xff]
  %v54 = vld [vmem:[%s2 + $0x10] sm:$0xff]
  %v55 = vld [vmem:[%s2 + $0x18] sm:$0xff]
  %v56 = vld [vmem:[%s2 + $0x20] sm:$0xff]
  %v57 = vld [vmem:[%s2 + $0x28] sm:$0xff]
  %v58 = vld [vmem:[%s2 + $0x30] sm:$0xff]
  %v59 = vld [vmem:[%s2 + $0x38] sm:$0xff]
  %v60 = vld [vmem:[%s2 + $0x40] sm:$0xff]
  %v61 = vld [vmem:[%s2 + $0x48] sm:$0xff]
  %v62 = vld [vmem:[%s2 + $0x50] sm:$0xff]
  %v63 = vld [vmem:[%s2 + $0x58] sm:$0xff]
  %v64 = vld [vmem:[%s2 + $0x60] sm:$0xff]
  %v65 = vld [vmem:[%s2 + $0x68] sm:$0xff]
  %v66 = vld [vmem:[%s2 + $0x70] sm:$0xff]
  %v67 = vld [vmem:[%s2 + $0x78] sm:$0xff]
  %v68 = vld [vmem:[%s2 + $0x80] sm:$0xff]
  %v69 = vld [vmem:[%s2 + $0x88] sm:$0xff]
  %v70 = vld [vmem:[%s2 + $0x90] sm:$0xff]
  %v71 = vld [vmem:[%s2 + $0x98] sm:$0xff]
  %v72 = vld [vmem:[%s2 + $0xa0] sm:$0xff]
  %v73 = vld [vmem:[%s2 + $0xa8] sm:$0xff]
  %v74 = vld [vmem:[%s2 + $0xb0] sm:$0xff]
  %v75 = vld [vmem:[%s2 + $0xb8] sm:$0xff]
  %v76 = vld [vmem:[%s2 + $0xc0] sm:$0xff]
  %v77 = vld [vmem:[%s2 + $0xc8] sm:$0xff]
  %v78 = vld [vmem:[%s2 + $0xd0] sm:$0xff]
  %v79 = vld [vmem:[%s2 + $0xd8] sm:$0xff]
  %v80 = vld [vmem:[%s2 + $0xe0] sm:$0xff]
  %v81 = vld [vmem:[%s2 + $0xe8] sm:$0xff]
  %v82 = vld [vmem:[%s2 + $0xf0] sm:$0xff]
  %v83 = vld [vmem:[%s2 + $0xf8] sm:$0xff]
  %v84 = vld [vmem:[%s2 + $0x100] sm:$0xff]
  %v85 = vld [vmem:[%s2 + $0x108] sm:$0xff]
  %v86 = vld [vmem:[%s2 + $0x110] sm:$0xff]
  %v87 = vld [vmem:[%s2 + $0x118] sm:$0xff]
  %v88 = vld [vmem:[%s2 + $0x120] sm:$0xff]
  %v89 = vld [vmem:[%s2 + $0x128] sm:$0xff]
  %v90 = vld [vmem:[%s2 + $0x130] sm:$0xff]
  %v91 = vld [vmem:[%s2 + $0x138] sm:$0xff]
  %v92 = vld [vmem:[%s2 + $0x140] sm:$0xff]
  %v93 = vld [vmem:[%s2 + $0x148] sm:$0xff]
  %v94 = vld [vmem:[%s2 + $0x150] sm:$0xff]
  %v95 = vld [vmem:[%s2 + $0x158] sm:$0xff]
  %v96 = vld [vmem:[%s2 + $0x160] sm:$0xff]
  %v97 = vld [vmem:[%s2 + $0x168] sm:$0xff]
  %v98 = vld [vmem:[%s2 + $0x170] sm:$0xff]
  %v99 = vld [vmem:[%s2 + $0x178] sm:$0xff]
  %v100 = vld [vmem:[%s2 + $0x180] sm:$0xff]
  %v101 = vld [vmem:[%s2 + $0x188] sm:$0xff]
  %v102 = vld [vmem:[%s2 + $0x190] sm:$0xff]
  %v103 = vld [vmem:[%s2 + $0x198] sm:$0xff]
  %v104 = vld [vmem:[%s2 + $0x1a0] sm:$0xff]
  %v105 = vld [vmem:[%s2 + $0x1a8] sm:$0xff]
  %v106 = vld [vmem:[%s2 + $0x1b0] sm:$0xff]
  %v107 = vld [vmem:[%s2 + $0x1b8] sm:$0xff]
  %v108 = vld [vmem:[%s2 + $0x1c0] sm:$0xff]
  %v109 = vld [vmem:[%s2 + $0x1c8] sm:$0xff]
  %v110 = vld [vmem:[%s2 + $0x1d0] sm:$0xff]
  %v111 = vld [vmem:[%s2 + $0x1d8] sm:$0xff]
  %v112 = vld [vmem:[%s2 + $0x1e0] sm:$0xff]
  %v113 = vld [vmem:[%s2 + $0x1e8] sm:$0xff]
  %v114 = vld [vmem:[%s2 + $0x1f0] sm:$0xff]
  %v115 = vld [vmem:[%s2 + $0x1f8] sm:$0xff]
  %v116 = vld [vmem:[%s2 + $0x200] sm:$0xff]
  %v117 = vld [vmem:[%s2 + $0x208] sm:$0xff]
  %v118 = vld [vmem:[%s2 + $0x210] sm:$0xff]
  %v119 = vld [vmem:[%s2 + $0x218] sm:$0xff]
  %v120 = vld [vmem:[%s2 + $0x220] sm:$0xff]
  %v121 = vld [vmem:[%s2 + $0x228] sm:$0xff]
  %v122 = vld [vmem:[%s2 + $0x230] sm:$0xff]
  %v123 = vld [vmem:[%s2 + $0x238] sm:$0xff]
  %v124 = vld [vmem:[%s2 + $0x240] sm:$0xff]
  %v125 = vld [vmem:[%s2 + $0x248] sm:$0xff]
  %v126 = vld [vmem:[%s2 + $0x250] sm:$0xff]
  %v127 = vld [vmem:[%s2 + $0x258] sm:$0xff]
  %v128 = vld [vmem:[%s2 + $0x260] sm:$0xff]
  %v129 = vld [vmem:[%s2 + $0x268] sm:$0xff]
  %v130 = vld [vmem:[%s2 + $0x270] sm:$0xff]
  %v131 = vld [vmem:[%s2 + $0x278] sm:$0xff]
  %v132 = vld [vmem:[%s2 + $0x280] sm:$0xff]
  %v133 = vld [vmem:[%s2 + $0x288] sm:$0xff]
  %v134 = vld [vmem:[%s2 + $0x290] sm:$0xff]
  %v135 = vld [vmem:[%s2 + $0x298] sm:$0xff]
  %v136 = vld [vmem:[%s2 + $0x2a0] sm:$0xff]
  %v137 = vld [vmem:[%s2 + $0x2a8] sm:$0xff]
  %v138 = vld [vmem:[%s2 + $0x2b0] sm:$0xff]
  %v139 = vld [vmem:[%s2 + $0x2b8] sm:$0xff]
  %v140 = vld [vmem:[%s2 + $0x2c0] sm:$0xff]
  %v141 = vld [vmem:[%s2 + $0x2c8] sm:$0xff]
  %v142 = vld [vmem:[%s2 + $0x2d0] sm:$0xff]
  %v143 = vld [vmem:[%s2 + $0x2d8] sm:$0xff]
  %v144 = vld [vmem:[%s2 + $0x2e0] sm:$0xff]
  %v145 = vld [vmem:[%s2 + $0x2e8] sm:$0xff]
  %v146 = vld [vmem:[%s2 + $0x2f0] sm:$0xff]
  %v147 = vld [vmem:[%s2 + $0x2f8] sm:$0xff]
  %v148 = vld [vmem:[%s2 + $0x300] sm:$0xff]
  %v149 = vld [vmem:[%s2 + $0x308] sm:$0xff]
  %v150 = vld [vmem:[%s2 + $0x310] sm:$0xff]
  %v151 = vld [vmem:[%s2 + $0x318] sm:$0xff]
  %v152 = vld [vmem:[%s2 + $0x320] sm:$0xff]
  %v153 = vld [vmem:[%s2 + $0x328] sm:$0xff]
  %v154 = vld [vmem:[%s2 + $0x330] sm:$0xff]
  %v155 = vld [vmem:[%s2 + $0x338] sm:$0xff]
  %v156 = vld [vmem:[%s2 + $0x340] sm:$0xff]
  %v157 = vld [vmem:[%s2 + $0x348] sm:$0xff]
  %v158 = vld [vmem:[%s2 + $0x350] sm:$0xff]
  %v159 = vld [vmem:[%s2 + $0x358] sm:$0xff]
  %v160 = vld [vmem:[%s2 + $0x360] sm:$0xff]
  %v161 = vld [vmem:[%s2 + $0x368] sm:$0xff]
  %v162 = vld [vmem:[%s2 + $0x370] sm:$0xff]
  %v163 = vld [vmem:[%s2 + $0x378] sm:$0xff]
  %v164 = vld [vmem:[%s2 + $0x380] sm:$0xff]
  %v165 = vld [vmem:[%s2 + $0x388] sm:$0xff]
  %v166 = vld [vmem:[%s2 + $0x390] sm:$0xff]
  %v167 = vld [vmem:[%s2 + $0x398] sm:$0xff]
  %v168 = vld [vmem:[%s2 + $0x3a0] sm:$0xff]
  %v169 = vld [vmem:[%s2 + $0x3a8] sm:$0xff]
  %v170 = vld [vmem:[%s2 + $0x3b0] sm:$0xff]
  %v171 = vld [vmem:[%s2 + $0x3b8] sm:$0xff]
  %v172 = vld [vmem:[%s2 + $0x3c0] sm:$0xff]
  %v173 = vld [vmem:[%s2 + $0x3c8] sm:$0xff]
  %v174 = vld [vmem:[%s2 + $0x3d0] sm:$0xff]
  %v175 = vld [vmem:[%s2 + $0x3d8] sm:$0xff]
  %v176 = vld [vmem:[%s2 + $0x3e0] sm:$0xff]
  %v177 = vld [vmem:[%s2 + $0x3e8] sm:$0xff]
  %v178 = vld [vmem:[%s2 + $0x3f0] sm:$0xff]
  %v179 = vld [vmem:[%s2 + $0x3f8] sm:$0xff]
  %v180 = vld [vmem:[%s2 + $0x400] sm:$0xff]
  %v181 = vld [vmem:[%s2 + $0x408] sm:$0xff]
  %v182 = vld [vmem:[%s2 + $0x410] sm:$0xff]
  %v183 = vld [vmem:[%s2 + $0x418] sm:$0xff]
  %v184 = vld [vmem:[%s2 + $0x420] sm:$0xff]
  %v185 = vld [vmem:[%s2 + $0x428] sm:$0xff]
  %v186 = vld [vmem:[%s2 + $0x430] sm:$0xff]
  %v187 = vld [vmem:[%s2 + $0x438] sm:$0xff]
  %v188 = vld [vmem:[%s2 + $0x440] sm:$0xff]
  %v189 = vld [vmem:[%s2 + $0x448] sm:$0xff]
  %v190 = vld [vmem:[%s2 + $0x450] sm:$0xff]
  %v191 = vld [vmem:[%s2 + $0x458] sm:$0xff]
  %v192 = vld [vmem:[%s2 + $0x460] sm:$0xff]
  %v193 = vld [vmem:[%s2 + $0x468] sm:$0xff]
  %v194 = vld [vmem:[%s2 + $0x470] sm:$0xff]
  %v195 = vld [vmem:[%s2 + $0x478] sm:$0xff]
  %v196 = vld [vmem:[%s2 + $0x480] sm:$0xff]
  %v197 = vld [vmem:[%s2 + $0x488] sm:$0xff]
  %v198 = vld [vmem:[%s2 + $0x490] sm:$0xff]
  %v199 = vld [vmem:[%s2 + $0x498] sm:$0xff]
  %v200 = vld [vmem:[%s2 + $0x4a0] sm:$0xff]
  %v201 = vld [vmem:[%s2 + $0x4a8] sm:$0xff]
  %v202 = vld [vmem:[%s2 + $0x4b0] sm:$0xff]
  %v203 = vld [vmem:[%s2 + $0x4b8] sm:$0xff]
  %v204 = vld [vmem:[%s2 + $0x4c0] sm:$0xff]
  %v205 = vld [vmem:[%s2 + $0x4c8] sm:$0xff]
  %v206 = vld [vmem:[%s2 + $0x4d0] sm:$0xff]
  %v207 = vld [vmem:[%s2 + $0x4d8] sm:$0xff]
  %v208 = vld [vmem:[%s2 + $0x4e0] sm:$0xff]
  %v209 = vld [vmem:[%s2 + $0x4e8] sm:$0xff]
  %v210 = vld [vmem:[%s2 + $0x4f0] sm:$0xff]
  %v211 = vld [vmem:[%s2 + $0x4f8] sm:$0xff]
  %v212 = vld [vmem:[%s2 + $0x500] sm:$0xff]
  %v213 = vld [vmem:[%s2 + $0x508] sm:$0xff]
  %v214 = vld [vmem:[%s2 + $0x510] sm:$0xff]
  %v215 = vld [vmem:[%s2 + $0x518] sm:$0xff]
  %v216 = vld [vmem:[%s2 + $0x520] sm:$0xff]
  %v217 = vld [vmem:[%s2 + $0x528] sm:$0xff]
  %v218 = vld [vmem:[%s2 + $0x530] sm:$0xff]
  %v219 = vld [vmem:[%s2 + $0x538] sm:$0xff]
  %v220 = vld [vmem:[%s2 + $0x540] sm:$0xff]
  %v221 = vld [vmem:[%s2 + $0x548] sm:$0xff]
  %v222 = vld [vmem:[%s2 + $0x550] sm:$0xff]
  %v223 = vld [vmem:[%s2 + $0x558] sm:$0xff]
  %v224 = vld [vmem:[%s2 + $0x560] sm:$0xff]
  %v225 = vld [vmem:[%s2 + $0x568] sm:$0xff]
  %v226 = vld [vmem:[%s2 + $0x570] sm:$0xff]
  %v227 = vld [vmem:[%s2 + $0x578] sm:$0xff]
  %v228 = vld [vmem:[%s2 + $0x580] sm:$0xff]
  %v229 = vld [vmem:[%s2 + $0x588] sm:$0xff]
  %v230 = vld [vmem:[%s2 + $0x590] sm:$0xff]
  %v231 = vld [vmem:[%s2 + $0x598] sm:$0xff]
  %v232 = vld [vmem:[%s2 + $0x5a0] sm:$0xff]
  %v233 = vld [vmem:[%s2 + $0x5a8] sm:$0xff]
  %v234 = vld [vmem:[%s2 + $0x5b0] sm:$0xff]
  %v235 = vld [vmem:[%s2 + $0x5b8] sm:$0xff]
  %v236 = vld [vmem:[%s2 + $0x5c0] sm:$0xff]
  %v237 = vld [vmem:[%s2 + $0x5c8] sm:$0xff]
  %v238 = vld [vmem:[%s2 + $0x5d0] sm:$0xff]
  %v239 = vld [vmem:[%s2 + $0x5d8] sm:$0xff]
  %v240 = vld [vmem:[%s2 + $0x5e0] sm:$0xff]
  %v241 = vld [vmem:[%s2 + $0x5e8] sm:$0xff]
  %v242 = vld [vmem:[%s2 + $0x5f0] sm:$0xff]
  %v243 = vld [vmem:[%s2 + $0x5f8] sm:$0xff]
  %v244 = vld [vmem:[%s2 + $0x600] sm:$0xff]
  %v245 = vld [vmem:[%s2 + $0x608] sm:$0xff]
  %v246 = vld [vmem:[%s2 + $0x610] sm:$0xff]
  %v247 = vld [vmem:[%s2 + $0x618] sm:$0xff]
  %v248 = vld [vmem:[%s3] sm:$0xf]
  %v250 = vperm.slane %v248, 0
  %v251 = vperm.slane %v248, 1
  %v252 = vperm.slane %v248, 2
  %v253 = vperm.slane %v248, 3
  %v454 = vunpack.c.l.b16 %v52
  %v455 = vunpack.c.h.b16 %v52
  %v456 = vunpack.c.l.b16 %v53
  %v457 = vunpack.c.h.b16 %v53
  %v458 = vunpack.c.l.b16 %v54
  %v459 = vunpack.c.h.b16 %v54
  %v460 = vunpack.c.l.b16 %v55
  %v461 = vunpack.c.h.b16 %v55
  %v462 = vunpack.c.l.b16 %v56
  %v463 = vunpack.c.h.b16 %v56
  %v464 = vunpack.c.l.b16 %v57
  %v465 = vunpack.c.h.b16 %v57
  %v466 = vunpack.c.l.b16 %v58
  %v467 = vunpack.c.h.b16 %v58
  %v468 = vunpack.c.l.b16 %v59
  %v469 = vunpack.c.h.b16 %v59
  %v470 = vunpack.c.l.b16 %v60
  %v471 = vunpack.c.h.b16 %v60
  %v472 = vunpack.c.l.b16 %v61
  %v473 = vunpack.c.h.b16 %v61
  %v474 = vunpack.c.l.b16 %v62
  %v475 = vunpack.c.h.b16 %v62
  %v476 = vunpack.c.l.b16 %v63
  %v477 = vunpack.c.h.b16 %v63
  %v478 = vunpack.c.l.b16 %v64
  %v479 = vunpack.c.h.b16 %v64
  %v480 = vunpack.c.l.b16 %v65
  %v481 = vunpack.c.h.b16 %v65
  %v482 = vunpack.c.l.b16 %v66
  %v483 = vunpack.c.h.b16 %v66
  %v484 = vunpack.c.l.b16 %v67
  %v485 = vunpack.c.h.b16 %v67
  %v486 = vunpack.c.l.b16 %v68
  %v487 = vunpack.c.h.b16 %v68
  %v488 = vunpack.c.l.b16 %v69
  %v489 = vunpack.c.h.b16 %v69
  %v490 = vunpack.c.l.b16 %v70
  %v491 = vunpack.c.h.b16 %v70
  %v492 = vunpack.c.l.b16 %v71
  %v493 = vunpack.c.h.b16 %v71
  %v494 = vunpack.c.l.b16 %v72
  %v495 = vunpack.c.h.b16 %v72
  %v496 = vunpack.c.l.b16 %v73
  %v497 = vunpack.c.h.b16 %v73
  %v498 = vunpack.c.l.b16 %v74
  %v499 = vunpack.c.h.b16 %v74
  %v500 = vunpack.c.l.b16 %v75
  %v501 = vunpack.c.h.b16 %v75
  %v502 = vunpack.c.l.b16 %v76
  %v503 = vunpack.c.h.b16 %v76
  %v504 = vunpack.c.l.b16 %v77
  %v505 = vunpack.c.h.b16 %v77
  %v506 = vunpack.c.l.b16 %v78
  %v507 = vunpack.c.h.b16 %v78
  %v508 = vunpack.c.l.b16 %v79
  %v509 = vunpack.c.h.b16 %v79
  %v510 = vunpack.c.l.b16 %v80
  %v511 = vunpack.c.h.b16 %v80
  %v512 = vunpack.c.l.b16 %v81
  %v513 = vunpack.c.h.b16 %v81
  %v514 = vunpack.c.l.b16 %v82
  %v515 = vunpack.c.h.b16 %v82
  %v516 = vunpack.c.l.b16 %v83
  %v517 = vunpack.c.h.b16 %v83
  %v518 = vunpack.c.l.b16 %v84
  %v519 = vunpack.c.h.b16 %v84
  %v520 = vunpack.c.l.b16 %v85
  %v521 = vunpack.c.h.b16 %v85
  %v522 = vunpack.c.l.b16 %v86
  %v523 = vunpack.c.h.b16 %v86
  %v524 = vunpack.c.l.b16 %v87
  %v525 = vunpack.c.h.b16 %v87
  %v526 = vunpack.c.l.b16 %v88
  %v527 = vunpack.c.h.b16 %v88
  %v528 = vunpack.c.l.b16 %v89
  %v529 = vunpack.c.h.b16 %v89
  %v530 = vunpack.c.l.b16 %v90
  %v531 = vunpack.c.h.b16 %v90
  %v532 = vunpack.c.l.b16 %v91
  %v533 = vunpack.c.h.b16 %v91
  %v534 = vunpack.c.l.b16 %v92
  %v535 = vunpack.c.h.b16 %v92
  %v536 = vunpack.c.l.b16 %v93
  %v537 = vunpack.c.h.b16 %v93
  %v538 = vunpack.c.l.b16 %v94
  %v539 = vunpack.c.h.b16 %v94
  %v540 = vunpack.c.l.b16 %v95
  %v541 = vunpack.c.h.b16 %v95
  %v542 = vunpack.c.l.b16 %v96
  %v543 = vunpack.c.h.b16 %v96
  %v544 = vunpack.c.l.b16 %v97
  %v545 = vunpack.c.h.b16 %v97
  %v546 = vunpack.c.l.b16 %v98
  %v547 = vunpack.c.h.b16 %v98
  %v548 = vunpack.c.l.b16 %v99
  %v549 = vunpack.c.h.b16 %v99
  %v550 = vunpack.c.l.b16 %v100
  %v551 = vunpack.c.h.b16 %v100
  %v552 = vunpack.c.l.b16 %v101
  %v553 = vunpack.c.h.b16 %v101
  %v554 = vunpack.c.l.b16 %v102
  %v555 = vunpack.c.h.b16 %v102
  %v556 = vunpack.c.l.b16 %v103
  %v557 = vunpack.c.h.b16 %v103
  %v558 = vunpack.c.l.b16 %v104
  %v559 = vunpack.c.h.b16 %v104
  %v560 = vunpack.c.l.b16 %v105
  %v561 = vunpack.c.h.b16 %v105
  %v562 = vunpack.c.l.b16 %v106
  %v563 = vunpack.c.h.b16 %v106
  %v564 = vunpack.c.l.b16 %v107
  %v565 = vunpack.c.h.b16 %v107
  %v566 = vunpack.c.l.b16 %v108
  %v567 = vunpack.c.h.b16 %v108
  %v568 = vunpack.c.l.b16 %v109
  %v569 = vunpack.c.h.b16 %v109
  %v570 = vunpack.c.l.b16 %v110
  %v571 = vunpack.c.h.b16 %v110
  %v572 = vunpack.c.l.b16 %v111
  %v573 = vunpack.c.h.b16 %v111
  %v574 = vunpack.c.l.b16 %v112
  %v575 = vunpack.c.h.b16 %v112
  %v576 = vunpack.c.l.b16 %v113
  %v577 = vunpack.c.h.b16 %v113
  %v578 = vunpack.c.l.b16 %v114
  %v579 = vunpack.c.h.b16 %v114
  %v580 = vunpack.c.l.b16 %v115
  %v581 = vunpack.c.h.b16 %v115
  %v582 = vunpack.c.l.b16 %v116
  %v583 = vunpack.c.h.b16 %v116
  %v584 = vunpack.c.l.b16 %v117
  %v585 = vunpack.c.h.b16 %v117
  %v586 = vunpack.c.l.b16 %v118
  %v587 = vunpack.c.h.b16 %v118
  %v588 = vunpack.c.l.b16 %v119
  %v589 = vunpack.c.h.b16 %v119
  %v590 = vunpack.c.l.b16 %v120
  %v591 = vunpack.c.h.b16 %v120
  %v592 = vunpack.c.l.b16 %v121
  %v593 = vunpack.c.h.b16 %v121
  %v594 = vunpack.c.l.b16 %v122
  %v595 = vunpack.c.h.b16 %v122
  %v596 = vunpack.c.l.b16 %v123
  %v597 = vunpack.c.h.b16 %v123
  %v598 = vunpack.c.l.b16 %v124
  %v599 = vunpack.c.h.b16 %v124
  %v600 = vunpack.c.l.b16 %v125
  %v601 = vunpack.c.h.b16 %v125
  %v602 = vunpack.c.l.b16 %v126
  %v603 = vunpack.c.h.b16 %v126
  %v604 = vunpack.c.l.b16 %v127
  %v605 = vunpack.c.h.b16 %v127
  %v606 = vunpack.c.l.b16 %v128
  %v607 = vunpack.c.h.b16 %v128
  %v608 = vunpack.c.l.b16 %v129
  %v609 = vunpack.c.h.b16 %v129
  %v610 = vunpack.c.l.b16 %v130
  %v611 = vunpack.c.h.b16 %v130
  %v612 = vunpack.c.l.b16 %v131
  %v613 = vunpack.c.h.b16 %v131
  %v614 = vunpack.c.l.b16 %v132
  %v615 = vunpack.c.h.b16 %v132
  %v616 = vunpack.c.l.b16 %v133
  %v617 = vunpack.c.h.b16 %v133
  %v618 = vunpack.c.l.b16 %v134
  %v619 = vunpack.c.h.b16 %v134
  %v620 = vunpack.c.l.b16 %v135
  %v621 = vunpack.c.h.b16 %v135
  %v622 = vunpack.c.l.b16 %v136
  %v623 = vunpack.c.h.b16 %v136
  %v624 = vunpack.c.l.b16 %v137
  %v625 = vunpack.c.h.b16 %v137
  %v626 = vunpack.c.l.b16 %v138
  %v627 = vunpack.c.h.b16 %v138
  %v628 = vunpack.c.l.b16 %v139
  %v629 = vunpack.c.h.b16 %v139
  %v630 = vunpack.c.l.b16 %v140
  %v631 = vunpack.c.h.b16 %v140
  %v632 = vunpack.c.l.b16 %v141
  %v633 = vunpack.c.h.b16 %v141
  %v634 = vunpack.c.l.b16 %v142
  %v635 = vunpack.c.h.b16 %v142
  %v636 = vunpack.c.l.b16 %v143
  %v637 = vunpack.c.h.b16 %v143
  %v638 = vunpack.c.l.b16 %v144
  %v639 = vunpack.c.h.b16 %v144
  %v640 = vunpack.c.l.b16 %v145
  %v641 = vunpack.c.h.b16 %v145
  %v642 = vunpack.c.l.b16 %v146
  %v643 = vunpack.c.h.b16 %v146
  %v644 = vunpack.c.l.b16 %v147
  %v645 = vunpack.c.h.b16 %v147
  %v646 = vunpack.c.l.b16 %v148
  %v647 = vunpack.c.h.b16 %v148
  %v648 = vunpack.c.l.b16 %v149
  %v649 = vunpack.c.h.b16 %v149
  %v650 = vunpack.c.l.b16 %v150
  %v651 = vunpack.c.h.b16 %v150
  %v652 = vunpack.c.l.b16 %v151
  %v653 = vunpack.c.h.b16 %v151
  %v654 = vunpack.c.l.b16 %v152
  %v655 = vunpack.c.h.b16 %v152
  %v656 = vunpack.c.l.b16 %v153
  %v657 = vunpack.c.h.b16 %v153
  %v658 = vunpack.c.l.b16 %v154
  %v659 = vunpack.c.h.b16 %v154
  %v660 = vunpack.c.l.b16 %v155
  %v661 = vunpack.c.h.b16 %v155
  %v662 = vunpack.c.l.b16 %v156
  %v663 = vunpack.c.h.b16 %v156
  %v664 = vunpack.c.l.b16 %v157
  %v665 = vunpack.c.h.b16 %v157
  %v666 = vunpack.c.l.b16 %v158
  %v667 = vunpack.c.h.b16 %v158
  %v668 = vunpack.c.l.b16 %v159
  %v669 = vunpack.c.h.b16 %v159
  %v670 = vunpack.c.l.b16 %v160
  %v671 = vunpack.c.h.b16 %v160
  %v672 = vunpack.c.l.b16 %v161
  %v673 = vunpack.c.h.b16 %v161
  %v674 = vunpack.c.l.b16 %v162
  %v675 = vunpack.c.h.b16 %v162
  %v676 = vunpack.c.l.b16 %v163
  %v677 = vunpack.c.h.b16 %v163
  %v678 = vunpack.c.l.b16 %v164
  %v679 = vunpack.c.h.b16 %v164
  %v680 = vunpack.c.l.b16 %v165
  %v681 = vunpack.c.h.b16 %v165
  %v682 = vunpack.c.l.b16 %v166
  %v683 = vunpack.c.h.b16 %v166
  %v684 = vunpack.c.l.b16 %v167
  %v685 = vunpack.c.h.b16 %v167
  %v686 = vunpack.c.l.b16 %v168
  %v687 = vunpack.c.h.b16 %v168
  %v688 = vunpack.c.l.b16 %v169
  %v689 = vunpack.c.h.b16 %v169
  %v690 = vunpack.c.l.b16 %v170
  %v691 = vunpack.c.h.b16 %v170
  %v692 = vunpack.c.l.b16 %v171
  %v693 = vunpack.c.h.b16 %v171
  %v694 = vunpack.c.l.b16 %v172
  %v695 = vunpack.c.h.b16 %v172
  %v696 = vunpack.c.l.b16 %v173
  %v697 = vunpack.c.h.b16 %v173
  %v698 = vunpack.c.l.b16 %v174
  %v699 = vunpack.c.h.b16 %v174
  %v700 = vunpack.c.l.b16 %v175
  %v701 = vunpack.c.h.b16 %v175
  %v702 = vunpack.c.l.b16 %v176
  %v703 = vunpack.c.h.b16 %v176
  %v704 = vunpack.c.l.b16 %v177
  %v705 = vunpack.c.h.b16 %v177
  %v706 = vunpack.c.l.b16 %v178
  %v707 = vunpack.c.h.b16 %v178
  %v708 = vunpack.c.l.b16 %v179
  %v709 = vunpack.c.h.b16 %v179
  %v710 = vunpack.c.l.b16 %v180
  %v711 = vunpack.c.h.b16 %v180
  %v712 = vunpack.c.l.b16 %v181
  %v713 = vunpack.c.h.b16 %v181
  %v714 = vunpack.c.l.b16 %v182
  %v715 = vunpack.c.h.b16 %v182
  %v716 = vunpack.c.l.b16 %v183
  %v717 = vunpack.c.h.b16 %v183
  %v718 = vunpack.c.l.b16 %v184
  %v719 = vunpack.c.h.b16 %v184
  %v720 = vunpack.c.l.b16 %v185
  %v721 = vunpack.c.h.b16 %v185
  %v722 = vunpack.c.l.b16 %v186
  %v723 = vunpack.c.h.b16 %v186
  %v724 = vunpack.c.l.b16 %v187
  %v725 = vunpack.c.h.b16 %v187
  %v726 = vunpack.c.l.b16 %v188
  %v727 = vunpack.c.h.b16 %v188
  %v728 = vunpack.c.l.b16 %v189
  %v729 = vunpack.c.h.b16 %v189
  %v730 = vunpack.c.l.b16 %v190
  %v731 = vunpack.c.h.b16 %v190
  %v732 = vunpack.c.l.b16 %v191
  %v733 = vunpack.c.h.b16 %v191
  %v734 = vunpack.c.l.b16 %v192
  %v735 = vunpack.c.h.b16 %v192
  %v736 = vunpack.c.l.b16 %v193
  %v737 = vunpack.c.h.b16 %v193
  %v738 = vunpack.c.l.b16 %v194
  %v739 = vunpack.c.h.b16 %v194
  %v740 = vunpack.c.l.b16 %v195
  %v741 = vunpack.c.h.b16 %v195
  %v742 = vunpack.c.l.b16 %v196
  %v743 = vunpack.c.h.b16 %v196
  %v744 = vunpack.c.l.b16 %v197
  %v745 = vunpack.c.h.b16 %v197
  %v746 = vunpack.c.l.b16 %v198
  %v747 = vunpack.c.h.b16 %v198
  %v748 = vunpack.c.l.b16 %v199
  %v749 = vunpack.c.h.b16 %v199
  %v750 = vunpack.c.l.b16 %v200
  %v751 = vunpack.c.h.b16 %v200
  %v752 = vunpack.c.l.b16 %v201
  %v753 = vunpack.c.h.b16 %v201
  %v754 = vunpack.c.l.b16 %v202
  %v755 = vunpack.c.h.b16 %v202
  %v756 = vunpack.c.l.b16 %v203
  %v757 = vunpack.c.h.b16 %v203
  %v758 = vunpack.c.l.b16 %v204
  %v759 = vunpack.c.h.b16 %v204
  %v760 = vunpack.c.l.b16 %v205
  %v761 = vunpack.c.h.b16 %v205
  %v762 = vunpack.c.l.b16 %v206
  %v763 = vunpack.c.h.b16 %v206
  %v764 = vunpack.c.l.b16 %v207
  %v765 = vunpack.c.h.b16 %v207
  %v766 = vunpack.c.l.b16 %v208
  %v767 = vunpack.c.h.b16 %v208
  %v768 = vunpack.c.l.b16 %v209
  %v769 = vunpack.c.h.b16 %v209
  %v770 = vunpack.c.l.b16 %v210
  %v771 = vunpack.c.h.b16 %v210
  %v772 = vunpack.c.l.b16 %v211
  %v773 = vunpack.c.h.b16 %v211
  %v774 = vunpack.c.l.b16 %v212
  %v775 = vunpack.c.h.b16 %v212
  %v776 = vunpack.c.l.b16 %v213
  %v777 = vunpack.c.h.b16 %v213
  %v778 = vunpack.c.l.b16 %v214
  %v779 = vunpack.c.h.b16 %v214
  %v780 = vunpack.c.l.b16 %v215
  %v781 = vunpack.c.h.b16 %v215
  %v782 = vunpack.c.l.b16 %v216
  %v783 = vunpack.c.h.b16 %v216
  %v784 = vunpack.c.l.b16 %v217
  %v785 = vunpack.c.h.b16 %v217
  %v786 = vunpack.c.l.b16 %v218
  %v787 = vunpack.c.h.b16 %v218
  %v788 = vunpack.c.l.b16 %v219
  %v789 = vunpack.c.h.b16 %v219
  %v790 = vunpack.c.l.b16 %v220
  %v791 = vunpack.c.h.b16 %v220
  %v792 = vunpack.c.l.b16 %v221
  %v793 = vunpack.c.h.b16 %v221
  %v794 = vunpack.c.l.b16 %v222
  %v795 = vunpack.c.h.b16 %v222
  %v796 = vunpack.c.l.b16 %v223
  %v797 = vunpack.c.h.b16 %v223
  %v798 = vunpack.c.l.b16 %v224
  %v799 = vunpack.c.h.b16 %v224
  %v800 = vunpack.c.l.b16 %v225
  %v801 = vunpack.c.h.b16 %v225
  %v802 = vunpack.c.l.b16 %v226
  %v803 = vunpack.c.h.b16 %v226
  %v804 = vunpack.c.l.b16 %v227
  %v805 = vunpack.c.h.b16 %v227
  %v806 = vunpack.c.l.b16 %v228
  %v807 = vunpack.c.h.b16 %v228
  %v808 = vunpack.c.l.b16 %v229
  %v809 = vunpack.c.h.b16 %v229
  %v810 = vunpack.c.l.b16 %v230
  %v811 = vunpack.c.h.b16 %v230
  %v812 = vunpack.c.l.b16 %v231
  %v813 = vunpack.c.h.b16 %v231
  %v814 = vunpack.c.l.b16 %v232
  %v815 = vunpack.c.h.b16 %v232
  %v816 = vunpack.c.l.b16 %v233
  %v817 = vunpack.c.h.b16 %v233
  %v818 = vunpack.c.l.b16 %v234
  %v819 = vunpack.c.h.b16 %v234
  %v820 = vunpack.c.l.b16 %v235
  %v821 = vunpack.c.h.b16 %v235
  %v822 = vunpack.c.l.b16 %v236
  %v823 = vunpack.c.h.b16 %v236
  %v824 = vunpack.c.l.b16 %v237
  %v825 = vunpack.c.h.b16 %v237
  %v826 = vunpack.c.l.b16 %v238
  %v827 = vunpack.c.h.b16 %v238
  %v828 = vunpack.c.l.b16 %v239
  %v829 = vunpack.c.h.b16 %v239
  %v830 = vunpack.c.l.b16 %v240
  %v831 = vunpack.c.h.b16 %v240
  %v832 = vunpack.c.l.b16 %v241
  %v833 = vunpack.c.h.b16 %v241
  %v834 = vunpack.c.l.b16 %v242
  %v835 = vunpack.c.h.b16 %v242
  %v836 = vunpack.c.l.b16 %v243
  %v837 = vunpack.c.h.b16 %v243
  %v838 = vunpack.c.l.b16 %v244
  %v839 = vunpack.c.h.b16 %v244
  %v840 = vunpack.c.l.b16 %v245
  %v841 = vunpack.c.h.b16 %v245
  %v842 = vunpack.c.l.b16 %v246
  %v843 = vunpack.c.h.b16 %v246
  %v844 = vunpack.c.l.b16 %v247
  %v845 = vunpack.c.h.b16 %v247
  %v846 = vpack.c.b16 %v458, %v454
  %v847 = vpack.c.b16 %v459, %v455
  %v848 = vpack.c.b16 %v460, %v456
  %v849 = vpack.c.b16 %v461, %v457
  %v850 = vpack.c.b16 %v466, %v462
  %v851 = vpack.c.b16 %v467, %v463
  %v852 = vpack.c.b16 %v468, %v464
  %v853 = vpack.c.b16 %v469, %v465
  %v854 = vpack.c.b16 %v474, %v470
  %v855 = vpack.c.b16 %v475, %v471
  %v856 = vpack.c.b16 %v476, %v472
  %v857 = vpack.c.b16 %v477, %v473
  %v858 = vpack.c.b16 %v482, %v478
  %v859 = vpack.c.b16 %v483, %v479
  %v860 = vpack.c.b16 %v484, %v480
  %v861 = vpack.c.b16 %v485, %v481
  %v862 = vpack.c.b16 %v490, %v486
  %v863 = vpack.c.b16 %v491, %v487
  %v864 = vpack.c.b16 %v492, %v488
  %v865 = vpack.c.b16 %v493, %v489
  %v866 = vpack.c.b16 %v498, %v494
  %v867 = vpack.c.b16 %v499, %v495
  %v868 = vpack.c.b16 %v500, %v496
  %v869 = vpack.c.b16 %v501, %v497
  %v870 = vpack.c.b16 %v506, %v502
  %v871 = vpack.c.b16 %v507, %v503
  %v872 = vpack.c.b16 %v508, %v504
  %v873 = vpack.c.b16 %v509, %v505
  %v874 = vpack.c.b16 %v514, %v510
  %v875 = vpack.c.b16 %v515, %v511
  %v876 = vpack.c.b16 %v516, %v512
  %v877 = vpack.c.b16 %v517, %v513
  %v878 = vpack.c.b16 %v522, %v518
  %v879 = vpack.c.b16 %v523, %v519
  %v880 = vpack.c.b16 %v524, %v520
  %v881 = vpack.c.b16 %v525, %v521
  %v882 = vpack.c.b16 %v530, %v526
  %v883 = vpack.c.b16 %v531, %v527
  %v884 = vpack.c.b16 %v532, %v528
  %v885 = vpack.c.b16 %v533, %v529
  %v886 = vpack.c.b16 %v538, %v534
  %v887 = vpack.c.b16 %v539, %v535
  %v888 = vpack.c.b16 %v540, %v536
  %v889 = vpack.c.b16 %v541, %v537
  %v890 = vpack.c.b16 %v546, %v542
  %v891 = vpack.c.b16 %v547, %v543
  %v892 = vpack.c.b16 %v548, %v544
  %v893 = vpack.c.b16 %v549, %v545
  %v894 = vpack.c.b16 %v554, %v550
  %v895 = vpack.c.b16 %v555, %v551
  %v896 = vpack.c.b16 %v556, %v552
  %v897 = vpack.c.b16 %v557, %v553
  %v898 = vpack.c.b16 %v562, %v558
  %v899 = vpack.c.b16 %v563, %v559
  %v900 = vpack.c.b16 %v564, %v560
  %v901 = vpack.c.b16 %v565, %v561
  %v902 = vpack.c.b16 %v570, %v566
  %v903 = vpack.c.b16 %v571, %v567
  %v904 = vpack.c.b16 %v572, %v568
  %v905 = vpack.c.b16 %v573, %v569
  %v906 = vpack.c.b16 %v578, %v574
  %v907 = vpack.c.b16 %v579, %v575
  %v908 = vpack.c.b16 %v580, %v576
  %v909 = vpack.c.b16 %v581, %v577
  %v910 = vpack.c.b16 %v586, %v582
  %v911 = vpack.c.b16 %v587, %v583
  %v912 = vpack.c.b16 %v588, %v584
  %v913 = vpack.c.b16 %v589, %v585
  %v914 = vpack.c.b16 %v594, %v590
  %v915 = vpack.c.b16 %v595, %v591
  %v916 = vpack.c.b16 %v596, %v592
  %v917 = vpack.c.b16 %v597, %v593
  %v918 = vpack.c.b16 %v602, %v598
  %v919 = vpack.c.b16 %v603, %v599
  %v920 = vpack.c.b16 %v604, %v600
  %v921 = vpack.c.b16 %v605, %v601
  %v922 = vpack.c.b16 %v610, %v606
  %v923 = vpack.c.b16 %v611, %v607
  %v924 = vpack.c.b16 %v612, %v608
  %v925 = vpack.c.b16 %v613, %v609
  %v926 = vpack.c.b16 %v618, %v614
  %v927 = vpack.c.b16 %v619, %v615
  %v928 = vpack.c.b16 %v620, %v616
  %v929 = vpack.c.b16 %v621, %v617
  %v930 = vpack.c.b16 %v626, %v622
  %v931 = vpack.c.b16 %v627, %v623
  %v932 = vpack.c.b16 %v628, %v624
  %v933 = vpack.c.b16 %v629, %v625
  %v934 = vpack.c.b16 %v634, %v630
  %v935 = vpack.c.b16 %v635, %v631
  %v936 = vpack.c.b16 %v636, %v632
  %v937 = vpack.c.b16 %v637, %v633
  %v938 = vpack.c.b16 %v642, %v638
  %v939 = vpack.c.b16 %v643, %v639
  %v940 = vpack.c.b16 %v644, %v640
  %v941 = vpack.c.b16 %v645, %v641
  %v942 = vpack.c.b16 %v650, %v646
  %v943 = vpack.c.b16 %v651, %v647
  %v944 = vpack.c.b16 %v652, %v648
  %v945 = vpack.c.b16 %v653, %v649
  %v946 = vpack.c.b16 %v658, %v654
  %v947 = vpack.c.b16 %v659, %v655
  %v948 = vpack.c.b16 %v660, %v656
  %v949 = vpack.c.b16 %v661, %v657
  %v950 = vpack.c.b16 %v666, %v662
  %v951 = vpack.c.b16 %v667, %v663
  %v952 = vpack.c.b16 %v668, %v664
  %v953 = vpack.c.b16 %v669, %v665
  %v954 = vpack.c.b16 %v674, %v670
  %v955 = vpack.c.b16 %v675, %v671
  %v956 = vpack.c.b16 %v676, %v672
  %v957 = vpack.c.b16 %v677, %v673
  %v958 = vpack.c.b16 %v682, %v678
  %v959 = vpack.c.b16 %v683, %v679
  %v960 = vpack.c.b16 %v684, %v680
  %v961 = vpack.c.b16 %v685, %v681
  %v962 = vpack.c.b16 %v690, %v686
  %v963 = vpack.c.b16 %v691, %v687
  %v964 = vpack.c.b16 %v692, %v688
  %v965 = vpack.c.b16 %v693, %v689
  %v966 = vpack.c.b16 %v698, %v694
  %v967 = vpack.c.b16 %v699, %v695
  %v968 = vpack.c.b16 %v700, %v696
  %v969 = vpack.c.b16 %v701, %v697
  %v970 = vpack.c.b16 %v706, %v702
  %v971 = vpack.c.b16 %v707, %v703
  %v972 = vpack.c.b16 %v708, %v704
  %v973 = vpack.c.b16 %v709, %v705
  %v974 = vpack.c.b16 %v714, %v710
  %v975 = vpack.c.b16 %v715, %v711
  %v976 = vpack.c.b16 %v716, %v712
  %v977 = vpack.c.b16 %v717, %v713
  %v978 = vpack.c.b16 %v722, %v718
  %v979 = vpack.c.b16 %v723, %v719
  %v980 = vpack.c.b16 %v724, %v720
  %v981 = vpack.c.b16 %v725, %v721
  %v982 = vpack.c.b16 %v730, %v726
  %v983 = vpack.c.b16 %v731, %v727
  %v984 = vpack.c.b16 %v732, %v728
  %v985 = vpack.c.b16 %v733, %v729
  %v986 = vpack.c.b16 %v738, %v734
  %v987 = vpack.c.b16 %v739, %v735
  %v988 = vpack.c.b16 %v740, %v736
  %v989 = vpack.c.b16 %v741, %v737
  %v990 = vpack.c.b16 %v746, %v742
  %v991 = vpack.c.b16 %v747, %v743
  %v992 = vpack.c.b16 %v748, %v744
  %v993 = vpack.c.b16 %v749, %v745
  %v994 = vpack.c.b16 %v754, %v750
  %v995 = vpack.c.b16 %v755, %v751
  %v996 = vpack.c.b16 %v756, %v752
  %v997 = vpack.c.b16 %v757, %v753
  %v998 = vpack.c.b16 %v762, %v758
  %v999 = vpack.c.b16 %v763, %v759
  %v1000 = vpack.c.b16 %v764, %v760
  %v1001 = vpack.c.b16 %v765, %v761
  %v1002 = vpack.c.b16 %v770, %v766
  %v1003 = vpack.c.b16 %v771, %v767
  %v1004 = vpack.c.b16 %v772, %v768
  %v1005 = vpack.c.b16 %v773, %v769
  %v1006 = vpack.c.b16 %v778, %v774
  %v1007 = vpack.c.b16 %v779, %v775
  %v1008 = vpack.c.b16 %v780, %v776
  %v1009 = vpack.c.b16 %v781, %v777
  %v1010 = vpack.c.b16 %v786, %v782
  %v1011 = vpack.c.b16 %v787, %v783
  %v1012 = vpack.c.b16 %v788, %v784
  %v1013 = vpack.c.b16 %v789, %v785
  %v1014 = vpack.c.b16 %v794, %v790
  %v1015 = vpack.c.b16 %v795, %v791
  %v1016 = vpack.c.b16 %v796, %v792
  %v1017 = vpack.c.b16 %v797, %v793
  %v1018 = vpack.c.b16 %v802, %v798
  %v1019 = vpack.c.b16 %v803, %v799
  %v1020 = vpack.c.b16 %v804, %v800
  %v1021 = vpack.c.b16 %v805, %v801
  %v1022 = vpack.c.b16 %v810, %v806
  %v1023 = vpack.c.b16 %v811, %v807
  %v1024 = vpack.c.b16 %v812, %v808
  %v1025 = vpack.c.b16 %v813, %v809
  %v1026 = vpack.c.b16 %v818, %v814
  %v1027 = vpack.c.b16 %v819, %v815
  %v1028 = vpack.c.b16 %v820, %v816
  %v1029 = vpack.c.b16 %v821, %v817
  %v1030 = vpack.c.b16 %v826, %v822
  %v1031 = vpack.c.b16 %v827, %v823
  %v1032 = vpack.c.b16 %v828, %v824
  %v1033 = vpack.c.b16 %v829, %v825
  %v1034 = vpack.c.b16 %v834, %v830
  %v1035 = vpack.c.b16 %v835, %v831
  %v1036 = vpack.c.b16 %v836, %v832
  %v1037 = vpack.c.b16 %v837, %v833
  %v1038 = vpack.c.b16 %v842, %v838
  %v1039 = vpack.c.b16 %v843, %v839
  %v1040 = vpack.c.b16 %v844, %v840
  %v1041 = vpack.c.b16 %v845, %v841
  %vm1238 = vcmask 130048
  %v1240 = vsel %vm1238, %v51, 0
  %1242 = vmatpush.bf16.msra.mxu0 %v874
  %1243 = vmatpush.bf16.msra.mxu0 %v870
  %1244 = vmatpush.bf16.msra.mxu0 %v866
  %1245 = vmatpush.bf16.msra.mxu0 %v862
  %1246 = vmatpush.bf16.msra.mxu0 %v858
  %1247 = vmatpush.bf16.msra.mxu0 %v854
  %1248 = vmatpush.bf16.msra.mxu0 %v850
  %1249 = vmatpush.bf16.msra.mxu0 %v846
  %1250 = vmatmul.bf16.gmra.mxu0 %v45
  %v1251 = vpop.f32.mrf.mxu0
  %v1252 = vadd.f32 %v250, %v1251
  %v1253 = vpop.f32.mrf.mxu0
  %1254 = vdwg.mxu0
  %1255 = vmatpush.bf16.msra.mxu0 %v906
  %1256 = vmatpush.bf16.msra.mxu0 %v902
  %1257 = vmatpush.bf16.msra.mxu0 %v898
  %1258 = vmatpush.bf16.msra.mxu0 %v894
  %1259 = vmatpush.bf16.msra.mxu0 %v890
  %1260 = vmatpush.bf16.msra.mxu0 %v886
  %1261 = vmatpush.bf16.msra.mxu0 %v882
  %1262 = vmatpush.bf16.msra.mxu0 %v878
  %1263 = vmatmul.bf16.gmra.mxu0 %v46
  %v1264 = vpop.f32.mrf.mxu0
  %v1265 = vadd.f32 %v1252, %v1264
  %v1266 = vpop.f32.mrf.mxu0
  %1267 = vdwg.mxu0
  %1268 = vmatpush.bf16.msra.mxu0 %v938
  %1269 = vmatpush.bf16.msra.mxu0 %v934
  %1270 = vmatpush.bf16.msra.mxu0 %v930
  %1271 = vmatpush.bf16.msra.mxu0 %v926
  %1272 = vmatpush.bf16.msra.mxu0 %v922
  %1273 = vmatpush.bf16.msra.mxu0 %v918
  %1274 = vmatpush.bf16.msra.mxu0 %v914
  %1275 = vmatpush.bf16.msra.mxu0 %v910
  %1276 = vmatmul.bf16.gmra.mxu0 %v47
  %v1277 = vpop.f32.mrf.mxu0
  %v1278 = vadd.f32 %v1265, %v1277
  %v1279 = vpop.f32.mrf.mxu0
  %1280 = vdwg.mxu0
  %1281 = vmatpush.bf16.msra.mxu0 %v970
  %1282 = vmatpush.bf16.msra.mxu0 %v966
  %1283 = vmatpush.bf16.msra.mxu0 %v962
  %1284 = vmatpush.bf16.msra.mxu0 %v958
  %1285 = vmatpush.bf16.msra.mxu0 %v954
  %1286 = vmatpush.bf16.msra.mxu0 %v950
  %1287 = vmatpush.bf16.msra.mxu0 %v946
  %1288 = vmatpush.bf16.msra.mxu0 %v942
  %1289 = vmatmul.bf16.gmra.mxu0 %v48
  %v1290 = vpop.f32.mrf.mxu0
  %v1291 = vadd.f32 %v1278, %v1290
  %v1292 = vpop.f32.mrf.mxu0
  %1293 = vdwg.mxu0
  %1294 = vmatpush.bf16.msra.mxu0 %v1002
  %1295 = vmatpush.bf16.msra.mxu0 %v998
  %1296 = vmatpush.bf16.msra.mxu0 %v994
  %1297 = vmatpush.bf16.msra.mxu0 %v990
  %1298 = vmatpush.bf16.msra.mxu0 %v986
  %1299 = vmatpush.bf16.msra.mxu0 %v982
  %1300 = vmatpush.bf16.msra.mxu0 %v978
  %1301 = vmatpush.bf16.msra.mxu0 %v974
  %1302 = vmatmul.bf16.gmra.mxu0 %v49
  %v1303 = vpop.f32.mrf.mxu0
  %v1304 = vadd.f32 %v1291, %v1303
  %v1305 = vpop.f32.mrf.mxu0
  %1306 = vdwg.mxu0
  %1307 = vmatpush.bf16.msra.mxu0 %v1034
  %1308 = vmatpush.bf16.msra.mxu0 %v1030
  %1309 = vmatpush.bf16.msra.mxu0 %v1026
  %1310 = vmatpush.bf16.msra.mxu0 %v1022
  %1311 = vmatpush.bf16.msra.mxu0 %v1018
  %1312 = vmatpush.bf16.msra.mxu0 %v1014
  %1313 = vmatpush.bf16.msra.mxu0 %v1010
  %1314 = vmatpush.bf16.msra.mxu0 %v1006
  %1315 = vmatmul.bf16.gmra.mxu0 %v50
  %v1316 = vpop.f32.mrf.mxu0
  %v1317 = vadd.f32 %v1304, %v1316
  %v1318 = vpop.f32.mrf.mxu0
  %1319 = vdwg.mxu0
  %1320 = vmatpush.bf16.msra.mxu0 0
  %1321 = vmatpush.bf16.msra.mxu0 0
  %1322 = vmatpush.bf16.msra.mxu0 0
  %1323 = vmatpush.bf16.msra.mxu0 0
  %1324 = vmatpush.bf16.msra.mxu0 0
  %1325 = vmatpush.bf16.msra.mxu0 0
  %1326 = vmatpush.bf16.msra.mxu0 0
  %1327 = vmatpush.bf16.msra.mxu0 %v1038
  %1328 = vmatmul.bf16.gmra.mxu0 %v1240
  %v1329 = vpop.f32.mrf.mxu0
  %v1330 = vadd.f32 %v1317, %v1329
  %v1331 = vpop.f32.mrf.mxu0
  %1332 = vdwg.mxu0
  %1333 = vmatpush.bf16.msra.mxu0 %v875
  %1334 = vmatpush.bf16.msra.mxu0 %v871
  %1335 = vmatpush.bf16.msra.mxu0 %v867
  %1336 = vmatpush.bf16.msra.mxu0 %v863
  %1337 = vmatpush.bf16.msra.mxu0 %v859
  %1338 = vmatpush.bf16.msra.mxu0 %v855
  %1339 = vmatpush.bf16.msra.mxu0 %v851
  %1340 = vmatpush.bf16.msra.mxu0 %v847
  %1341 = vmatmul.bf16.gmra.mxu0 %v45
  %v1342 = vpop.f32.mrf.mxu0
  %v1343 = vadd.f32 %v251, %v1342
  %v1344 = vpop.f32.mrf.mxu0
  %1345 = vdwg.mxu0
  %1346 = vmatpush.bf16.msra.mxu0 %v907
  %1347 = vmatpush.bf16.msra.mxu0 %v903
  %1348 = vmatpush.bf16.msra.mxu0 %v899
  %1349 = vmatpush.bf16.msra.mxu0 %v895
  %1350 = vmatpush.bf16.msra.mxu0 %v891
  %1351 = vmatpush.bf16.msra.mxu0 %v887
  %1352 = vmatpush.bf16.msra.mxu0 %v883
  %1353 = vmatpush.bf16.msra.mxu0 %v879
  %1354 = vmatmul.bf16.gmra.mxu0 %v46
  %v1355 = vpop.f32.mrf.mxu0
  %v1356 = vadd.f32 %v1343, %v1355
  %v1357 = vpop.f32.mrf.mxu0
  %1358 = vdwg.mxu0
  %1359 = vmatpush.bf16.msra.mxu0 %v939
  %1360 = vmatpush.bf16.msra.mxu0 %v935
  %1361 = vmatpush.bf16.msra.mxu0 %v931
  %1362 = vmatpush.bf16.msra.mxu0 %v927
  %1363 = vmatpush.bf16.msra.mxu0 %v923
  %1364 = vmatpush.bf16.msra.mxu0 %v919
  %1365 = vmatpush.bf16.msra.mxu0 %v915
  %1366 = vmatpush.bf16.msra.mxu0 %v911
  %1367 = vmatmul.bf16.gmra.mxu0 %v47
  %v1368 = vpop.f32.mrf.mxu0
  %v1369 = vadd.f32 %v1356, %v1368
  %v1370 = vpop.f32.mrf.mxu0
  %1371 = vdwg.mxu0
  %1372 = vmatpush.bf16.msra.mxu0 %v971
  %1373 = vmatpush.bf16.msra.mxu0 %v967
  %1374 = vmatpush.bf16.msra.mxu0 %v963
  %1375 = vmatpush.bf16.msra.mxu0 %v959
  %1376 = vmatpush.bf16.msra.mxu0 %v955
  %1377 = vmatpush.bf16.msra.mxu0 %v951
  %1378 = vmatpush.bf16.msra.mxu0 %v947
  %1379 = vmatpush.bf16.msra.mxu0 %v943
  %1380 = vmatmul.bf16.gmra.mxu0 %v48
  %v1381 = vpop.f32.mrf.mxu0
  %v1382 = vadd.f32 %v1369, %v1381
  %v1383 = vpop.f32.mrf.mxu0
  %1384 = vdwg.mxu0
  %1385 = vmatpush.bf16.msra.mxu0 %v1003
  %1386 = vmatpush.bf16.msra.mxu0 %v999
  %1387 = vmatpush.bf16.msra.mxu0 %v995
  %1388 = vmatpush.bf16.msra.mxu0 %v991
  %1389 = vmatpush.bf16.msra.mxu0 %v987
  %1390 = vmatpush.bf16.msra.mxu0 %v983
  %1391 = vmatpush.bf16.msra.mxu0 %v979
  %1392 = vmatpush.bf16.msra.mxu0 %v975
  %1393 = vmatmul.bf16.gmra.mxu0 %v49
  %v1394 = vpop.f32.mrf.mxu0
  %v1395 = vadd.f32 %v1382, %v1394
  %v1396 = vpop.f32.mrf.mxu0
  %1397 = vdwg.mxu0
  %1398 = vmatpush.bf16.msra.mxu0 %v1035
  %1399 = vmatpush.bf16.msra.mxu0 %v1031
  %1400 = vmatpush.bf16.msra.mxu0 %v1027
  %1401 = vmatpush.bf16.msra.mxu0 %v1023
  %1402 = vmatpush.bf16.msra.mxu0 %v1019
  %1403 = vmatpush.bf16.msra.mxu0 %v1015
  %1404 = vmatpush.bf16.msra.mxu0 %v1011
  %1405 = vmatpush.bf16.msra.mxu0 %v1007
  %1406 = vmatmul.bf16.gmra.mxu0 %v50
  %v1407 = vpop.f32.mrf.mxu0
  %v1408 = vadd.f32 %v1395, %v1407
  %v1409 = vpop.f32.mrf.mxu0
  %1410 = vdwg.mxu0
  %1411 = vmatpush.bf16.msra.mxu0 0
  %1412 = vmatpush.bf16.msra.mxu0 0
  %1413 = vmatpush.bf16.msra.mxu0 0
  %1414 = vmatpush.bf16.msra.mxu0 0
  %1415 = vmatpush.bf16.msra.mxu0 0
  %1416 = vmatpush.bf16.msra.mxu0 0
  %1417 = vmatpush.bf16.msra.mxu0 0
  %1418 = vmatpush.bf16.msra.mxu0 %v1039
  %1419 = vmatmul.bf16.gmra.mxu0 %v1240
  %v1420 = vpop.f32.mrf.mxu0
  %v1421 = vadd.f32 %v1408, %v1420
  %v1422 = vpop.f32.mrf.mxu0
  %1423 = vdwg.mxu0
  %1424 = vmatpush.bf16.msra.mxu0 %v876
  %1425 = vmatpush.bf16.msra.mxu0 %v872
  %1426 = vmatpush.bf16.msra.mxu0 %v868
  %1427 = vmatpush.bf16.msra.mxu0 %v864
  %1428 = vmatpush.bf16.msra.mxu0 %v860
  %1429 = vmatpush.bf16.msra.mxu0 %v856
  %1430 = vmatpush.bf16.msra.mxu0 %v852
  %1431 = vmatpush.bf16.msra.mxu0 %v848
  %1432 = vmatmul.bf16.gmra.mxu0 %v45
  %v1433 = vpop.f32.mrf.mxu0
  %v1434 = vadd.f32 %v252, %v1433
  %v1435 = vpop.f32.mrf.mxu0
  %1436 = vdwg.mxu0
  %1437 = vmatpush.bf16.msra.mxu0 %v908
  %1438 = vmatpush.bf16.msra.mxu0 %v904
  %1439 = vmatpush.bf16.msra.mxu0 %v900
  %1440 = vmatpush.bf16.msra.mxu0 %v896
  %1441 = vmatpush.bf16.msra.mxu0 %v892
  %1442 = vmatpush.bf16.msra.mxu0 %v888
  %1443 = vmatpush.bf16.msra.mxu0 %v884
  %1444 = vmatpush.bf16.msra.mxu0 %v880
  %1445 = vmatmul.bf16.gmra.mxu0 %v46
  %v1446 = vpop.f32.mrf.mxu0
  %v1447 = vadd.f32 %v1434, %v1446
  %v1448 = vpop.f32.mrf.mxu0
  %1449 = vdwg.mxu0
  %1450 = vmatpush.bf16.msra.mxu0 %v940
  %1451 = vmatpush.bf16.msra.mxu0 %v936
  %1452 = vmatpush.bf16.msra.mxu0 %v932
  %1453 = vmatpush.bf16.msra.mxu0 %v928
  %1454 = vmatpush.bf16.msra.mxu0 %v924
  %1455 = vmatpush.bf16.msra.mxu0 %v920
  %1456 = vmatpush.bf16.msra.mxu0 %v916
  %1457 = vmatpush.bf16.msra.mxu0 %v912
  %1458 = vmatmul.bf16.gmra.mxu0 %v47
  %v1459 = vpop.f32.mrf.mxu0
  %v1460 = vadd.f32 %v1447, %v1459
  %v1461 = vpop.f32.mrf.mxu0
  %1462 = vdwg.mxu0
  %1463 = vmatpush.bf16.msra.mxu0 %v972
  %1464 = vmatpush.bf16.msra.mxu0 %v968
  %1465 = vmatpush.bf16.msra.mxu0 %v964
  %1466 = vmatpush.bf16.msra.mxu0 %v960
  %1467 = vmatpush.bf16.msra.mxu0 %v956
  %1468 = vmatpush.bf16.msra.mxu0 %v952
  %1469 = vmatpush.bf16.msra.mxu0 %v948
  %1470 = vmatpush.bf16.msra.mxu0 %v944
  %1471 = vmatmul.bf16.gmra.mxu0 %v48
  %v1472 = vpop.f32.mrf.mxu0
  %v1473 = vadd.f32 %v1460, %v1472
  %v1474 = vpop.f32.mrf.mxu0
  %1475 = vdwg.mxu0
  %1476 = vmatpush.bf16.msra.mxu0 %v1004
  %1477 = vmatpush.bf16.msra.mxu0 %v1000
  %1478 = vmatpush.bf16.msra.mxu0 %v996
  %1479 = vmatpush.bf16.msra.mxu0 %v992
  %1480 = vmatpush.bf16.msra.mxu0 %v988
  %1481 = vmatpush.bf16.msra.mxu0 %v984
  %1482 = vmatpush.bf16.msra.mxu0 %v980
  %1483 = vmatpush.bf16.msra.mxu0 %v976
  %1484 = vmatmul.bf16.gmra.mxu0 %v49
  %v1485 = vpop.f32.mrf.mxu0
  %v1486 = vadd.f32 %v1473, %v1485
  %v1487 = vpop.f32.mrf.mxu0
  %1488 = vdwg.mxu0
  %1489 = vmatpush.bf16.msra.mxu0 %v1036
  %1490 = vmatpush.bf16.msra.mxu0 %v1032
  %1491 = vmatpush.bf16.msra.mxu0 %v1028
  %1492 = vmatpush.bf16.msra.mxu0 %v1024
  %1493 = vmatpush.bf16.msra.mxu0 %v1020
  %1494 = vmatpush.bf16.msra.mxu0 %v1016
  %1495 = vmatpush.bf16.msra.mxu0 %v1012
  %1496 = vmatpush.bf16.msra.mxu0 %v1008
  %1497 = vmatmul.bf16.gmra.mxu0 %v50
  %v1498 = vpop.f32.mrf.mxu0
  %v1499 = vadd.f32 %v1486, %v1498
  %v1500 = vpop.f32.mrf.mxu0
  %1501 = vdwg.mxu0
  %1502 = vmatpush.bf16.msra.mxu0 0
  %1503 = vmatpush.bf16.msra.mxu0 0
  %1504 = vmatpush.bf16.msra.mxu0 0
  %1505 = vmatpush.bf16.msra.mxu0 0
  %1506 = vmatpush.bf16.msra.mxu0 0
  %1507 = vmatpush.bf16.msra.mxu0 0
  %1508 = vmatpush.bf16.msra.mxu0 0
  %1509 = vmatpush.bf16.msra.mxu0 %v1040
  %1510 = vmatmul.bf16.gmra.mxu0 %v1240
  %v1511 = vpop.f32.mrf.mxu0
  %v1512 = vadd.f32 %v1499, %v1511
  %v1513 = vpop.f32.mrf.mxu0
  %1514 = vdwg.mxu0
  %1515 = vmatpush.bf16.msra.mxu0 %v877
  %1516 = vmatpush.bf16.msra.mxu0 %v873
  %1517 = vmatpush.bf16.msra.mxu0 %v869
  %1518 = vmatpush.bf16.msra.mxu0 %v865
  %1519 = vmatpush.bf16.msra.mxu0 %v861
  %1520 = vmatpush.bf16.msra.mxu0 %v857
  %1521 = vmatpush.bf16.msra.mxu0 %v853
  %1522 = vmatpush.bf16.msra.mxu0 %v849
  %1523 = vmatmul.bf16.gmra.mxu0 %v45
  %v1524 = vpop.f32.mrf.mxu0
  %v1525 = vadd.f32 %v253, %v1524
  %v1526 = vpop.f32.mrf.mxu0
  %1527 = vdwg.mxu0
  %1528 = vmatpush.bf16.msra.mxu0 %v909
  %1529 = vmatpush.bf16.msra.mxu0 %v905
  %1530 = vmatpush.bf16.msra.mxu0 %v901
  %1531 = vmatpush.bf16.msra.mxu0 %v897
  %1532 = vmatpush.bf16.msra.mxu0 %v893
  %1533 = vmatpush.bf16.msra.mxu0 %v889
  %1534 = vmatpush.bf16.msra.mxu0 %v885
  %1535 = vmatpush.bf16.msra.mxu0 %v881
  %1536 = vmatmul.bf16.gmra.mxu0 %v46
  %v1537 = vpop.f32.mrf.mxu0
  %v1538 = vadd.f32 %v1525, %v1537
  %v1539 = vpop.f32.mrf.mxu0
  %1540 = vdwg.mxu0
  %1541 = vmatpush.bf16.msra.mxu0 %v941
  %1542 = vmatpush.bf16.msra.mxu0 %v937
  %1543 = vmatpush.bf16.msra.mxu0 %v933
  %1544 = vmatpush.bf16.msra.mxu0 %v929
  %1545 = vmatpush.bf16.msra.mxu0 %v925
  %1546 = vmatpush.bf16.msra.mxu0 %v921
  %1547 = vmatpush.bf16.msra.mxu0 %v917
  %1548 = vmatpush.bf16.msra.mxu0 %v913
  %1549 = vmatmul.bf16.gmra.mxu0 %v47
  %v1550 = vpop.f32.mrf.mxu0
  %v1551 = vadd.f32 %v1538, %v1550
  %v1552 = vpop.f32.mrf.mxu0
  %1553 = vdwg.mxu0
  %1554 = vmatpush.bf16.msra.mxu0 %v973
  %1555 = vmatpush.bf16.msra.mxu0 %v969
  %1556 = vmatpush.bf16.msra.mxu0 %v965
  %1557 = vmatpush.bf16.msra.mxu0 %v961
  %1558 = vmatpush.bf16.msra.mxu0 %v957
  %1559 = vmatpush.bf16.msra.mxu0 %v953
  %1560 = vmatpush.bf16.msra.mxu0 %v949
  %1561 = vmatpush.bf16.msra.mxu0 %v945
  %1562 = vmatmul.bf16.gmra.mxu0 %v48
  %v1563 = vpop.f32.mrf.mxu0
  %v1564 = vadd.f32 %v1551, %v1563
  %v1565 = vpop.f32.mrf.mxu0
  %1566 = vdwg.mxu0
  %1567 = vmatpush.bf16.msra.mxu0 %v1005
  %1568 = vmatpush.bf16.msra.mxu0 %v1001
  %1569 = vmatpush.bf16.msra.mxu0 %v997
  %1570 = vmatpush.bf16.msra.mxu0 %v993
  %1571 = vmatpush.bf16.msra.mxu0 %v989
  %1572 = vmatpush.bf16.msra.mxu0 %v985
  %1573 = vmatpush.bf16.msra.mxu0 %v981
  %1574 = vmatpush.bf16.msra.mxu0 %v977
  %1575 = vmatmul.bf16.gmra.mxu0 %v49
  %v1576 = vpop.f32.mrf.mxu0
  %v1577 = vadd.f32 %v1564, %v1576
  %v1578 = vpop.f32.mrf.mxu0
  %1579 = vdwg.mxu0
  %1580 = vmatpush.bf16.msra.mxu0 %v1037
  %1581 = vmatpush.bf16.msra.mxu0 %v1033
  %1582 = vmatpush.bf16.msra.mxu0 %v1029
  %1583 = vmatpush.bf16.msra.mxu0 %v1025
  %1584 = vmatpush.bf16.msra.mxu0 %v1021
  %1585 = vmatpush.bf16.msra.mxu0 %v1017
  %1586 = vmatpush.bf16.msra.mxu0 %v1013
  %1587 = vmatpush.bf16.msra.mxu0 %v1009
  %1588 = vmatmul.bf16.gmra.mxu0 %v50
  %v1589 = vpop.f32.mrf.mxu0
  %v1590 = vadd.f32 %v1577, %v1589
  %v1591 = vpop.f32.mrf.mxu0
  %1592 = vdwg.mxu0
  %1593 = vmatpush.bf16.msra.mxu0 0
  %1594 = vmatpush.bf16.msra.mxu0 0
  %1595 = vmatpush.bf16.msra.mxu0 0
  %1596 = vmatpush.bf16.msra.mxu0 0
  %1597 = vmatpush.bf16.msra.mxu0 0
  %1598 = vmatpush.bf16.msra.mxu0 0
  %1599 = vmatpush.bf16.msra.mxu0 0
  %1600 = vmatpush.bf16.msra.mxu0 %v1041
  %1601 = vmatmul.bf16.gmra.mxu0 %v1240
  %v1602 = vpop.f32.mrf.mxu0
  %v1603 = vadd.f32 %v1590, %v1602
  %v1604 = vpop.f32.mrf.mxu0
  %1605 = vdwg.mxu0
  %v1606 = vmax.f32 %v1330, 0.0
  %v1607 = vmax.f32 %v1421, 0.0
  %v1608 = vmax.f32 %v1512, 0.0
  %v1609 = vmax.f32 %v1603, 0.0
  %v1610 = vpack.c.bf16 %v1606, %v1606
  %v1611 = vpack.c.bf16 %v1607, %v1607
  %v1612 = vpack.c.bf16 %v1608, %v1608
  %v1613 = vpack.c.bf16 %v1609, %v1609
  %v1614 = vld [vmem:[%s4] sm:$0xff]
  %v1615 = vld [vmem:[%s4 + $0x8] sm:$0xff]
  %v1616 = vld [vmem:[%s4 + $0x10] sm:$0xff]
  %v1617 = vld [vmem:[%s4 + $0x18] sm:$0xff]
  %v1618 = vld [vmem:[%s4 + $0x20] sm:$0xff]
  %v1619 = vld [vmem:[%s4 + $0x28] sm:$0xff]
  %v1620 = vld [vmem:[%s4 + $0x30] sm:$0xff]
  %v1621 = vld [vmem:[%s4 + $0x38] sm:$0xff]
  %v1622 = vld [vmem:[%s4 + $0x40] sm:$0xff]
  %v1623 = vld [vmem:[%s4 + $0x48] sm:$0xff]
  %v1624 = vld [vmem:[%s4 + $0x50] sm:$0xff]
  %v1625 = vld [vmem:[%s4 + $0x58] sm:$0xff]
  %v1626 = vld [vmem:[%s4 + $0x60] sm:$0xff]
  %v1627 = vld [vmem:[%s4 + $0x68] sm:$0xff]
  %v1628 = vld [vmem:[%s4 + $0x70] sm:$0xff]
  %v1629 = vld [vmem:[%s4 + $0x78] sm:$0xff]
  %v1630 = vld [vmem:[%s4 + $0x80] sm:$0xff]
  %v1631 = vld [vmem:[%s4 + $0x88] sm:$0xff]
  %v1632 = vld [vmem:[%s4 + $0x90] sm:$0xff]
  %v1633 = vld [vmem:[%s4 + $0x98] sm:$0xff]
  %v1634 = vld [vmem:[%s4 + $0xa0] sm:$0xff]
  %v1635 = vld [vmem:[%s4 + $0xa8] sm:$0xff]
  %v1636 = vld [vmem:[%s4 + $0xb0] sm:$0xff]
  %v1637 = vld [vmem:[%s4 + $0xb8] sm:$0xff]
  %v1638 = vld [vmem:[%s4 + $0xc0] sm:$0xff]
  %v1639 = vld [vmem:[%s4 + $0xc8] sm:$0xff]
  %v1640 = vld [vmem:[%s4 + $0xd0] sm:$0xff]
  %v1641 = vld [vmem:[%s4 + $0xd8] sm:$0xff]
  %v1642 = vld [vmem:[%s4 + $0xe0] sm:$0xff]
  %v1643 = vld [vmem:[%s4 + $0xe8] sm:$0xff]
  %v1644 = vld [vmem:[%s4 + $0xf0] sm:$0xff]
  %v1645 = vld [vmem:[%s4 + $0xf8] sm:$0xff]
  %v1646 = vld [vmem:[%s4 + $0x100] sm:$0xff]
  %v1647 = vld [vmem:[%s4 + $0x108] sm:$0xff]
  %v1648 = vld [vmem:[%s4 + $0x110] sm:$0xff]
  %v1649 = vld [vmem:[%s4 + $0x118] sm:$0xff]
  %v1650 = vld [vmem:[%s4 + $0x120] sm:$0xff]
  %v1651 = vld [vmem:[%s4 + $0x128] sm:$0xff]
  %v1652 = vld [vmem:[%s4 + $0x130] sm:$0xff]
  %v1653 = vld [vmem:[%s4 + $0x138] sm:$0xff]
  %v1654 = vld [vmem:[%s4 + $0x140] sm:$0xff]
  %v1655 = vld [vmem:[%s4 + $0x148] sm:$0xff]
  %v1656 = vld [vmem:[%s4 + $0x150] sm:$0xff]
  %v1657 = vld [vmem:[%s4 + $0x158] sm:$0xff]
  %v1658 = vld [vmem:[%s4 + $0x160] sm:$0xff]
  %v1659 = vld [vmem:[%s4 + $0x168] sm:$0xff]
  %v1660 = vld [vmem:[%s4 + $0x170] sm:$0xff]
  %v1661 = vld [vmem:[%s4 + $0x178] sm:$0xff]
  %v1662 = vld [vmem:[%s4 + $0x180] sm:$0xff]
  %v1663 = vld [vmem:[%s4 + $0x188] sm:$0xff]
  %v1664 = vld [vmem:[%s4 + $0x190] sm:$0xff]
  %v1665 = vld [vmem:[%s4 + $0x198] sm:$0xff]
  %v1666 = vld [vmem:[%s4 + $0x1a0] sm:$0xff]
  %v1667 = vld [vmem:[%s4 + $0x1a8] sm:$0xff]
  %v1668 = vld [vmem:[%s4 + $0x1b0] sm:$0xff]
  %v1669 = vld [vmem:[%s4 + $0x1b8] sm:$0xff]
  %v1670 = vld [vmem:[%s4 + $0x1c0] sm:$0xff]
  %v1671 = vld [vmem:[%s4 + $0x1c8] sm:$0xff]
  %v1672 = vld [vmem:[%s4 + $0x1d0] sm:$0xff]
  %v1673 = vld [vmem:[%s4 + $0x1d8] sm:$0xff]
  %v1674 = vld [vmem:[%s4 + $0x1e0] sm:$0xff]
  %v1675 = vld [vmem:[%s4 + $0x1e8] sm:$0xff]
  %v1676 = vld [vmem:[%s4 + $0x1f0] sm:$0xff]
  %v1677 = vld [vmem:[%s4 + $0x1f8] sm:$0xff]
  %v1678 = vld [vmem:[%s5] sm:$0x3]
  %v1680 = vperm.slane %v1678, 0
  %v1681 = vperm.slane %v1678, 1
  %v1748 = vunpack.c.l.b16 %v1614
  %v1749 = vunpack.c.h.b16 %v1614
  %v1750 = vunpack.c.l.b16 %v1615
  %v1751 = vunpack.c.h.b16 %v1615
  %v1752 = vunpack.c.l.b16 %v1616
  %v1753 = vunpack.c.h.b16 %v1616
  %v1754 = vunpack.c.l.b16 %v1617
  %v1755 = vunpack.c.h.b16 %v1617
  %v1756 = vunpack.c.l.b16 %v1618
  %v1757 = vunpack.c.h.b16 %v1618
  %v1758 = vunpack.c.l.b16 %v1619
  %v1759 = vunpack.c.h.b16 %v1619
  %v1760 = vunpack.c.l.b16 %v1620
  %v1761 = vunpack.c.h.b16 %v1620
  %v1762 = vunpack.c.l.b16 %v1621
  %v1763 = vunpack.c.h.b16 %v1621
  %v1764 = vunpack.c.l.b16 %v1622
  %v1765 = vunpack.c.h.b16 %v1622
  %v1766 = vunpack.c.l.b16 %v1623
  %v1767 = vunpack.c.h.b16 %v1623
  %v1768 = vunpack.c.l.b16 %v1624
  %v1769 = vunpack.c.h.b16 %v1624
  %v1770 = vunpack.c.l.b16 %v1625
  %v1771 = vunpack.c.h.b16 %v1625
  %v1772 = vunpack.c.l.b16 %v1626
  %v1773 = vunpack.c.h.b16 %v1626
  %v1774 = vunpack.c.l.b16 %v1627
  %v1775 = vunpack.c.h.b16 %v1627
  %v1776 = vunpack.c.l.b16 %v1628
  %v1777 = vunpack.c.h.b16 %v1628
  %v1778 = vunpack.c.l.b16 %v1629
  %v1779 = vunpack.c.h.b16 %v1629
  %v1780 = vunpack.c.l.b16 %v1630
  %v1781 = vunpack.c.h.b16 %v1630
  %v1782 = vunpack.c.l.b16 %v1631
  %v1783 = vunpack.c.h.b16 %v1631
  %v1784 = vunpack.c.l.b16 %v1632
  %v1785 = vunpack.c.h.b16 %v1632
  %v1786 = vunpack.c.l.b16 %v1633
  %v1787 = vunpack.c.h.b16 %v1633
  %v1788 = vunpack.c.l.b16 %v1634
  %v1789 = vunpack.c.h.b16 %v1634
  %v1790 = vunpack.c.l.b16 %v1635
  %v1791 = vunpack.c.h.b16 %v1635
  %v1792 = vunpack.c.l.b16 %v1636
  %v1793 = vunpack.c.h.b16 %v1636
  %v1794 = vunpack.c.l.b16 %v1637
  %v1795 = vunpack.c.h.b16 %v1637
  %v1796 = vunpack.c.l.b16 %v1638
  %v1797 = vunpack.c.h.b16 %v1638
  %v1798 = vunpack.c.l.b16 %v1639
  %v1799 = vunpack.c.h.b16 %v1639
  %v1800 = vunpack.c.l.b16 %v1640
  %v1801 = vunpack.c.h.b16 %v1640
  %v1802 = vunpack.c.l.b16 %v1641
  %v1803 = vunpack.c.h.b16 %v1641
  %v1804 = vunpack.c.l.b16 %v1642
  %v1805 = vunpack.c.h.b16 %v1642
  %v1806 = vunpack.c.l.b16 %v1643
  %v1807 = vunpack.c.h.b16 %v1643
  %v1808 = vunpack.c.l.b16 %v1644
  %v1809 = vunpack.c.h.b16 %v1644
  %v1810 = vunpack.c.l.b16 %v1645
  %v1811 = vunpack.c.h.b16 %v1645
  %v1812 = vunpack.c.l.b16 %v1646
  %v1813 = vunpack.c.h.b16 %v1646
  %v1814 = vunpack.c.l.b16 %v1647
  %v1815 = vunpack.c.h.b16 %v1647
  %v1816 = vunpack.c.l.b16 %v1648
  %v1817 = vunpack.c.h.b16 %v1648
  %v1818 = vunpack.c.l.b16 %v1649
  %v1819 = vunpack.c.h.b16 %v1649
  %v1820 = vunpack.c.l.b16 %v1650
  %v1821 = vunpack.c.h.b16 %v1650
  %v1822 = vunpack.c.l.b16 %v1651
  %v1823 = vunpack.c.h.b16 %v1651
  %v1824 = vunpack.c.l.b16 %v1652
  %v1825 = vunpack.c.h.b16 %v1652
  %v1826 = vunpack.c.l.b16 %v1653
  %v1827 = vunpack.c.h.b16 %v1653
  %v1828 = vunpack.c.l.b16 %v1654
  %v1829 = vunpack.c.h.b16 %v1654
  %v1830 = vunpack.c.l.b16 %v1655
  %v1831 = vunpack.c.h.b16 %v1655
  %v1832 = vunpack.c.l.b16 %v1656
  %v1833 = vunpack.c.h.b16 %v1656
  %v1834 = vunpack.c.l.b16 %v1657
  %v1835 = vunpack.c.h.b16 %v1657
  %v1836 = vunpack.c.l.b16 %v1658
  %v1837 = vunpack.c.h.b16 %v1658
  %v1838 = vunpack.c.l.b16 %v1659
  %v1839 = vunpack.c.h.b16 %v1659
  %v1840 = vunpack.c.l.b16 %v1660
  %v1841 = vunpack.c.h.b16 %v1660
  %v1842 = vunpack.c.l.b16 %v1661
  %v1843 = vunpack.c.h.b16 %v1661
  %v1844 = vunpack.c.l.b16 %v1662
  %v1845 = vunpack.c.h.b16 %v1662
  %v1846 = vunpack.c.l.b16 %v1663
  %v1847 = vunpack.c.h.b16 %v1663
  %v1848 = vunpack.c.l.b16 %v1664
  %v1849 = vunpack.c.h.b16 %v1664
  %v1850 = vunpack.c.l.b16 %v1665
  %v1851 = vunpack.c.h.b16 %v1665
  %v1852 = vunpack.c.l.b16 %v1666
  %v1853 = vunpack.c.h.b16 %v1666
  %v1854 = vunpack.c.l.b16 %v1667
  %v1855 = vunpack.c.h.b16 %v1667
  %v1856 = vunpack.c.l.b16 %v1668
  %v1857 = vunpack.c.h.b16 %v1668
  %v1858 = vunpack.c.l.b16 %v1669
  %v1859 = vunpack.c.h.b16 %v1669
  %v1860 = vunpack.c.l.b16 %v1670
  %v1861 = vunpack.c.h.b16 %v1670
  %v1862 = vunpack.c.l.b16 %v1671
  %v1863 = vunpack.c.h.b16 %v1671
  %v1864 = vunpack.c.l.b16 %v1672
  %v1865 = vunpack.c.h.b16 %v1672
  %v1866 = vunpack.c.l.b16 %v1673
  %v1867 = vunpack.c.h.b16 %v1673
  %v1868 = vunpack.c.l.b16 %v1674
  %v1869 = vunpack.c.h.b16 %v1674
  %v1870 = vunpack.c.l.b16 %v1675
  %v1871 = vunpack.c.h.b16 %v1675
  %v1872 = vunpack.c.l.b16 %v1676
  %v1873 = vunpack.c.h.b16 %v1676
  %v1874 = vunpack.c.l.b16 %v1677
  %v1875 = vunpack.c.h.b16 %v1677
  %v1876 = vpack.c.b16 %v1750, %v1748
  %v1877 = vpack.c.b16 %v1751, %v1749
  %v1878 = vpack.c.b16 %v1754, %v1752
  %v1879 = vpack.c.b16 %v1755, %v1753
  %v1880 = vpack.c.b16 %v1758, %v1756
  %v1881 = vpack.c.b16 %v1759, %v1757
  %v1882 = vpack.c.b16 %v1762, %v1760
  %v1883 = vpack.c.b16 %v1763, %v1761
  %v1884 = vpack.c.b16 %v1766, %v1764
  %v1885 = vpack.c.b16 %v1767, %v1765
  %v1886 = vpack.c.b16 %v1770, %v1768
  %v1887 = vpack.c.b16 %v1771, %v1769
  %v1888 = vpack.c.b16 %v1774, %v1772
  %v1889 = vpack.c.b16 %v1775, %v1773
  %v1890 = vpack.c.b16 %v1778, %v1776
  %v1891 = vpack.c.b16 %v1779, %v1777
  %v1892 = vpack.c.b16 %v1782, %v1780
  %v1893 = vpack.c.b16 %v1783, %v1781
  %v1894 = vpack.c.b16 %v1786, %v1784
  %v1895 = vpack.c.b16 %v1787, %v1785
  %v1896 = vpack.c.b16 %v1790, %v1788
  %v1897 = vpack.c.b16 %v1791, %v1789
  %v1898 = vpack.c.b16 %v1794, %v1792
  %v1899 = vpack.c.b16 %v1795, %v1793
  %v1900 = vpack.c.b16 %v1798, %v1796
  %v1901 = vpack.c.b16 %v1799, %v1797
  %v1902 = vpack.c.b16 %v1802, %v1800
  %v1903 = vpack.c.b16 %v1803, %v1801
  %v1904 = vpack.c.b16 %v1806, %v1804
  %v1905 = vpack.c.b16 %v1807, %v1805
  %v1906 = vpack.c.b16 %v1810, %v1808
  %v1907 = vpack.c.b16 %v1811, %v1809
  %v1908 = vpack.c.b16 %v1814, %v1812
  %v1909 = vpack.c.b16 %v1815, %v1813
  %v1910 = vpack.c.b16 %v1818, %v1816
  %v1911 = vpack.c.b16 %v1819, %v1817
  %v1912 = vpack.c.b16 %v1822, %v1820
  %v1913 = vpack.c.b16 %v1823, %v1821
  %v1914 = vpack.c.b16 %v1826, %v1824
  %v1915 = vpack.c.b16 %v1827, %v1825
  %v1916 = vpack.c.b16 %v1830, %v1828
  %v1917 = vpack.c.b16 %v1831, %v1829
  %v1918 = vpack.c.b16 %v1834, %v1832
  %v1919 = vpack.c.b16 %v1835, %v1833
  %v1920 = vpack.c.b16 %v1838, %v1836
  %v1921 = vpack.c.b16 %v1839, %v1837
  %v1922 = vpack.c.b16 %v1842, %v1840
  %v1923 = vpack.c.b16 %v1843, %v1841
  %v1924 = vpack.c.b16 %v1846, %v1844
  %v1925 = vpack.c.b16 %v1847, %v1845
  %v1926 = vpack.c.b16 %v1850, %v1848
  %v1927 = vpack.c.b16 %v1851, %v1849
  %v1928 = vpack.c.b16 %v1854, %v1852
  %v1929 = vpack.c.b16 %v1855, %v1853
  %v1930 = vpack.c.b16 %v1858, %v1856
  %v1931 = vpack.c.b16 %v1859, %v1857
  %v1932 = vpack.c.b16 %v1862, %v1860
  %v1933 = vpack.c.b16 %v1863, %v1861
  %v1934 = vpack.c.b16 %v1866, %v1864
  %v1935 = vpack.c.b16 %v1867, %v1865
  %v1936 = vpack.c.b16 %v1870, %v1868
  %v1937 = vpack.c.b16 %v1871, %v1869
  %v1938 = vpack.c.b16 %v1874, %v1872
  %v1939 = vpack.c.b16 %v1875, %v1873
  %2004 = vmatpush.bf16.msra.mxu0 %v1890
  %2005 = vmatpush.bf16.msra.mxu0 %v1888
  %2006 = vmatpush.bf16.msra.mxu0 %v1886
  %2007 = vmatpush.bf16.msra.mxu0 %v1884
  %2008 = vmatpush.bf16.msra.mxu0 %v1882
  %2009 = vmatpush.bf16.msra.mxu0 %v1880
  %2010 = vmatpush.bf16.msra.mxu0 %v1878
  %2011 = vmatpush.bf16.msra.mxu0 %v1876
  %2012 = vmatmul.bf16.gmra.mxu0 %v1610
  %v2013 = vpop.f32.mrf.mxu0
  %v2014 = vadd.f32 %v1680, %v2013
  %v2015 = vpop.f32.mrf.mxu0
  %2016 = vdwg.mxu0
  %2017 = vmatpush.bf16.msra.mxu0 %v1906
  %2018 = vmatpush.bf16.msra.mxu0 %v1904
  %2019 = vmatpush.bf16.msra.mxu0 %v1902
  %2020 = vmatpush.bf16.msra.mxu0 %v1900
  %2021 = vmatpush.bf16.msra.mxu0 %v1898
  %2022 = vmatpush.bf16.msra.mxu0 %v1896
  %2023 = vmatpush.bf16.msra.mxu0 %v1894
  %2024 = vmatpush.bf16.msra.mxu0 %v1892
  %2025 = vmatmul.bf16.gmra.mxu0 %v1611
  %v2026 = vpop.f32.mrf.mxu0
  %v2027 = vadd.f32 %v2014, %v2026
  %v2028 = vpop.f32.mrf.mxu0
  %2029 = vdwg.mxu0
  %2030 = vmatpush.bf16.msra.mxu0 %v1922
  %2031 = vmatpush.bf16.msra.mxu0 %v1920
  %2032 = vmatpush.bf16.msra.mxu0 %v1918
  %2033 = vmatpush.bf16.msra.mxu0 %v1916
  %2034 = vmatpush.bf16.msra.mxu0 %v1914
  %2035 = vmatpush.bf16.msra.mxu0 %v1912
  %2036 = vmatpush.bf16.msra.mxu0 %v1910
  %2037 = vmatpush.bf16.msra.mxu0 %v1908
  %2038 = vmatmul.bf16.gmra.mxu0 %v1612
  %v2039 = vpop.f32.mrf.mxu0
  %v2040 = vadd.f32 %v2027, %v2039
  %v2041 = vpop.f32.mrf.mxu0
  %2042 = vdwg.mxu0
  %2043 = vmatpush.bf16.msra.mxu0 %v1938
  %2044 = vmatpush.bf16.msra.mxu0 %v1936
  %2045 = vmatpush.bf16.msra.mxu0 %v1934
  %2046 = vmatpush.bf16.msra.mxu0 %v1932
  %2047 = vmatpush.bf16.msra.mxu0 %v1930
  %2048 = vmatpush.bf16.msra.mxu0 %v1928
  %2049 = vmatpush.bf16.msra.mxu0 %v1926
  %2050 = vmatpush.bf16.msra.mxu0 %v1924
  %2051 = vmatmul.bf16.gmra.mxu0 %v1613
  %v2052 = vpop.f32.mrf.mxu0
  %v2053 = vadd.f32 %v2040, %v2052
  %v2054 = vpop.f32.mrf.mxu0
  %2055 = vdwg.mxu0
  %2056 = vmatpush.bf16.msra.mxu0 %v1891
  %2057 = vmatpush.bf16.msra.mxu0 %v1889
  %2058 = vmatpush.bf16.msra.mxu0 %v1887
  %2059 = vmatpush.bf16.msra.mxu0 %v1885
  %2060 = vmatpush.bf16.msra.mxu0 %v1883
  %2061 = vmatpush.bf16.msra.mxu0 %v1881
  %2062 = vmatpush.bf16.msra.mxu0 %v1879
  %2063 = vmatpush.bf16.msra.mxu0 %v1877
  %2064 = vmatmul.bf16.gmra.mxu0 %v1610
  %v2065 = vpop.f32.mrf.mxu0
  %v2066 = vadd.f32 %v1681, %v2065
  %v2067 = vpop.f32.mrf.mxu0
  %2068 = vdwg.mxu0
  %2069 = vmatpush.bf16.msra.mxu0 %v1907
  %2070 = vmatpush.bf16.msra.mxu0 %v1905
  %2071 = vmatpush.bf16.msra.mxu0 %v1903
  %2072 = vmatpush.bf16.msra.mxu0 %v1901
  %2073 = vmatpush.bf16.msra.mxu0 %v1899
  %2074 = vmatpush.bf16.msra.mxu0 %v1897
  %2075 = vmatpush.bf16.msra.mxu0 %v1895
  %2076 = vmatpush.bf16.msra.mxu0 %v1893
  %2077 = vmatmul.bf16.gmra.mxu0 %v1611
  %v2078 = vpop.f32.mrf.mxu0
  %v2079 = vadd.f32 %v2066, %v2078
  %v2080 = vpop.f32.mrf.mxu0
  %2081 = vdwg.mxu0
  %2082 = vmatpush.bf16.msra.mxu0 %v1923
  %2083 = vmatpush.bf16.msra.mxu0 %v1921
  %2084 = vmatpush.bf16.msra.mxu0 %v1919
  %2085 = vmatpush.bf16.msra.mxu0 %v1917
  %2086 = vmatpush.bf16.msra.mxu0 %v1915
  %2087 = vmatpush.bf16.msra.mxu0 %v1913
  %2088 = vmatpush.bf16.msra.mxu0 %v1911
  %2089 = vmatpush.bf16.msra.mxu0 %v1909
  %2090 = vmatmul.bf16.gmra.mxu0 %v1612
  %v2091 = vpop.f32.mrf.mxu0
  %v2092 = vadd.f32 %v2079, %v2091
  %v2093 = vpop.f32.mrf.mxu0
  %2094 = vdwg.mxu0
  %2095 = vmatpush.bf16.msra.mxu0 %v1939
  %2096 = vmatpush.bf16.msra.mxu0 %v1937
  %2097 = vmatpush.bf16.msra.mxu0 %v1935
  %2098 = vmatpush.bf16.msra.mxu0 %v1933
  %2099 = vmatpush.bf16.msra.mxu0 %v1931
  %2100 = vmatpush.bf16.msra.mxu0 %v1929
  %2101 = vmatpush.bf16.msra.mxu0 %v1927
  %2102 = vmatpush.bf16.msra.mxu0 %v1925
  %2103 = vmatmul.bf16.gmra.mxu0 %v1613
  %v2104 = vpop.f32.mrf.mxu0
  %v2105 = vadd.f32 %v2092, %v2104
  %v2106 = vpop.f32.mrf.mxu0
  %2107 = vdwg.mxu0
  %v2108 = vmul.f32 %v2105, 0.5
  %v2109 = vmul.f32 %v2108, 1.442695
  %v2110 = vpow.pop %v2109
  %v2111 = vld [vmem:[%s1] sm:$0xff]
  %v2112 = vmul.f32 %v2111, %v2110
  %v2113 = vadd.f32 %v2053, %v2112
  %v2114 = vpack.c.bf16 %v2113, %v2113
  %v2115 = vld [vmem:[%s6] sm:$0xff]
  %v2116 = vld [vmem:[%s6 + $0x8] sm:$0xff]
  %v2117 = vld [vmem:[%s6 + $0x10] sm:$0xff]
  %v2118 = vld [vmem:[%s6 + $0x18] sm:$0xff]
  %v2119 = vld [vmem:[%s6 + $0x20] sm:$0xff]
  %v2120 = vld [vmem:[%s6 + $0x28] sm:$0xff]
  %v2121 = vld [vmem:[%s6 + $0x30] sm:$0xff]
  %v2122 = vld [vmem:[%s6 + $0x38] sm:$0xff]
  %v2123 = vld [vmem:[%s6 + $0x40] sm:$0xff]
  %v2124 = vld [vmem:[%s6 + $0x48] sm:$0xff]
  %v2125 = vld [vmem:[%s6 + $0x50] sm:$0xff]
  %v2126 = vld [vmem:[%s6 + $0x58] sm:$0xff]
  %v2127 = vld [vmem:[%s6 + $0x60] sm:$0xff]
  %v2128 = vld [vmem:[%s6 + $0x68] sm:$0xff]
  %v2129 = vld [vmem:[%s6 + $0x70] sm:$0xff]
  %v2130 = vld [vmem:[%s6 + $0x78] sm:$0xff]
  %v2131 = vld [vmem:[%s6 + $0x80] sm:$0xff]
  %v2132 = vld [vmem:[%s6 + $0x88] sm:$0xff]
  %v2133 = vld [vmem:[%s6 + $0x90] sm:$0xff]
  %v2134 = vld [vmem:[%s6 + $0x98] sm:$0xff]
  %v2135 = vld [vmem:[%s6 + $0xa0] sm:$0xff]
  %v2136 = vld [vmem:[%s6 + $0xa8] sm:$0xff]
  %v2137 = vld [vmem:[%s6 + $0xb0] sm:$0xff]
  %v2138 = vld [vmem:[%s6 + $0xb8] sm:$0xff]
  %v2139 = vld [vmem:[%s6 + $0xc0] sm:$0xff]
  %v2140 = vld [vmem:[%s6 + $0xc8] sm:$0xff]
  %v2141 = vld [vmem:[%s6 + $0xd0] sm:$0xff]
  %v2142 = vld [vmem:[%s6 + $0xd8] sm:$0xff]
  %v2143 = vld [vmem:[%s6 + $0xe0] sm:$0xff]
  %v2144 = vld [vmem:[%s6 + $0xe8] sm:$0xff]
  %v2145 = vld [vmem:[%s6 + $0xf0] sm:$0xff]
  %v2146 = vld [vmem:[%s6 + $0xf8] sm:$0xff]
  %v2147 = vld [vmem:[%s7] sm:$0xf]
  %v2149 = vperm.slane %v2147, 0
  %v2150 = vperm.slane %v2147, 1
  %v2151 = vperm.slane %v2147, 2
  %v2152 = vperm.slane %v2147, 3
  %v2189 = vunpack.c.l.b16 %v2115
  %v2190 = vunpack.c.h.b16 %v2115
  %v2191 = vunpack.c.l.b16 %v2116
  %v2192 = vunpack.c.h.b16 %v2116
  %v2193 = vunpack.c.l.b16 %v2117
  %v2194 = vunpack.c.h.b16 %v2117
  %v2195 = vunpack.c.l.b16 %v2118
  %v2196 = vunpack.c.h.b16 %v2118
  %v2197 = vunpack.c.l.b16 %v2119
  %v2198 = vunpack.c.h.b16 %v2119
  %v2199 = vunpack.c.l.b16 %v2120
  %v2200 = vunpack.c.h.b16 %v2120
  %v2201 = vunpack.c.l.b16 %v2121
  %v2202 = vunpack.c.h.b16 %v2121
  %v2203 = vunpack.c.l.b16 %v2122
  %v2204 = vunpack.c.h.b16 %v2122
  %v2205 = vunpack.c.l.b16 %v2123
  %v2206 = vunpack.c.h.b16 %v2123
  %v2207 = vunpack.c.l.b16 %v2124
  %v2208 = vunpack.c.h.b16 %v2124
  %v2209 = vunpack.c.l.b16 %v2125
  %v2210 = vunpack.c.h.b16 %v2125
  %v2211 = vunpack.c.l.b16 %v2126
  %v2212 = vunpack.c.h.b16 %v2126
  %v2213 = vunpack.c.l.b16 %v2127
  %v2214 = vunpack.c.h.b16 %v2127
  %v2215 = vunpack.c.l.b16 %v2128
  %v2216 = vunpack.c.h.b16 %v2128
  %v2217 = vunpack.c.l.b16 %v2129
  %v2218 = vunpack.c.h.b16 %v2129
  %v2219 = vunpack.c.l.b16 %v2130
  %v2220 = vunpack.c.h.b16 %v2130
  %v2221 = vunpack.c.l.b16 %v2131
  %v2222 = vunpack.c.h.b16 %v2131
  %v2223 = vunpack.c.l.b16 %v2132
  %v2224 = vunpack.c.h.b16 %v2132
  %v2225 = vunpack.c.l.b16 %v2133
  %v2226 = vunpack.c.h.b16 %v2133
  %v2227 = vunpack.c.l.b16 %v2134
  %v2228 = vunpack.c.h.b16 %v2134
  %v2229 = vunpack.c.l.b16 %v2135
  %v2230 = vunpack.c.h.b16 %v2135
  %v2231 = vunpack.c.l.b16 %v2136
  %v2232 = vunpack.c.h.b16 %v2136
  %v2233 = vunpack.c.l.b16 %v2137
  %v2234 = vunpack.c.h.b16 %v2137
  %v2235 = vunpack.c.l.b16 %v2138
  %v2236 = vunpack.c.h.b16 %v2138
  %v2237 = vunpack.c.l.b16 %v2139
  %v2238 = vunpack.c.h.b16 %v2139
  %v2239 = vunpack.c.l.b16 %v2140
  %v2240 = vunpack.c.h.b16 %v2140
  %v2241 = vunpack.c.l.b16 %v2141
  %v2242 = vunpack.c.h.b16 %v2141
  %v2243 = vunpack.c.l.b16 %v2142
  %v2244 = vunpack.c.h.b16 %v2142
  %v2245 = vunpack.c.l.b16 %v2143
  %v2246 = vunpack.c.h.b16 %v2143
  %v2247 = vunpack.c.l.b16 %v2144
  %v2248 = vunpack.c.h.b16 %v2144
  %v2249 = vunpack.c.l.b16 %v2145
  %v2250 = vunpack.c.h.b16 %v2145
  %v2251 = vunpack.c.l.b16 %v2146
  %v2252 = vunpack.c.h.b16 %v2146
  %v2253 = vpack.c.b16 %v2193, %v2189
  %v2254 = vpack.c.b16 %v2194, %v2190
  %v2255 = vpack.c.b16 %v2195, %v2191
  %v2256 = vpack.c.b16 %v2196, %v2192
  %v2257 = vpack.c.b16 %v2201, %v2197
  %v2258 = vpack.c.b16 %v2202, %v2198
  %v2259 = vpack.c.b16 %v2203, %v2199
  %v2260 = vpack.c.b16 %v2204, %v2200
  %v2261 = vpack.c.b16 %v2209, %v2205
  %v2262 = vpack.c.b16 %v2210, %v2206
  %v2263 = vpack.c.b16 %v2211, %v2207
  %v2264 = vpack.c.b16 %v2212, %v2208
  %v2265 = vpack.c.b16 %v2217, %v2213
  %v2266 = vpack.c.b16 %v2218, %v2214
  %v2267 = vpack.c.b16 %v2219, %v2215
  %v2268 = vpack.c.b16 %v2220, %v2216
  %v2269 = vpack.c.b16 %v2225, %v2221
  %v2270 = vpack.c.b16 %v2226, %v2222
  %v2271 = vpack.c.b16 %v2227, %v2223
  %v2272 = vpack.c.b16 %v2228, %v2224
  %v2273 = vpack.c.b16 %v2233, %v2229
  %v2274 = vpack.c.b16 %v2234, %v2230
  %v2275 = vpack.c.b16 %v2235, %v2231
  %v2276 = vpack.c.b16 %v2236, %v2232
  %v2277 = vpack.c.b16 %v2241, %v2237
  %v2278 = vpack.c.b16 %v2242, %v2238
  %v2279 = vpack.c.b16 %v2243, %v2239
  %v2280 = vpack.c.b16 %v2244, %v2240
  %v2281 = vpack.c.b16 %v2249, %v2245
  %v2282 = vpack.c.b16 %v2250, %v2246
  %v2283 = vpack.c.b16 %v2251, %v2247
  %v2284 = vpack.c.b16 %v2252, %v2248
  %2317 = vmatpush.bf16.msra.mxu0 %v2281
  %2318 = vmatpush.bf16.msra.mxu0 %v2277
  %2319 = vmatpush.bf16.msra.mxu0 %v2273
  %2320 = vmatpush.bf16.msra.mxu0 %v2269
  %2321 = vmatpush.bf16.msra.mxu0 %v2265
  %2322 = vmatpush.bf16.msra.mxu0 %v2261
  %2323 = vmatpush.bf16.msra.mxu0 %v2257
  %2324 = vmatpush.bf16.msra.mxu0 %v2253
  %2325 = vmatmul.bf16.gmra.mxu0 %v2114
  %v2326 = vpop.f32.mrf.mxu0
  %v2327 = vadd.f32 %v2149, %v2326
  %v2328 = vpop.f32.mrf.mxu0
  %2329 = vdwg.mxu0
  %2330 = vmatpush.bf16.msra.mxu0 %v2282
  %2331 = vmatpush.bf16.msra.mxu0 %v2278
  %2332 = vmatpush.bf16.msra.mxu0 %v2274
  %2333 = vmatpush.bf16.msra.mxu0 %v2270
  %2334 = vmatpush.bf16.msra.mxu0 %v2266
  %2335 = vmatpush.bf16.msra.mxu0 %v2262
  %2336 = vmatpush.bf16.msra.mxu0 %v2258
  %2337 = vmatpush.bf16.msra.mxu0 %v2254
  %2338 = vmatmul.bf16.gmra.mxu0 %v2114
  %v2339 = vpop.f32.mrf.mxu0
  %v2340 = vadd.f32 %v2150, %v2339
  %v2341 = vpop.f32.mrf.mxu0
  %2342 = vdwg.mxu0
  %2343 = vmatpush.bf16.msra.mxu0 %v2283
  %2344 = vmatpush.bf16.msra.mxu0 %v2279
  %2345 = vmatpush.bf16.msra.mxu0 %v2275
  %2346 = vmatpush.bf16.msra.mxu0 %v2271
  %2347 = vmatpush.bf16.msra.mxu0 %v2267
  %2348 = vmatpush.bf16.msra.mxu0 %v2263
  %2349 = vmatpush.bf16.msra.mxu0 %v2259
  %2350 = vmatpush.bf16.msra.mxu0 %v2255
  %2351 = vmatmul.bf16.gmra.mxu0 %v2114
  %v2352 = vpop.f32.mrf.mxu0
  %v2353 = vadd.f32 %v2151, %v2352
  %v2354 = vpop.f32.mrf.mxu0
  %2355 = vdwg.mxu0
  %2356 = vmatpush.bf16.msra.mxu0 %v2284
  %2357 = vmatpush.bf16.msra.mxu0 %v2280
  %2358 = vmatpush.bf16.msra.mxu0 %v2276
  %2359 = vmatpush.bf16.msra.mxu0 %v2272
  %2360 = vmatpush.bf16.msra.mxu0 %v2268
  %2361 = vmatpush.bf16.msra.mxu0 %v2264
  %2362 = vmatpush.bf16.msra.mxu0 %v2260
  %2363 = vmatpush.bf16.msra.mxu0 %v2256
  %2364 = vmatmul.bf16.gmra.mxu0 %v2114
  %v2365 = vpop.f32.mrf.mxu0
  %v2366 = vadd.f32 %v2152, %v2365
  %v2367 = vpop.f32.mrf.mxu0
  %2368 = vdwg.mxu0
  %v2369 = vmax.f32 %v2327, 0.0
  %v2370 = vmax.f32 %v2340, 0.0
  %v2371 = vmax.f32 %v2353, 0.0
  %v2372 = vmax.f32 %v2366, 0.0
  %v2373 = vpack.c.bf16 %v2369, %v2369
  %v2374 = vpack.c.bf16 %v2370, %v2370
  %v2375 = vpack.c.bf16 %v2371, %v2371
  %v2376 = vpack.c.bf16 %v2372, %v2372
  %v2377 = vld [vmem:[%s8] sm:$0xff]
  %v2378 = vld [vmem:[%s8 + $0x8] sm:$0xff]
  %v2379 = vld [vmem:[%s8 + $0x10] sm:$0xff]
  %v2380 = vld [vmem:[%s8 + $0x18] sm:$0xf]
  %v2381 = vld [vmem:[%s8 + $0x1c] sm:$0xff]
  %v2382 = vld [vmem:[%s8 + $0x24] sm:$0xff]
  %v2383 = vld [vmem:[%s8 + $0x2c] sm:$0xff]
  %v2384 = vld [vmem:[%s8 + $0x34] sm:$0xf]
  %v2385 = vld [vmem:[%s8 + $0x38] sm:$0xff]
  %v2386 = vld [vmem:[%s8 + $0x40] sm:$0xff]
  %v2387 = vld [vmem:[%s8 + $0x48] sm:$0xff]
  %v2388 = vld [vmem:[%s8 + $0x50] sm:$0xf]
  %v2389 = vld [vmem:[%s8 + $0x54] sm:$0xff]
  %v2390 = vld [vmem:[%s8 + $0x5c] sm:$0xff]
  %v2391 = vld [vmem:[%s8 + $0x64] sm:$0xff]
  %v2392 = vld [vmem:[%s8 + $0x6c] sm:$0xf]
  %v2393 = vld [vmem:[%s8 + $0x70] sm:$0xff]
  %v2394 = vld [vmem:[%s8 + $0x78] sm:$0xff]
  %v2395 = vld [vmem:[%s8 + $0x80] sm:$0xff]
  %v2396 = vld [vmem:[%s8 + $0x88] sm:$0xf]
  %v2397 = vld [vmem:[%s8 + $0x8c] sm:$0xff]
  %v2398 = vld [vmem:[%s8 + $0x94] sm:$0xff]
  %v2399 = vld [vmem:[%s8 + $0x9c] sm:$0xff]
  %v2400 = vld [vmem:[%s8 + $0xa4] sm:$0xf]
  %v2401 = vld [vmem:[%s8 + $0xa8] sm:$0xff]
  %v2402 = vld [vmem:[%s8 + $0xb0] sm:$0xff]
  %v2403 = vld [vmem:[%s8 + $0xb8] sm:$0xff]
  %v2404 = vld [vmem:[%s8 + $0xc0] sm:$0xf]
  %v2405 = vld [vmem:[%s8 + $0xc4] sm:$0xff]
  %v2406 = vld [vmem:[%s8 + $0xcc] sm:$0xff]
  %v2407 = vld [vmem:[%s8 + $0xd4] sm:$0xff]
  %v2408 = vld [vmem:[%s8 + $0xdc] sm:$0xf]
  %v2409 = vld [vmem:[%s8 + $0xe0] sm:$0xff]
  %v2410 = vld [vmem:[%s8 + $0xe8] sm:$0xff]
  %v2411 = vld [vmem:[%s8 + $0xf0] sm:$0xff]
  %v2412 = vld [vmem:[%s8 + $0xf8] sm:$0xf]
  %v2413 = vld [vmem:[%s8 + $0xfc] sm:$0xff]
  %v2414 = vld [vmem:[%s8 + $0x104] sm:$0xff]
  %v2415 = vld [vmem:[%s8 + $0x10c] sm:$0xff]
  %v2416 = vld [vmem:[%s8 + $0x114] sm:$0xf]
  %v2417 = vld [vmem:[%s8 + $0x118] sm:$0xff]
  %v2418 = vld [vmem:[%s8 + $0x120] sm:$0xff]
  %v2419 = vld [vmem:[%s8 + $0x128] sm:$0xff]
  %v2420 = vld [vmem:[%s8 + $0x130] sm:$0xf]
  %v2421 = vld [vmem:[%s8 + $0x134] sm:$0xff]
  %v2422 = vld [vmem:[%s8 + $0x13c] sm:$0xff]
  %v2423 = vld [vmem:[%s8 + $0x144] sm:$0xff]
  %v2424 = vld [vmem:[%s8 + $0x14c] sm:$0xf]
  %v2425 = vld [vmem:[%s8 + $0x150] sm:$0xff]
  %v2426 = vld [vmem:[%s8 + $0x158] sm:$0xff]
  %v2427 = vld [vmem:[%s8 + $0x160] sm:$0xff]
  %v2428 = vld [vmem:[%s8 + $0x168] sm:$0xf]
  %v2429 = vld [vmem:[%s8 + $0x16c] sm:$0xff]
  %v2430 = vld [vmem:[%s8 + $0x174] sm:$0xff]
  %v2431 = vld [vmem:[%s8 + $0x17c] sm:$0xff]
  %v2432 = vld [vmem:[%s8 + $0x184] sm:$0xf]
  %v2433 = vld [vmem:[%s8 + $0x188] sm:$0xff]
  %v2434 = vld [vmem:[%s8 + $0x190] sm:$0xff]
  %v2435 = vld [vmem:[%s8 + $0x198] sm:$0xff]
  %v2436 = vld [vmem:[%s8 + $0x1a0] sm:$0xf]
  %v2437 = vld [vmem:[%s8 + $0x1a4] sm:$0xff]
  %v2438 = vld [vmem:[%s8 + $0x1ac] sm:$0xff]
  %v2439 = vld [vmem:[%s8 + $0x1b4] sm:$0xff]
  %v2440 = vld [vmem:[%s8 + $0x1bc] sm:$0xf]
  %v2441 = vld [vmem:[%s8 + $0x1c0] sm:$0xff]
  %v2442 = vld [vmem:[%s8 + $0x1c8] sm:$0xff]
  %v2443 = vld [vmem:[%s8 + $0x1d0] sm:$0xff]
  %v2444 = vld [vmem:[%s8 + $0x1d8] sm:$0xf]
  %v2445 = vld [vmem:[%s8 + $0x1dc] sm:$0xff]
  %v2446 = vld [vmem:[%s8 + $0x1e4] sm:$0xff]
  %v2447 = vld [vmem:[%s8 + $0x1ec] sm:$0xff]
  %v2448 = vld [vmem:[%s8 + $0x1f4] sm:$0xf]
  %v2449 = vld [vmem:[%s8 + $0x1f8] sm:$0xff]
  %v2450 = vld [vmem:[%s8 + $0x200] sm:$0xff]
  %v2451 = vld [vmem:[%s8 + $0x208] sm:$0xff]
  %v2452 = vld [vmem:[%s8 + $0x210] sm:$0xf]
  %v2453 = vld [vmem:[%s8 + $0x214] sm:$0xff]
  %v2454 = vld [vmem:[%s8 + $0x21c] sm:$0xff]
  %v2455 = vld [vmem:[%s8 + $0x224] sm:$0xff]
  %v2456 = vld [vmem:[%s8 + $0x22c] sm:$0xf]
  %v2457 = vld [vmem:[%s8 + $0x230] sm:$0xff]
  %v2458 = vld [vmem:[%s8 + $0x238] sm:$0xff]
  %v2459 = vld [vmem:[%s8 + $0x240] sm:$0xff]
  %v2460 = vld [vmem:[%s8 + $0x248] sm:$0xf]
  %v2461 = vld [vmem:[%s8 + $0x24c] sm:$0xff]
  %v2462 = vld [vmem:[%s8 + $0x254] sm:$0xff]
  %v2463 = vld [vmem:[%s8 + $0x25c] sm:$0xff]
  %v2464 = vld [vmem:[%s8 + $0x264] sm:$0xf]
  %v2465 = vld [vmem:[%s8 + $0x268] sm:$0xff]
  %v2466 = vld [vmem:[%s8 + $0x270] sm:$0xff]
  %v2467 = vld [vmem:[%s8 + $0x278] sm:$0xff]
  %v2468 = vld [vmem:[%s8 + $0x280] sm:$0xf]
  %v2469 = vld [vmem:[%s8 + $0x284] sm:$0xff]
  %v2470 = vld [vmem:[%s8 + $0x28c] sm:$0xff]
  %v2471 = vld [vmem:[%s8 + $0x294] sm:$0xff]
  %v2472 = vld [vmem:[%s8 + $0x29c] sm:$0xf]
  %v2473 = vld [vmem:[%s8 + $0x2a0] sm:$0xff]
  %v2474 = vld [vmem:[%s8 + $0x2a8] sm:$0xff]
  %v2475 = vld [vmem:[%s8 + $0x2b0] sm:$0xff]
  %v2476 = vld [vmem:[%s8 + $0x2b8] sm:$0xf]
  %v2477 = vld [vmem:[%s8 + $0x2bc] sm:$0xff]
  %v2478 = vld [vmem:[%s8 + $0x2c4] sm:$0xff]
  %v2479 = vld [vmem:[%s8 + $0x2cc] sm:$0xff]
  %v2480 = vld [vmem:[%s8 + $0x2d4] sm:$0xf]
  %v2481 = vld [vmem:[%s8 + $0x2d8] sm:$0xff]
  %v2482 = vld [vmem:[%s8 + $0x2e0] sm:$0xff]
  %v2483 = vld [vmem:[%s8 + $0x2e8] sm:$0xff]
  %v2484 = vld [vmem:[%s8 + $0x2f0] sm:$0xf]
  %v2485 = vld [vmem:[%s8 + $0x2f4] sm:$0xff]
  %v2486 = vld [vmem:[%s8 + $0x2fc] sm:$0xff]
  %v2487 = vld [vmem:[%s8 + $0x304] sm:$0xff]
  %v2488 = vld [vmem:[%s8 + $0x30c] sm:$0xf]
  %v2489 = vld [vmem:[%s8 + $0x310] sm:$0xff]
  %v2490 = vld [vmem:[%s8 + $0x318] sm:$0xff]
  %v2491 = vld [vmem:[%s8 + $0x320] sm:$0xff]
  %v2492 = vld [vmem:[%s8 + $0x328] sm:$0xf]
  %v2493 = vld [vmem:[%s8 + $0x32c] sm:$0xff]
  %v2494 = vld [vmem:[%s8 + $0x334] sm:$0xff]
  %v2495 = vld [vmem:[%s8 + $0x33c] sm:$0xff]
  %v2496 = vld [vmem:[%s8 + $0x344] sm:$0xf]
  %v2497 = vld [vmem:[%s8 + $0x348] sm:$0xff]
  %v2498 = vld [vmem:[%s8 + $0x350] sm:$0xff]
  %v2499 = vld [vmem:[%s8 + $0x358] sm:$0xff]
  %v2500 = vld [vmem:[%s8 + $0x360] sm:$0xf]
  %v2501 = vld [vmem:[%s8 + $0x364] sm:$0xff]
  %v2502 = vld [vmem:[%s8 + $0x36c] sm:$0xff]
  %v2503 = vld [vmem:[%s8 + $0x374] sm:$0xff]
  %v2504 = vld [vmem:[%s8 + $0x37c] sm:$0xf]
  %v2505 = vld [vmem:[%s8 + $0x380] sm:$0xff]
  %v2506 = vld [vmem:[%s8 + $0x388] sm:$0xff]
  %v2507 = vld [vmem:[%s8 + $0x390] sm:$0xff]
  %v2508 = vld [vmem:[%s8 + $0x398] sm:$0xf]
  %v2509 = vld [vmem:[%s8 + $0x39c] sm:$0xff]
  %v2510 = vld [vmem:[%s8 + $0x3a4] sm:$0xff]
  %v2511 = vld [vmem:[%s8 + $0x3ac] sm:$0xff]
  %v2512 = vld [vmem:[%s8 + $0x3b4] sm:$0xf]
  %v2513 = vld [vmem:[%s8 + $0x3b8] sm:$0xff]
  %v2514 = vld [vmem:[%s8 + $0x3c0] sm:$0xff]
  %v2515 = vld [vmem:[%s8 + $0x3c8] sm:$0xff]
  %v2516 = vld [vmem:[%s8 + $0x3d0] sm:$0xf]
  %v2517 = vld [vmem:[%s8 + $0x3d4] sm:$0xff]
  %v2518 = vld [vmem:[%s8 + $0x3dc] sm:$0xff]
  %v2519 = vld [vmem:[%s8 + $0x3e4] sm:$0xff]
  %v2520 = vld [vmem:[%s8 + $0x3ec] sm:$0xf]
  %v2521 = vld [vmem:[%s8 + $0x3f0] sm:$0xff]
  %v2522 = vld [vmem:[%s8 + $0x3f8] sm:$0xff]
  %v2523 = vld [vmem:[%s8 + $0x400] sm:$0xff]
  %v2524 = vld [vmem:[%s8 + $0x408] sm:$0xf]
  %v2525 = vld [vmem:[%s8 + $0x40c] sm:$0xff]
  %v2526 = vld [vmem:[%s8 + $0x414] sm:$0xff]
  %v2527 = vld [vmem:[%s8 + $0x41c] sm:$0xff]
  %v2528 = vld [vmem:[%s8 + $0x424] sm:$0xf]
  %v2529 = vld [vmem:[%s8 + $0x428] sm:$0xff]
  %v2530 = vld [vmem:[%s8 + $0x430] sm:$0xff]
  %v2531 = vld [vmem:[%s8 + $0x438] sm:$0xff]
  %v2532 = vld [vmem:[%s8 + $0x440] sm:$0xf]
  %v2533 = vld [vmem:[%s8 + $0x444] sm:$0xff]
  %v2534 = vld [vmem:[%s8 + $0x44c] sm:$0xff]
  %v2535 = vld [vmem:[%s8 + $0x454] sm:$0xff]
  %v2536 = vld [vmem:[%s8 + $0x45c] sm:$0xf]
  %v2537 = vld [vmem:[%s8 + $0x460] sm:$0xff]
  %v2538 = vld [vmem:[%s8 + $0x468] sm:$0xff]
  %v2539 = vld [vmem:[%s8 + $0x470] sm:$0xff]
  %v2540 = vld [vmem:[%s8 + $0x478] sm:$0xf]
  %v2541 = vld [vmem:[%s8 + $0x47c] sm:$0xff]
  %v2542 = vld [vmem:[%s8 + $0x484] sm:$0xff]
  %v2543 = vld [vmem:[%s8 + $0x48c] sm:$0xff]
  %v2544 = vld [vmem:[%s8 + $0x494] sm:$0xf]
  %v2545 = vld [vmem:[%s8 + $0x498] sm:$0xff]
  %v2546 = vld [vmem:[%s8 + $0x4a0] sm:$0xff]
  %v2547 = vld [vmem:[%s8 + $0x4a8] sm:$0xff]
  %v2548 = vld [vmem:[%s8 + $0x4b0] sm:$0xf]
  %v2549 = vld [vmem:[%s8 + $0x4b4] sm:$0xff]
  %v2550 = vld [vmem:[%s8 + $0x4bc] sm:$0xff]
  %v2551 = vld [vmem:[%s8 + $0x4c4] sm:$0xff]
  %v2552 = vld [vmem:[%s8 + $0x4cc] sm:$0xf]
  %v2553 = vld [vmem:[%s8 + $0x4d0] sm:$0xff]
  %v2554 = vld [vmem:[%s8 + $0x4d8] sm:$0xff]
  %v2555 = vld [vmem:[%s8 + $0x4e0] sm:$0xff]
  %v2556 = vld [vmem:[%s8 + $0x4e8] sm:$0xf]
  %v2557 = vld [vmem:[%s8 + $0x4ec] sm:$0xff]
  %v2558 = vld [vmem:[%s8 + $0x4f4] sm:$0xff]
  %v2559 = vld [vmem:[%s8 + $0x4fc] sm:$0xff]
  %v2560 = vld [vmem:[%s8 + $0x504] sm:$0xf]
  %v2561 = vld [vmem:[%s8 + $0x508] sm:$0xff]
  %v2562 = vld [vmem:[%s8 + $0x510] sm:$0xff]
  %v2563 = vld [vmem:[%s8 + $0x518] sm:$0xff]
  %v2564 = vld [vmem:[%s8 + $0x520] sm:$0xf]
  %v2565 = vld [vmem:[%s8 + $0x524] sm:$0xff]
  %v2566 = vld [vmem:[%s8 + $0x52c] sm:$0xff]
  %v2567 = vld [vmem:[%s8 + $0x534] sm:$0xff]
  %v2568 = vld [vmem:[%s8 + $0x53c] sm:$0xf]
  %v2569 = vld [vmem:[%s8 + $0x540] sm:$0xff]
  %v2570 = vld [vmem:[%s8 + $0x548] sm:$0xff]
  %v2571 = vld [vmem:[%s8 + $0x550] sm:$0xff]
  %v2572 = vld [vmem:[%s8 + $0x558] sm:$0xf]
  %v2573 = vld [vmem:[%s8 + $0x55c] sm:$0xff]
  %v2574 = vld [vmem:[%s8 + $0x564] sm:$0xff]
  %v2575 = vld [vmem:[%s8 + $0x56c] sm:$0xff]
  %v2576 = vld [vmem:[%s8 + $0x574] sm:$0xf]
  %v2577 = vld [vmem:[%s8 + $0x578] sm:$0xff]
  %v2578 = vld [vmem:[%s8 + $0x580] sm:$0xff]
  %v2579 = vld [vmem:[%s8 + $0x588] sm:$0xff]
  %v2580 = vld [vmem:[%s8 + $0x590] sm:$0xf]
  %v2581 = vld [vmem:[%s8 + $0x594] sm:$0xff]
  %v2582 = vld [vmem:[%s8 + $0x59c] sm:$0xff]
  %v2583 = vld [vmem:[%s8 + $0x5a4] sm:$0xff]
  %v2584 = vld [vmem:[%s8 + $0x5ac] sm:$0xf]
  %v2585 = vld [vmem:[%s8 + $0x5b0] sm:$0xff]
  %v2586 = vld [vmem:[%s8 + $0x5b8] sm:$0xff]
  %v2587 = vld [vmem:[%s8 + $0x5c0] sm:$0xff]
  %v2588 = vld [vmem:[%s8 + $0x5c8] sm:$0xf]
  %v2589 = vld [vmem:[%s8 + $0x5cc] sm:$0xff]
  %v2590 = vld [vmem:[%s8 + $0x5d4] sm:$0xff]
  %v2591 = vld [vmem:[%s8 + $0x5dc] sm:$0xff]
  %v2592 = vld [vmem:[%s8 + $0x5e4] sm:$0xf]
  %v2593 = vld [vmem:[%s8 + $0x5e8] sm:$0xff]
  %v2594 = vld [vmem:[%s8 + $0x5f0] sm:$0xff]
  %v2595 = vld [vmem:[%s8 + $0x5f8] sm:$0xff]
  %v2596 = vld [vmem:[%s8 + $0x600] sm:$0xf]
  %v2597 = vld [vmem:[%s8 + $0x604] sm:$0xff]
  %v2598 = vld [vmem:[%s8 + $0x60c] sm:$0xff]
  %v2599 = vld [vmem:[%s8 + $0x614] sm:$0xff]
  %v2600 = vld [vmem:[%s8 + $0x61c] sm:$0xf]
  %v2601 = vld [vmem:[%s8 + $0x620] sm:$0xff]
  %v2602 = vld [vmem:[%s8 + $0x628] sm:$0xff]
  %v2603 = vld [vmem:[%s8 + $0x630] sm:$0xff]
  %v2604 = vld [vmem:[%s8 + $0x638] sm:$0xf]
  %v2605 = vld [vmem:[%s8 + $0x63c] sm:$0xff]
  %v2606 = vld [vmem:[%s8 + $0x644] sm:$0xff]
  %v2607 = vld [vmem:[%s8 + $0x64c] sm:$0xff]
  %v2608 = vld [vmem:[%s8 + $0x654] sm:$0xf]
  %v2609 = vld [vmem:[%s8 + $0x658] sm:$0xff]
  %v2610 = vld [vmem:[%s8 + $0x660] sm:$0xff]
  %v2611 = vld [vmem:[%s8 + $0x668] sm:$0xff]
  %v2612 = vld [vmem:[%s8 + $0x670] sm:$0xf]
  %v2613 = vld [vmem:[%s8 + $0x674] sm:$0xff]
  %v2614 = vld [vmem:[%s8 + $0x67c] sm:$0xff]
  %v2615 = vld [vmem:[%s8 + $0x684] sm:$0xff]
  %v2616 = vld [vmem:[%s8 + $0x68c] sm:$0xf]
  %v2617 = vld [vmem:[%s8 + $0x690] sm:$0xff]
  %v2618 = vld [vmem:[%s8 + $0x698] sm:$0xff]
  %v2619 = vld [vmem:[%s8 + $0x6a0] sm:$0xff]
  %v2620 = vld [vmem:[%s8 + $0x6a8] sm:$0xf]
  %v2621 = vld [vmem:[%s8 + $0x6ac] sm:$0xff]
  %v2622 = vld [vmem:[%s8 + $0x6b4] sm:$0xff]
  %v2623 = vld [vmem:[%s8 + $0x6bc] sm:$0xff]
  %v2624 = vld [vmem:[%s8 + $0x6c4] sm:$0xf]
  %v2625 = vld [vmem:[%s8 + $0x6c8] sm:$0xff]
  %v2626 = vld [vmem:[%s8 + $0x6d0] sm:$0xff]
  %v2627 = vld [vmem:[%s8 + $0x6d8] sm:$0xff]
  %v2628 = vld [vmem:[%s8 + $0x6e0] sm:$0xf]
  %v2629 = vld [vmem:[%s8 + $0x6e4] sm:$0xff]
  %v2630 = vld [vmem:[%s8 + $0x6ec] sm:$0xff]
  %v2631 = vld [vmem:[%s8 + $0x6f4] sm:$0xff]
  %v2632 = vld [vmem:[%s8 + $0x6fc] sm:$0xf]
  %v2633 = vld [vmem:[%s9] sm:$0x7f]
  %v2635 = vperm.slane %v2633, 0
  %v2636 = vperm.slane %v2633, 1
  %v2637 = vperm.slane %v2633, 2
  %v2638 = vperm.slane %v2633, 3
  %v2639 = vperm.slane %v2633, 4
  %v2640 = vperm.slane %v2633, 5
  %v2641 = vperm.slane %v2633, 6
  %v2905 = vunpack.c.l.b16 %v2377
  %v2906 = vunpack.c.h.b16 %v2377
  %v2907 = vunpack.c.l.b16 %v2378
  %v2908 = vunpack.c.h.b16 %v2378
  %v2909 = vunpack.c.l.b16 %v2379
  %v2910 = vunpack.c.h.b16 %v2379
  %v2911 = vunpack.c.l.b16 %v2380
  %v2912 = vunpack.c.l.b16 %v2381
  %v2913 = vunpack.c.h.b16 %v2381
  %v2914 = vunpack.c.l.b16 %v2382
  %v2915 = vunpack.c.h.b16 %v2382
  %v2916 = vunpack.c.l.b16 %v2383
  %v2917 = vunpack.c.h.b16 %v2383
  %v2918 = vunpack.c.l.b16 %v2384
  %v2919 = vunpack.c.l.b16 %v2385
  %v2920 = vunpack.c.h.b16 %v2385
  %v2921 = vunpack.c.l.b16 %v2386
  %v2922 = vunpack.c.h.b16 %v2386
  %v2923 = vunpack.c.l.b16 %v2387
  %v2924 = vunpack.c.h.b16 %v2387
  %v2925 = vunpack.c.l.b16 %v2388
  %v2926 = vunpack.c.l.b16 %v2389
  %v2927 = vunpack.c.h.b16 %v2389
  %v2928 = vunpack.c.l.b16 %v2390
  %v2929 = vunpack.c.h.b16 %v2390
  %v2930 = vunpack.c.l.b16 %v2391
  %v2931 = vunpack.c.h.b16 %v2391
  %v2932 = vunpack.c.l.b16 %v2392
  %v2933 = vunpack.c.l.b16 %v2393
  %v2934 = vunpack.c.h.b16 %v2393
  %v2935 = vunpack.c.l.b16 %v2394
  %v2936 = vunpack.c.h.b16 %v2394
  %v2937 = vunpack.c.l.b16 %v2395
  %v2938 = vunpack.c.h.b16 %v2395
  %v2939 = vunpack.c.l.b16 %v2396
  %v2940 = vunpack.c.l.b16 %v2397
  %v2941 = vunpack.c.h.b16 %v2397
  %v2942 = vunpack.c.l.b16 %v2398
  %v2943 = vunpack.c.h.b16 %v2398
  %v2944 = vunpack.c.l.b16 %v2399
  %v2945 = vunpack.c.h.b16 %v2399
  %v2946 = vunpack.c.l.b16 %v2400
  %v2947 = vunpack.c.l.b16 %v2401
  %v2948 = vunpack.c.h.b16 %v2401
  %v2949 = vunpack.c.l.b16 %v2402
  %v2950 = vunpack.c.h.b16 %v2402
  %v2951 = vunpack.c.l.b16 %v2403
  %v2952 = vunpack.c.h.b16 %v2403
  %v2953 = vunpack.c.l.b16 %v2404
  %v2954 = vunpack.c.l.b16 %v2405
  %v2955 = vunpack.c.h.b16 %v2405
  %v2956 = vunpack.c.l.b16 %v2406
  %v2957 = vunpack.c.h.b16 %v2406
  %v2958 = vunpack.c.l.b16 %v2407
  %v2959 = vunpack.c.h.b16 %v2407
  %v2960 = vunpack.c.l.b16 %v2408
  %v2961 = vunpack.c.l.b16 %v2409
  %v2962 = vunpack.c.h.b16 %v2409
  %v2963 = vunpack.c.l.b16 %v2410
  %v2964 = vunpack.c.h.b16 %v2410
  %v2965 = vunpack.c.l.b16 %v2411
  %v2966 = vunpack.c.h.b16 %v2411
  %v2967 = vunpack.c.l.b16 %v2412
  %v2968 = vunpack.c.l.b16 %v2413
  %v2969 = vunpack.c.h.b16 %v2413
  %v2970 = vunpack.c.l.b16 %v2414
  %v2971 = vunpack.c.h.b16 %v2414
  %v2972 = vunpack.c.l.b16 %v2415
  %v2973 = vunpack.c.h.b16 %v2415
  %v2974 = vunpack.c.l.b16 %v2416
  %v2975 = vunpack.c.l.b16 %v2417
  %v2976 = vunpack.c.h.b16 %v2417
  %v2977 = vunpack.c.l.b16 %v2418
  %v2978 = vunpack.c.h.b16 %v2418
  %v2979 = vunpack.c.l.b16 %v2419
  %v2980 = vunpack.c.h.b16 %v2419
  %v2981 = vunpack.c.l.b16 %v2420
  %v2982 = vunpack.c.l.b16 %v2421
  %v2983 = vunpack.c.h.b16 %v2421
  %v2984 = vunpack.c.l.b16 %v2422
  %v2985 = vunpack.c.h.b16 %v2422
  %v2986 = vunpack.c.l.b16 %v2423
  %v2987 = vunpack.c.h.b16 %v2423
  %v2988 = vunpack.c.l.b16 %v2424
  %v2989 = vunpack.c.l.b16 %v2425
  %v2990 = vunpack.c.h.b16 %v2425
  %v2991 = vunpack.c.l.b16 %v2426
  %v2992 = vunpack.c.h.b16 %v2426
  %v2993 = vunpack.c.l.b16 %v2427
  %v2994 = vunpack.c.h.b16 %v2427
  %v2995 = vunpack.c.l.b16 %v2428
  %v2996 = vunpack.c.l.b16 %v2429
  %v2997 = vunpack.c.h.b16 %v2429
  %v2998 = vunpack.c.l.b16 %v2430
  %v2999 = vunpack.c.h.b16 %v2430
  %v3000 = vunpack.c.l.b16 %v2431
  %v3001 = vunpack.c.h.b16 %v2431
  %v3002 = vunpack.c.l.b16 %v2432
  %v3003 = vunpack.c.l.b16 %v2433
  %v3004 = vunpack.c.h.b16 %v2433
  %v3005 = vunpack.c.l.b16 %v2434
  %v3006 = vunpack.c.h.b16 %v2434
  %v3007 = vunpack.c.l.b16 %v2435
  %v3008 = vunpack.c.h.b16 %v2435
  %v3009 = vunpack.c.l.b16 %v2436
  %v3010 = vunpack.c.l.b16 %v2437
  %v3011 = vunpack.c.h.b16 %v2437
  %v3012 = vunpack.c.l.b16 %v2438
  %v3013 = vunpack.c.h.b16 %v2438
  %v3014 = vunpack.c.l.b16 %v2439
  %v3015 = vunpack.c.h.b16 %v2439
  %v3016 = vunpack.c.l.b16 %v2440
  %v3017 = vunpack.c.l.b16 %v2441
  %v3018 = vunpack.c.h.b16 %v2441
  %v3019 = vunpack.c.l.b16 %v2442
  %v3020 = vunpack.c.h.b16 %v2442
  %v3021 = vunpack.c.l.b16 %v2443
  %v3022 = vunpack.c.h.b16 %v2443
  %v3023 = vunpack.c.l.b16 %v2444
  %v3024 = vunpack.c.l.b16 %v2445
  %v3025 = vunpack.c.h.b16 %v2445
  %v3026 = vunpack.c.l.b16 %v2446
  %v3027 = vunpack.c.h.b16 %v2446
  %v3028 = vunpack.c.l.b16 %v2447
  %v3029 = vunpack.c.h.b16 %v2447
  %v3030 = vunpack.c.l.b16 %v2448
  %v3031 = vunpack.c.l.b16 %v2449
  %v3032 = vunpack.c.h.b16 %v2449
  %v3033 = vunpack.c.l.b16 %v2450
  %v3034 = vunpack.c.h.b16 %v2450
  %v3035 = vunpack.c.l.b16 %v2451
  %v3036 = vunpack.c.h.b16 %v2451
  %v3037 = vunpack.c.l.b16 %v2452
  %v3038 = vunpack.c.l.b16 %v2453
  %v3039 = vunpack.c.h.b16 %v2453
  %v3040 = vunpack.c.l.b16 %v2454
  %v3041 = vunpack.c.h.b16 %v2454
  %v3042 = vunpack.c.l.b16 %v2455
  %v3043 = vunpack.c.h.b16 %v2455
  %v3044 = vunpack.c.l.b16 %v2456
  %v3045 = vunpack.c.l.b16 %v2457
  %v3046 = vunpack.c.h.b16 %v2457
  %v3047 = vunpack.c.l.b16 %v2458
  %v3048 = vunpack.c.h.b16 %v2458
  %v3049 = vunpack.c.l.b16 %v2459
  %v3050 = vunpack.c.h.b16 %v2459
  %v3051 = vunpack.c.l.b16 %v2460
  %v3052 = vunpack.c.l.b16 %v2461
  %v3053 = vunpack.c.h.b16 %v2461
  %v3054 = vunpack.c.l.b16 %v2462
  %v3055 = vunpack.c.h.b16 %v2462
  %v3056 = vunpack.c.l.b16 %v2463
  %v3057 = vunpack.c.h.b16 %v2463
  %v3058 = vunpack.c.l.b16 %v2464
  %v3059 = vunpack.c.l.b16 %v2465
  %v3060 = vunpack.c.h.b16 %v2465
  %v3061 = vunpack.c.l.b16 %v2466
  %v3062 = vunpack.c.h.b16 %v2466
  %v3063 = vunpack.c.l.b16 %v2467
  %v3064 = vunpack.c.h.b16 %v2467
  %v3065 = vunpack.c.l.b16 %v2468
  %v3066 = vunpack.c.l.b16 %v2469
  %v3067 = vunpack.c.h.b16 %v2469
  %v3068 = vunpack.c.l.b16 %v2470
  %v3069 = vunpack.c.h.b16 %v2470
  %v3070 = vunpack.c.l.b16 %v2471
  %v3071 = vunpack.c.h.b16 %v2471
  %v3072 = vunpack.c.l.b16 %v2472
  %v3073 = vunpack.c.l.b16 %v2473
  %v3074 = vunpack.c.h.b16 %v2473
  %v3075 = vunpack.c.l.b16 %v2474
  %v3076 = vunpack.c.h.b16 %v2474
  %v3077 = vunpack.c.l.b16 %v2475
  %v3078 = vunpack.c.h.b16 %v2475
  %v3079 = vunpack.c.l.b16 %v2476
  %v3080 = vunpack.c.l.b16 %v2477
  %v3081 = vunpack.c.h.b16 %v2477
  %v3082 = vunpack.c.l.b16 %v2478
  %v3083 = vunpack.c.h.b16 %v2478
  %v3084 = vunpack.c.l.b16 %v2479
  %v3085 = vunpack.c.h.b16 %v2479
  %v3086 = vunpack.c.l.b16 %v2480
  %v3087 = vunpack.c.l.b16 %v2481
  %v3088 = vunpack.c.h.b16 %v2481
  %v3089 = vunpack.c.l.b16 %v2482
  %v3090 = vunpack.c.h.b16 %v2482
  %v3091 = vunpack.c.l.b16 %v2483
  %v3092 = vunpack.c.h.b16 %v2483
  %v3093 = vunpack.c.l.b16 %v2484
  %v3094 = vunpack.c.l.b16 %v2485
  %v3095 = vunpack.c.h.b16 %v2485
  %v3096 = vunpack.c.l.b16 %v2486
  %v3097 = vunpack.c.h.b16 %v2486
  %v3098 = vunpack.c.l.b16 %v2487
  %v3099 = vunpack.c.h.b16 %v2487
  %v3100 = vunpack.c.l.b16 %v2488
  %v3101 = vunpack.c.l.b16 %v2489
  %v3102 = vunpack.c.h.b16 %v2489
  %v3103 = vunpack.c.l.b16 %v2490
  %v3104 = vunpack.c.h.b16 %v2490
  %v3105 = vunpack.c.l.b16 %v2491
  %v3106 = vunpack.c.h.b16 %v2491
  %v3107 = vunpack.c.l.b16 %v2492
  %v3108 = vunpack.c.l.b16 %v2493
  %v3109 = vunpack.c.h.b16 %v2493
  %v3110 = vunpack.c.l.b16 %v2494
  %v3111 = vunpack.c.h.b16 %v2494
  %v3112 = vunpack.c.l.b16 %v2495
  %v3113 = vunpack.c.h.b16 %v2495
  %v3114 = vunpack.c.l.b16 %v2496
  %v3115 = vunpack.c.l.b16 %v2497
  %v3116 = vunpack.c.h.b16 %v2497
  %v3117 = vunpack.c.l.b16 %v2498
  %v3118 = vunpack.c.h.b16 %v2498
  %v3119 = vunpack.c.l.b16 %v2499
  %v3120 = vunpack.c.h.b16 %v2499
  %v3121 = vunpack.c.l.b16 %v2500
  %v3122 = vunpack.c.l.b16 %v2501
  %v3123 = vunpack.c.h.b16 %v2501
  %v3124 = vunpack.c.l.b16 %v2502
  %v3125 = vunpack.c.h.b16 %v2502
  %v3126 = vunpack.c.l.b16 %v2503
  %v3127 = vunpack.c.h.b16 %v2503
  %v3128 = vunpack.c.l.b16 %v2504
  %v3129 = vunpack.c.l.b16 %v2505
  %v3130 = vunpack.c.h.b16 %v2505
  %v3131 = vunpack.c.l.b16 %v2506
  %v3132 = vunpack.c.h.b16 %v2506
  %v3133 = vunpack.c.l.b16 %v2507
  %v3134 = vunpack.c.h.b16 %v2507
  %v3135 = vunpack.c.l.b16 %v2508
  %v3136 = vunpack.c.l.b16 %v2509
  %v3137 = vunpack.c.h.b16 %v2509
  %v3138 = vunpack.c.l.b16 %v2510
  %v3139 = vunpack.c.h.b16 %v2510
  %v3140 = vunpack.c.l.b16 %v2511
  %v3141 = vunpack.c.h.b16 %v2511
  %v3142 = vunpack.c.l.b16 %v2512
  %v3143 = vunpack.c.l.b16 %v2513
  %v3144 = vunpack.c.h.b16 %v2513
  %v3145 = vunpack.c.l.b16 %v2514
  %v3146 = vunpack.c.h.b16 %v2514
  %v3147 = vunpack.c.l.b16 %v2515
  %v3148 = vunpack.c.h.b16 %v2515
  %v3149 = vunpack.c.l.b16 %v2516
  %v3150 = vunpack.c.l.b16 %v2517
  %v3151 = vunpack.c.h.b16 %v2517
  %v3152 = vunpack.c.l.b16 %v2518
  %v3153 = vunpack.c.h.b16 %v2518
  %v3154 = vunpack.c.l.b16 %v2519
  %v3155 = vunpack.c.h.b16 %v2519
  %v3156 = vunpack.c.l.b16 %v2520
  %v3157 = vunpack.c.l.b16 %v2521
  %v3158 = vunpack.c.h.b16 %v2521
  %v3159 = vunpack.c.l.b16 %v2522
  %v3160 = vunpack.c.h.b16 %v2522
  %v3161 = vunpack.c.l.b16 %v2523
  %v3162 = vunpack.c.h.b16 %v2523
  %v3163 = vunpack.c.l.b16 %v2524
  %v3164 = vunpack.c.l.b16 %v2525
  %v3165 = vunpack.c.h.b16 %v2525
  %v3166 = vunpack.c.l.b16 %v2526
  %v3167 = vunpack.c.h.b16 %v2526
  %v3168 = vunpack.c.l.b16 %v2527
  %v3169 = vunpack.c.h.b16 %v2527
  %v3170 = vunpack.c.l.b16 %v2528
  %v3171 = vunpack.c.l.b16 %v2529
  %v3172 = vunpack.c.h.b16 %v2529
  %v3173 = vunpack.c.l.b16 %v2530
  %v3174 = vunpack.c.h.b16 %v2530
  %v3175 = vunpack.c.l.b16 %v2531
  %v3176 = vunpack.c.h.b16 %v2531
  %v3177 = vunpack.c.l.b16 %v2532
  %v3178 = vunpack.c.l.b16 %v2533
  %v3179 = vunpack.c.h.b16 %v2533
  %v3180 = vunpack.c.l.b16 %v2534
  %v3181 = vunpack.c.h.b16 %v2534
  %v3182 = vunpack.c.l.b16 %v2535
  %v3183 = vunpack.c.h.b16 %v2535
  %v3184 = vunpack.c.l.b16 %v2536
  %v3185 = vunpack.c.l.b16 %v2537
  %v3186 = vunpack.c.h.b16 %v2537
  %v3187 = vunpack.c.l.b16 %v2538
  %v3188 = vunpack.c.h.b16 %v2538
  %v3189 = vunpack.c.l.b16 %v2539
  %v3190 = vunpack.c.h.b16 %v2539
  %v3191 = vunpack.c.l.b16 %v2540
  %v3192 = vunpack.c.l.b16 %v2541
  %v3193 = vunpack.c.h.b16 %v2541
  %v3194 = vunpack.c.l.b16 %v2542
  %v3195 = vunpack.c.h.b16 %v2542
  %v3196 = vunpack.c.l.b16 %v2543
  %v3197 = vunpack.c.h.b16 %v2543
  %v3198 = vunpack.c.l.b16 %v2544
  %v3199 = vunpack.c.l.b16 %v2545
  %v3200 = vunpack.c.h.b16 %v2545
  %v3201 = vunpack.c.l.b16 %v2546
  %v3202 = vunpack.c.h.b16 %v2546
  %v3203 = vunpack.c.l.b16 %v2547
  %v3204 = vunpack.c.h.b16 %v2547
  %v3205 = vunpack.c.l.b16 %v2548
  %v3206 = vunpack.c.l.b16 %v2549
  %v3207 = vunpack.c.h.b16 %v2549
  %v3208 = vunpack.c.l.b16 %v2550
  %v3209 = vunpack.c.h.b16 %v2550
  %v3210 = vunpack.c.l.b16 %v2551
  %v3211 = vunpack.c.h.b16 %v2551
  %v3212 = vunpack.c.l.b16 %v2552
  %v3213 = vunpack.c.l.b16 %v2553
  %v3214 = vunpack.c.h.b16 %v2553
  %v3215 = vunpack.c.l.b16 %v2554
  %v3216 = vunpack.c.h.b16 %v2554
  %v3217 = vunpack.c.l.b16 %v2555
  %v3218 = vunpack.c.h.b16 %v2555
  %v3219 = vunpack.c.l.b16 %v2556
  %v3220 = vunpack.c.l.b16 %v2557
  %v3221 = vunpack.c.h.b16 %v2557
  %v3222 = vunpack.c.l.b16 %v2558
  %v3223 = vunpack.c.h.b16 %v2558
  %v3224 = vunpack.c.l.b16 %v2559
  %v3225 = vunpack.c.h.b16 %v2559
  %v3226 = vunpack.c.l.b16 %v2560
  %v3227 = vunpack.c.l.b16 %v2561
  %v3228 = vunpack.c.h.b16 %v2561
  %v3229 = vunpack.c.l.b16 %v2562
  %v3230 = vunpack.c.h.b16 %v2562
  %v3231 = vunpack.c.l.b16 %v2563
  %v3232 = vunpack.c.h.b16 %v2563
  %v3233 = vunpack.c.l.b16 %v2564
  %v3234 = vunpack.c.l.b16 %v2565
  %v3235 = vunpack.c.h.b16 %v2565
  %v3236 = vunpack.c.l.b16 %v2566
  %v3237 = vunpack.c.h.b16 %v2566
  %v3238 = vunpack.c.l.b16 %v2567
  %v3239 = vunpack.c.h.b16 %v2567
  %v3240 = vunpack.c.l.b16 %v2568
  %v3241 = vunpack.c.l.b16 %v2569
  %v3242 = vunpack.c.h.b16 %v2569
  %v3243 = vunpack.c.l.b16 %v2570
  %v3244 = vunpack.c.h.b16 %v2570
  %v3245 = vunpack.c.l.b16 %v2571
  %v3246 = vunpack.c.h.b16 %v2571
  %v3247 = vunpack.c.l.b16 %v2572
  %v3248 = vunpack.c.l.b16 %v2573
  %v3249 = vunpack.c.h.b16 %v2573
  %v3250 = vunpack.c.l.b16 %v2574
  %v3251 = vunpack.c.h.b16 %v2574
  %v3252 = vunpack.c.l.b16 %v2575
  %v3253 = vunpack.c.h.b16 %v2575
  %v3254 = vunpack.c.l.b16 %v2576
  %v3255 = vunpack.c.l.b16 %v2577
  %v3256 = vunpack.c.h.b16 %v2577
  %v3257 = vunpack.c.l.b16 %v2578
  %v3258 = vunpack.c.h.b16 %v2578
  %v3259 = vunpack.c.l.b16 %v2579
  %v3260 = vunpack.c.h.b16 %v2579
  %v3261 = vunpack.c.l.b16 %v2580
  %v3262 = vunpack.c.l.b16 %v2581
  %v3263 = vunpack.c.h.b16 %v2581
  %v3264 = vunpack.c.l.b16 %v2582
  %v3265 = vunpack.c.h.b16 %v2582
  %v3266 = vunpack.c.l.b16 %v2583
  %v3267 = vunpack.c.h.b16 %v2583
  %v3268 = vunpack.c.l.b16 %v2584
  %v3269 = vunpack.c.l.b16 %v2585
  %v3270 = vunpack.c.h.b16 %v2585
  %v3271 = vunpack.c.l.b16 %v2586
  %v3272 = vunpack.c.h.b16 %v2586
  %v3273 = vunpack.c.l.b16 %v2587
  %v3274 = vunpack.c.h.b16 %v2587
  %v3275 = vunpack.c.l.b16 %v2588
  %v3276 = vunpack.c.l.b16 %v2589
  %v3277 = vunpack.c.h.b16 %v2589
  %v3278 = vunpack.c.l.b16 %v2590
  %v3279 = vunpack.c.h.b16 %v2590
  %v3280 = vunpack.c.l.b16 %v2591
  %v3281 = vunpack.c.h.b16 %v2591
  %v3282 = vunpack.c.l.b16 %v2592
  %v3283 = vunpack.c.l.b16 %v2593
  %v3284 = vunpack.c.h.b16 %v2593
  %v3285 = vunpack.c.l.b16 %v2594
  %v3286 = vunpack.c.h.b16 %v2594
  %v3287 = vunpack.c.l.b16 %v2595
  %v3288 = vunpack.c.h.b16 %v2595
  %v3289 = vunpack.c.l.b16 %v2596
  %v3290 = vunpack.c.l.b16 %v2597
  %v3291 = vunpack.c.h.b16 %v2597
  %v3292 = vunpack.c.l.b16 %v2598
  %v3293 = vunpack.c.h.b16 %v2598
  %v3294 = vunpack.c.l.b16 %v2599
  %v3295 = vunpack.c.h.b16 %v2599
  %v3296 = vunpack.c.l.b16 %v2600
  %v3297 = vunpack.c.l.b16 %v2601
  %v3298 = vunpack.c.h.b16 %v2601
  %v3299 = vunpack.c.l.b16 %v2602
  %v3300 = vunpack.c.h.b16 %v2602
  %v3301 = vunpack.c.l.b16 %v2603
  %v3302 = vunpack.c.h.b16 %v2603
  %v3303 = vunpack.c.l.b16 %v2604
  %v3304 = vunpack.c.l.b16 %v2605
  %v3305 = vunpack.c.h.b16 %v2605
  %v3306 = vunpack.c.l.b16 %v2606
  %v3307 = vunpack.c.h.b16 %v2606
  %v3308 = vunpack.c.l.b16 %v2607
  %v3309 = vunpack.c.h.b16 %v2607
  %v3310 = vunpack.c.l.b16 %v2608
  %v3311 = vunpack.c.l.b16 %v2609
  %v3312 = vunpack.c.h.b16 %v2609
  %v3313 = vunpack.c.l.b16 %v2610
  %v3314 = vunpack.c.h.b16 %v2610
  %v3315 = vunpack.c.l.b16 %v2611
  %v3316 = vunpack.c.h.b16 %v2611
  %v3317 = vunpack.c.l.b16 %v2612
  %v3318 = vunpack.c.l.b16 %v2613
  %v3319 = vunpack.c.h.b16 %v2613
  %v3320 = vunpack.c.l.b16 %v2614
  %v3321 = vunpack.c.h.b16 %v2614
  %v3322 = vunpack.c.l.b16 %v2615
  %v3323 = vunpack.c.h.b16 %v2615
  %v3324 = vunpack.c.l.b16 %v2616
  %v3325 = vunpack.c.l.b16 %v2617
  %v3326 = vunpack.c.h.b16 %v2617
  %v3327 = vunpack.c.l.b16 %v2618
  %v3328 = vunpack.c.h.b16 %v2618
  %v3329 = vunpack.c.l.b16 %v2619
  %v3330 = vunpack.c.h.b16 %v2619
  %v3331 = vunpack.c.l.b16 %v2620
  %v3332 = vunpack.c.l.b16 %v2621
  %v3333 = vunpack.c.h.b16 %v2621
  %v3334 = vunpack.c.l.b16 %v2622
  %v3335 = vunpack.c.h.b16 %v2622
  %v3336 = vunpack.c.l.b16 %v2623
  %v3337 = vunpack.c.h.b16 %v2623
  %v3338 = vunpack.c.l.b16 %v2624
  %v3339 = vunpack.c.l.b16 %v2625
  %v3340 = vunpack.c.h.b16 %v2625
  %v3341 = vunpack.c.l.b16 %v2626
  %v3342 = vunpack.c.h.b16 %v2626
  %v3343 = vunpack.c.l.b16 %v2627
  %v3344 = vunpack.c.h.b16 %v2627
  %v3345 = vunpack.c.l.b16 %v2628
  %v3346 = vunpack.c.l.b16 %v2629
  %v3347 = vunpack.c.h.b16 %v2629
  %v3348 = vunpack.c.l.b16 %v2630
  %v3349 = vunpack.c.h.b16 %v2630
  %v3350 = vunpack.c.l.b16 %v2631
  %v3351 = vunpack.c.h.b16 %v2631
  %v3352 = vunpack.c.l.b16 %v2632
  %v3353 = vpack.c.b16 %v2912, %v2905
  %v3354 = vpack.c.b16 %v2913, %v2906
  %v3355 = vpack.c.b16 %v2914, %v2907
  %v3356 = vpack.c.b16 %v2915, %v2908
  %v3357 = vpack.c.b16 %v2916, %v2909
  %v3358 = vpack.c.b16 %v2917, %v2910
  %v3359 = vpack.c.b16 %v2918, %v2911
  %v3360 = vpack.c.b16 %v2926, %v2919
  %v3361 = vpack.c.b16 %v2927, %v2920
  %v3362 = vpack.c.b16 %v2928, %v2921
  %v3363 = vpack.c.b16 %v2929, %v2922
  %v3364 = vpack.c.b16 %v2930, %v2923
  %v3365 = vpack.c.b16 %v2931, %v2924
  %v3366 = vpack.c.b16 %v2932, %v2925
  %v3367 = vpack.c.b16 %v2940, %v2933
  %v3368 = vpack.c.b16 %v2941, %v2934
  %v3369 = vpack.c.b16 %v2942, %v2935
  %v3370 = vpack.c.b16 %v2943, %v2936
  %v3371 = vpack.c.b16 %v2944, %v2937
  %v3372 = vpack.c.b16 %v2945, %v2938
  %v3373 = vpack.c.b16 %v2946, %v2939
  %v3374 = vpack.c.b16 %v2954, %v2947
  %v3375 = vpack.c.b16 %v2955, %v2948
  %v3376 = vpack.c.b16 %v2956, %v2949
  %v3377 = vpack.c.b16 %v2957, %v2950
  %v3378 = vpack.c.b16 %v2958, %v2951
  %v3379 = vpack.c.b16 %v2959, %v2952
  %v3380 = vpack.c.b16 %v2960, %v2953
  %v3381 = vpack.c.b16 %v2968, %v2961
  %v3382 = vpack.c.b16 %v2969, %v2962
  %v3383 = vpack.c.b16 %v2970, %v2963
  %v3384 = vpack.c.b16 %v2971, %v2964
  %v3385 = vpack.c.b16 %v2972, %v2965
  %v3386 = vpack.c.b16 %v2973, %v2966
  %v3387 = vpack.c.b16 %v2974, %v2967
  %v3388 = vpack.c.b16 %v2982, %v2975
  %v3389 = vpack.c.b16 %v2983, %v2976
  %v3390 = vpack.c.b16 %v2984, %v2977
  %v3391 = vpack.c.b16 %v2985, %v2978
  %v3392 = vpack.c.b16 %v2986, %v2979
  %v3393 = vpack.c.b16 %v2987, %v2980
  %v3394 = vpack.c.b16 %v2988, %v2981
  %v3395 = vpack.c.b16 %v2996, %v2989
  %v3396 = vpack.c.b16 %v2997, %v2990
  %v3397 = vpack.c.b16 %v2998, %v2991
  %v3398 = vpack.c.b16 %v2999, %v2992
  %v3399 = vpack.c.b16 %v3000, %v2993
  %v3400 = vpack.c.b16 %v3001, %v2994
  %v3401 = vpack.c.b16 %v3002, %v2995
  %v3402 = vpack.c.b16 %v3010, %v3003
  %v3403 = vpack.c.b16 %v3011, %v3004
  %v3404 = vpack.c.b16 %v3012, %v3005
  %v3405 = vpack.c.b16 %v3013, %v3006
  %v3406 = vpack.c.b16 %v3014, %v3007
  %v3407 = vpack.c.b16 %v3015, %v3008
  %v3408 = vpack.c.b16 %v3016, %v3009
  %v3409 = vpack.c.b16 %v3024, %v3017
  %v3410 = vpack.c.b16 %v3025, %v3018
  %v3411 = vpack.c.b16 %v3026, %v3019
  %v3412 = vpack.c.b16 %v3027, %v3020
  %v3413 = vpack.c.b16 %v3028, %v3021
  %v3414 = vpack.c.b16 %v3029, %v3022
  %v3415 = vpack.c.b16 %v3030, %v3023
  %v3416 = vpack.c.b16 %v3038, %v3031
  %v3417 = vpack.c.b16 %v3039, %v3032
  %v3418 = vpack.c.b16 %v3040, %v3033
  %v3419 = vpack.c.b16 %v3041, %v3034
  %v3420 = vpack.c.b16 %v3042, %v3035
  %v3421 = vpack.c.b16 %v3043, %v3036
  %v3422 = vpack.c.b16 %v3044, %v3037
  %v3423 = vpack.c.b16 %v3052, %v3045
  %v3424 = vpack.c.b16 %v3053, %v3046
  %v3425 = vpack.c.b16 %v3054, %v3047
  %v3426 = vpack.c.b16 %v3055, %v3048
  %v3427 = vpack.c.b16 %v3056, %v3049
  %v3428 = vpack.c.b16 %v3057, %v3050
  %v3429 = vpack.c.b16 %v3058, %v3051
  %v3430 = vpack.c.b16 %v3066, %v3059
  %v3431 = vpack.c.b16 %v3067, %v3060
  %v3432 = vpack.c.b16 %v3068, %v3061
  %v3433 = vpack.c.b16 %v3069, %v3062
  %v3434 = vpack.c.b16 %v3070, %v3063
  %v3435 = vpack.c.b16 %v3071, %v3064
  %v3436 = vpack.c.b16 %v3072, %v3065
  %v3437 = vpack.c.b16 %v3080, %v3073
  %v3438 = vpack.c.b16 %v3081, %v3074
  %v3439 = vpack.c.b16 %v3082, %v3075
  %v3440 = vpack.c.b16 %v3083, %v3076
  %v3441 = vpack.c.b16 %v3084, %v3077
  %v3442 = vpack.c.b16 %v3085, %v3078
  %v3443 = vpack.c.b16 %v3086, %v3079
  %v3444 = vpack.c.b16 %v3094, %v3087
  %v3445 = vpack.c.b16 %v3095, %v3088
  %v3446 = vpack.c.b16 %v3096, %v3089
  %v3447 = vpack.c.b16 %v3097, %v3090
  %v3448 = vpack.c.b16 %v3098, %v3091
  %v3449 = vpack.c.b16 %v3099, %v3092
  %v3450 = vpack.c.b16 %v3100, %v3093
  %v3451 = vpack.c.b16 %v3108, %v3101
  %v3452 = vpack.c.b16 %v3109, %v3102
  %v3453 = vpack.c.b16 %v3110, %v3103
  %v3454 = vpack.c.b16 %v3111, %v3104
  %v3455 = vpack.c.b16 %v3112, %v3105
  %v3456 = vpack.c.b16 %v3113, %v3106
  %v3457 = vpack.c.b16 %v3114, %v3107
  %v3458 = vpack.c.b16 %v3122, %v3115
  %v3459 = vpack.c.b16 %v3123, %v3116
  %v3460 = vpack.c.b16 %v3124, %v3117
  %v3461 = vpack.c.b16 %v3125, %v3118
  %v3462 = vpack.c.b16 %v3126, %v3119
  %v3463 = vpack.c.b16 %v3127, %v3120
  %v3464 = vpack.c.b16 %v3128, %v3121
  %v3465 = vpack.c.b16 %v3136, %v3129
  %v3466 = vpack.c.b16 %v3137, %v3130
  %v3467 = vpack.c.b16 %v3138, %v3131
  %v3468 = vpack.c.b16 %v3139, %v3132
  %v3469 = vpack.c.b16 %v3140, %v3133
  %v3470 = vpack.c.b16 %v3141, %v3134
  %v3471 = vpack.c.b16 %v3142, %v3135
  %v3472 = vpack.c.b16 %v3150, %v3143
  %v3473 = vpack.c.b16 %v3151, %v3144
  %v3474 = vpack.c.b16 %v3152, %v3145
  %v3475 = vpack.c.b16 %v3153, %v3146
  %v3476 = vpack.c.b16 %v3154, %v3147
  %v3477 = vpack.c.b16 %v3155, %v3148
  %v3478 = vpack.c.b16 %v3156, %v3149
  %v3479 = vpack.c.b16 %v3164, %v3157
  %v3480 = vpack.c.b16 %v3165, %v3158
  %v3481 = vpack.c.b16 %v3166, %v3159
  %v3482 = vpack.c.b16 %v3167, %v3160
  %v3483 = vpack.c.b16 %v3168, %v3161
  %v3484 = vpack.c.b16 %v3169, %v3162
  %v3485 = vpack.c.b16 %v3170, %v3163
  %v3486 = vpack.c.b16 %v3178, %v3171
  %v3487 = vpack.c.b16 %v3179, %v3172
  %v3488 = vpack.c.b16 %v3180, %v3173
  %v3489 = vpack.c.b16 %v3181, %v3174
  %v3490 = vpack.c.b16 %v3182, %v3175
  %v3491 = vpack.c.b16 %v3183, %v3176
  %v3492 = vpack.c.b16 %v3184, %v3177
  %v3493 = vpack.c.b16 %v3192, %v3185
  %v3494 = vpack.c.b16 %v3193, %v3186
  %v3495 = vpack.c.b16 %v3194, %v3187
  %v3496 = vpack.c.b16 %v3195, %v3188
  %v3497 = vpack.c.b16 %v3196, %v3189
  %v3498 = vpack.c.b16 %v3197, %v3190
  %v3499 = vpack.c.b16 %v3198, %v3191
  %v3500 = vpack.c.b16 %v3206, %v3199
  %v3501 = vpack.c.b16 %v3207, %v3200
  %v3502 = vpack.c.b16 %v3208, %v3201
  %v3503 = vpack.c.b16 %v3209, %v3202
  %v3504 = vpack.c.b16 %v3210, %v3203
  %v3505 = vpack.c.b16 %v3211, %v3204
  %v3506 = vpack.c.b16 %v3212, %v3205
  %v3507 = vpack.c.b16 %v3220, %v3213
  %v3508 = vpack.c.b16 %v3221, %v3214
  %v3509 = vpack.c.b16 %v3222, %v3215
  %v3510 = vpack.c.b16 %v3223, %v3216
  %v3511 = vpack.c.b16 %v3224, %v3217
  %v3512 = vpack.c.b16 %v3225, %v3218
  %v3513 = vpack.c.b16 %v3226, %v3219
  %v3514 = vpack.c.b16 %v3234, %v3227
  %v3515 = vpack.c.b16 %v3235, %v3228
  %v3516 = vpack.c.b16 %v3236, %v3229
  %v3517 = vpack.c.b16 %v3237, %v3230
  %v3518 = vpack.c.b16 %v3238, %v3231
  %v3519 = vpack.c.b16 %v3239, %v3232
  %v3520 = vpack.c.b16 %v3240, %v3233
  %v3521 = vpack.c.b16 %v3248, %v3241
  %v3522 = vpack.c.b16 %v3249, %v3242
  %v3523 = vpack.c.b16 %v3250, %v3243
  %v3524 = vpack.c.b16 %v3251, %v3244
  %v3525 = vpack.c.b16 %v3252, %v3245
  %v3526 = vpack.c.b16 %v3253, %v3246
  %v3527 = vpack.c.b16 %v3254, %v3247
  %v3528 = vpack.c.b16 %v3262, %v3255
  %v3529 = vpack.c.b16 %v3263, %v3256
  %v3530 = vpack.c.b16 %v3264, %v3257
  %v3531 = vpack.c.b16 %v3265, %v3258
  %v3532 = vpack.c.b16 %v3266, %v3259
  %v3533 = vpack.c.b16 %v3267, %v3260
  %v3534 = vpack.c.b16 %v3268, %v3261
  %v3535 = vpack.c.b16 %v3276, %v3269
  %v3536 = vpack.c.b16 %v3277, %v3270
  %v3537 = vpack.c.b16 %v3278, %v3271
  %v3538 = vpack.c.b16 %v3279, %v3272
  %v3539 = vpack.c.b16 %v3280, %v3273
  %v3540 = vpack.c.b16 %v3281, %v3274
  %v3541 = vpack.c.b16 %v3282, %v3275
  %v3542 = vpack.c.b16 %v3290, %v3283
  %v3543 = vpack.c.b16 %v3291, %v3284
  %v3544 = vpack.c.b16 %v3292, %v3285
  %v3545 = vpack.c.b16 %v3293, %v3286
  %v3546 = vpack.c.b16 %v3294, %v3287
  %v3547 = vpack.c.b16 %v3295, %v3288
  %v3548 = vpack.c.b16 %v3296, %v3289
  %v3549 = vpack.c.b16 %v3304, %v3297
  %v3550 = vpack.c.b16 %v3305, %v3298
  %v3551 = vpack.c.b16 %v3306, %v3299
  %v3552 = vpack.c.b16 %v3307, %v3300
  %v3553 = vpack.c.b16 %v3308, %v3301
  %v3554 = vpack.c.b16 %v3309, %v3302
  %v3555 = vpack.c.b16 %v3310, %v3303
  %v3556 = vpack.c.b16 %v3318, %v3311
  %v3557 = vpack.c.b16 %v3319, %v3312
  %v3558 = vpack.c.b16 %v3320, %v3313
  %v3559 = vpack.c.b16 %v3321, %v3314
  %v3560 = vpack.c.b16 %v3322, %v3315
  %v3561 = vpack.c.b16 %v3323, %v3316
  %v3562 = vpack.c.b16 %v3324, %v3317
  %v3563 = vpack.c.b16 %v3332, %v3325
  %v3564 = vpack.c.b16 %v3333, %v3326
  %v3565 = vpack.c.b16 %v3334, %v3327
  %v3566 = vpack.c.b16 %v3335, %v3328
  %v3567 = vpack.c.b16 %v3336, %v3329
  %v3568 = vpack.c.b16 %v3337, %v3330
  %v3569 = vpack.c.b16 %v3338, %v3331
  %v3570 = vpack.c.b16 %v3346, %v3339
  %v3571 = vpack.c.b16 %v3347, %v3340
  %v3572 = vpack.c.b16 %v3348, %v3341
  %v3573 = vpack.c.b16 %v3349, %v3342
  %v3574 = vpack.c.b16 %v3350, %v3343
  %v3575 = vpack.c.b16 %v3351, %v3344
  %v3576 = vpack.c.b16 %v3352, %v3345
  %3801 = vmatpush.bf16.msra.mxu0 %v3402
  %3802 = vmatpush.bf16.msra.mxu0 %v3395
  %3803 = vmatpush.bf16.msra.mxu0 %v3388
  %3804 = vmatpush.bf16.msra.mxu0 %v3381
  %3805 = vmatpush.bf16.msra.mxu0 %v3374
  %3806 = vmatpush.bf16.msra.mxu0 %v3367
  %3807 = vmatpush.bf16.msra.mxu0 %v3360
  %3808 = vmatpush.bf16.msra.mxu0 %v3353
  %3809 = vmatmul.bf16.gmra.mxu0 %v2373
  %v3810 = vpop.f32.mrf.mxu0
  %v3811 = vadd.f32 %v2635, %v3810
  %v3812 = vpop.f32.mrf.mxu0
  %3813 = vdwg.mxu0
  %3814 = vmatpush.bf16.msra.mxu0 %v3458
  %3815 = vmatpush.bf16.msra.mxu0 %v3451
  %3816 = vmatpush.bf16.msra.mxu0 %v3444
  %3817 = vmatpush.bf16.msra.mxu0 %v3437
  %3818 = vmatpush.bf16.msra.mxu0 %v3430
  %3819 = vmatpush.bf16.msra.mxu0 %v3423
  %3820 = vmatpush.bf16.msra.mxu0 %v3416
  %3821 = vmatpush.bf16.msra.mxu0 %v3409
  %3822 = vmatmul.bf16.gmra.mxu0 %v2374
  %v3823 = vpop.f32.mrf.mxu0
  %v3824 = vadd.f32 %v3811, %v3823
  %v3825 = vpop.f32.mrf.mxu0
  %3826 = vdwg.mxu0
  %3827 = vmatpush.bf16.msra.mxu0 %v3514
  %3828 = vmatpush.bf16.msra.mxu0 %v3507
  %3829 = vmatpush.bf16.msra.mxu0 %v3500
  %3830 = vmatpush.bf16.msra.mxu0 %v3493
  %3831 = vmatpush.bf16.msra.mxu0 %v3486
  %3832 = vmatpush.bf16.msra.mxu0 %v3479
  %3833 = vmatpush.bf16.msra.mxu0 %v3472
  %3834 = vmatpush.bf16.msra.mxu0 %v3465
  %3835 = vmatmul.bf16.gmra.mxu0 %v2375
  %v3836 = vpop.f32.mrf.mxu0
  %v3837 = vadd.f32 %v3824, %v3836
  %v3838 = vpop.f32.mrf.mxu0
  %3839 = vdwg.mxu0
  %3840 = vmatpush.bf16.msra.mxu0 %v3570
  %3841 = vmatpush.bf16.msra.mxu0 %v3563
  %3842 = vmatpush.bf16.msra.mxu0 %v3556
  %3843 = vmatpush.bf16.msra.mxu0 %v3549
  %3844 = vmatpush.bf16.msra.mxu0 %v3542
  %3845 = vmatpush.bf16.msra.mxu0 %v3535
  %3846 = vmatpush.bf16.msra.mxu0 %v3528
  %3847 = vmatpush.bf16.msra.mxu0 %v3521
  %3848 = vmatmul.bf16.gmra.mxu0 %v2376
  %v3849 = vpop.f32.mrf.mxu0
  %v3850 = vadd.f32 %v3837, %v3849
  %v3851 = vpop.f32.mrf.mxu0
  %3852 = vdwg.mxu0
  %3853 = vmatpush.bf16.msra.mxu0 %v3403
  %3854 = vmatpush.bf16.msra.mxu0 %v3396
  %3855 = vmatpush.bf16.msra.mxu0 %v3389
  %3856 = vmatpush.bf16.msra.mxu0 %v3382
  %3857 = vmatpush.bf16.msra.mxu0 %v3375
  %3858 = vmatpush.bf16.msra.mxu0 %v3368
  %3859 = vmatpush.bf16.msra.mxu0 %v3361
  %3860 = vmatpush.bf16.msra.mxu0 %v3354
  %3861 = vmatmul.bf16.gmra.mxu0 %v2373
  %v3862 = vpop.f32.mrf.mxu0
  %v3863 = vadd.f32 %v2636, %v3862
  %v3864 = vpop.f32.mrf.mxu0
  %3865 = vdwg.mxu0
  %3866 = vmatpush.bf16.msra.mxu0 %v3459
  %3867 = vmatpush.bf16.msra.mxu0 %v3452
  %3868 = vmatpush.bf16.msra.mxu0 %v3445
  %3869 = vmatpush.bf16.msra.mxu0 %v3438
  %3870 = vmatpush.bf16.msra.mxu0 %v3431
  %3871 = vmatpush.bf16.msra.mxu0 %v3424
  %3872 = vmatpush.bf16.msra.mxu0 %v3417
  %3873 = vmatpush.bf16.msra.mxu0 %v3410
  %3874 = vmatmul.bf16.gmra.mxu0 %v2374
  %v3875 = vpop.f32.mrf.mxu0
  %v3876 = vadd.f32 %v3863, %v3875
  %v3877 = vpop.f32.mrf.mxu0
  %3878 = vdwg.mxu0
  %3879 = vmatpush.bf16.msra.mxu0 %v3515
  %3880 = vmatpush.bf16.msra.mxu0 %v3508
  %3881 = vmatpush.bf16.msra.mxu0 %v3501
  %3882 = vmatpush.bf16.msra.mxu0 %v3494
  %3883 = vmatpush.bf16.msra.mxu0 %v3487
  %3884 = vmatpush.bf16.msra.mxu0 %v3480
  %3885 = vmatpush.bf16.msra.mxu0 %v3473
  %3886 = vmatpush.bf16.msra.mxu0 %v3466
  %3887 = vmatmul.bf16.gmra.mxu0 %v2375
  %v3888 = vpop.f32.mrf.mxu0
  %v3889 = vadd.f32 %v3876, %v3888
  %v3890 = vpop.f32.mrf.mxu0
  %3891 = vdwg.mxu0
  %3892 = vmatpush.bf16.msra.mxu0 %v3571
  %3893 = vmatpush.bf16.msra.mxu0 %v3564
  %3894 = vmatpush.bf16.msra.mxu0 %v3557
  %3895 = vmatpush.bf16.msra.mxu0 %v3550
  %3896 = vmatpush.bf16.msra.mxu0 %v3543
  %3897 = vmatpush.bf16.msra.mxu0 %v3536
  %3898 = vmatpush.bf16.msra.mxu0 %v3529
  %3899 = vmatpush.bf16.msra.mxu0 %v3522
  %3900 = vmatmul.bf16.gmra.mxu0 %v2376
  %v3901 = vpop.f32.mrf.mxu0
  %v3902 = vadd.f32 %v3889, %v3901
  %v3903 = vpop.f32.mrf.mxu0
  %3904 = vdwg.mxu0
  %3905 = vmatpush.bf16.msra.mxu0 %v3404
  %3906 = vmatpush.bf16.msra.mxu0 %v3397
  %3907 = vmatpush.bf16.msra.mxu0 %v3390
  %3908 = vmatpush.bf16.msra.mxu0 %v3383
  %3909 = vmatpush.bf16.msra.mxu0 %v3376
  %3910 = vmatpush.bf16.msra.mxu0 %v3369
  %3911 = vmatpush.bf16.msra.mxu0 %v3362
  %3912 = vmatpush.bf16.msra.mxu0 %v3355
  %3913 = vmatmul.bf16.gmra.mxu0 %v2373
  %v3914 = vpop.f32.mrf.mxu0
  %v3915 = vadd.f32 %v2637, %v3914
  %v3916 = vpop.f32.mrf.mxu0
  %3917 = vdwg.mxu0
  %3918 = vmatpush.bf16.msra.mxu0 %v3460
  %3919 = vmatpush.bf16.msra.mxu0 %v3453
  %3920 = vmatpush.bf16.msra.mxu0 %v3446
  %3921 = vmatpush.bf16.msra.mxu0 %v3439
  %3922 = vmatpush.bf16.msra.mxu0 %v3432
  %3923 = vmatpush.bf16.msra.mxu0 %v3425
  %3924 = vmatpush.bf16.msra.mxu0 %v3418
  %3925 = vmatpush.bf16.msra.mxu0 %v3411
  %3926 = vmatmul.bf16.gmra.mxu0 %v2374
  %v3927 = vpop.f32.mrf.mxu0
  %v3928 = vadd.f32 %v3915, %v3927
  %v3929 = vpop.f32.mrf.mxu0
  %3930 = vdwg.mxu0
  %3931 = vmatpush.bf16.msra.mxu0 %v3516
  %3932 = vmatpush.bf16.msra.mxu0 %v3509
  %3933 = vmatpush.bf16.msra.mxu0 %v3502
  %3934 = vmatpush.bf16.msra.mxu0 %v3495
  %3935 = vmatpush.bf16.msra.mxu0 %v3488
  %3936 = vmatpush.bf16.msra.mxu0 %v3481
  %3937 = vmatpush.bf16.msra.mxu0 %v3474
  %3938 = vmatpush.bf16.msra.mxu0 %v3467
  %3939 = vmatmul.bf16.gmra.mxu0 %v2375
  %v3940 = vpop.f32.mrf.mxu0
  %v3941 = vadd.f32 %v3928, %v3940
  %v3942 = vpop.f32.mrf.mxu0
  %3943 = vdwg.mxu0
  %3944 = vmatpush.bf16.msra.mxu0 %v3572
  %3945 = vmatpush.bf16.msra.mxu0 %v3565
  %3946 = vmatpush.bf16.msra.mxu0 %v3558
  %3947 = vmatpush.bf16.msra.mxu0 %v3551
  %3948 = vmatpush.bf16.msra.mxu0 %v3544
  %3949 = vmatpush.bf16.msra.mxu0 %v3537
  %3950 = vmatpush.bf16.msra.mxu0 %v3530
  %3951 = vmatpush.bf16.msra.mxu0 %v3523
  %3952 = vmatmul.bf16.gmra.mxu0 %v2376
  %v3953 = vpop.f32.mrf.mxu0
  %v3954 = vadd.f32 %v3941, %v3953
  %v3955 = vpop.f32.mrf.mxu0
  %3956 = vdwg.mxu0
  %3957 = vmatpush.bf16.msra.mxu0 %v3405
  %3958 = vmatpush.bf16.msra.mxu0 %v3398
  %3959 = vmatpush.bf16.msra.mxu0 %v3391
  %3960 = vmatpush.bf16.msra.mxu0 %v3384
  %3961 = vmatpush.bf16.msra.mxu0 %v3377
  %3962 = vmatpush.bf16.msra.mxu0 %v3370
  %3963 = vmatpush.bf16.msra.mxu0 %v3363
  %3964 = vmatpush.bf16.msra.mxu0 %v3356
  %3965 = vmatmul.bf16.gmra.mxu0 %v2373
  %v3966 = vpop.f32.mrf.mxu0
  %v3967 = vadd.f32 %v2638, %v3966
  %v3968 = vpop.f32.mrf.mxu0
  %3969 = vdwg.mxu0
  %3970 = vmatpush.bf16.msra.mxu0 %v3461
  %3971 = vmatpush.bf16.msra.mxu0 %v3454
  %3972 = vmatpush.bf16.msra.mxu0 %v3447
  %3973 = vmatpush.bf16.msra.mxu0 %v3440
  %3974 = vmatpush.bf16.msra.mxu0 %v3433
  %3975 = vmatpush.bf16.msra.mxu0 %v3426
  %3976 = vmatpush.bf16.msra.mxu0 %v3419
  %3977 = vmatpush.bf16.msra.mxu0 %v3412
  %3978 = vmatmul.bf16.gmra.mxu0 %v2374
  %v3979 = vpop.f32.mrf.mxu0
  %v3980 = vadd.f32 %v3967, %v3979
  %v3981 = vpop.f32.mrf.mxu0
  %3982 = vdwg.mxu0
  %3983 = vmatpush.bf16.msra.mxu0 %v3517
  %3984 = vmatpush.bf16.msra.mxu0 %v3510
  %3985 = vmatpush.bf16.msra.mxu0 %v3503
  %3986 = vmatpush.bf16.msra.mxu0 %v3496
  %3987 = vmatpush.bf16.msra.mxu0 %v3489
  %3988 = vmatpush.bf16.msra.mxu0 %v3482
  %3989 = vmatpush.bf16.msra.mxu0 %v3475
  %3990 = vmatpush.bf16.msra.mxu0 %v3468
  %3991 = vmatmul.bf16.gmra.mxu0 %v2375
  %v3992 = vpop.f32.mrf.mxu0
  %v3993 = vadd.f32 %v3980, %v3992
  %v3994 = vpop.f32.mrf.mxu0
  %3995 = vdwg.mxu0
  %3996 = vmatpush.bf16.msra.mxu0 %v3573
  %3997 = vmatpush.bf16.msra.mxu0 %v3566
  %3998 = vmatpush.bf16.msra.mxu0 %v3559
  %3999 = vmatpush.bf16.msra.mxu0 %v3552
  %4000 = vmatpush.bf16.msra.mxu0 %v3545
  %4001 = vmatpush.bf16.msra.mxu0 %v3538
  %4002 = vmatpush.bf16.msra.mxu0 %v3531
  %4003 = vmatpush.bf16.msra.mxu0 %v3524
  %4004 = vmatmul.bf16.gmra.mxu0 %v2376
  %v4005 = vpop.f32.mrf.mxu0
  %v4006 = vadd.f32 %v3993, %v4005
  %v4007 = vpop.f32.mrf.mxu0
  %4008 = vdwg.mxu0
  %4009 = vmatpush.bf16.msra.mxu0 %v3406
  %4010 = vmatpush.bf16.msra.mxu0 %v3399
  %4011 = vmatpush.bf16.msra.mxu0 %v3392
  %4012 = vmatpush.bf16.msra.mxu0 %v3385
  %4013 = vmatpush.bf16.msra.mxu0 %v3378
  %4014 = vmatpush.bf16.msra.mxu0 %v3371
  %4015 = vmatpush.bf16.msra.mxu0 %v3364
  %4016 = vmatpush.bf16.msra.mxu0 %v3357
  %4017 = vmatmul.bf16.gmra.mxu0 %v2373
  %v4018 = vpop.f32.mrf.mxu0
  %v4019 = vadd.f32 %v2639, %v4018
  %v4020 = vpop.f32.mrf.mxu0
  %4021 = vdwg.mxu0
  %4022 = vmatpush.bf16.msra.mxu0 %v3462
  %4023 = vmatpush.bf16.msra.mxu0 %v3455
  %4024 = vmatpush.bf16.msra.mxu0 %v3448
  %4025 = vmatpush.bf16.msra.mxu0 %v3441
  %4026 = vmatpush.bf16.msra.mxu0 %v3434
  %4027 = vmatpush.bf16.msra.mxu0 %v3427
  %4028 = vmatpush.bf16.msra.mxu0 %v3420
  %4029 = vmatpush.bf16.msra.mxu0 %v3413
  %4030 = vmatmul.bf16.gmra.mxu0 %v2374
  %v4031 = vpop.f32.mrf.mxu0
  %v4032 = vadd.f32 %v4019, %v4031
  %v4033 = vpop.f32.mrf.mxu0
  %4034 = vdwg.mxu0
  %4035 = vmatpush.bf16.msra.mxu0 %v3518
  %4036 = vmatpush.bf16.msra.mxu0 %v3511
  %4037 = vmatpush.bf16.msra.mxu0 %v3504
  %4038 = vmatpush.bf16.msra.mxu0 %v3497
  %4039 = vmatpush.bf16.msra.mxu0 %v3490
  %4040 = vmatpush.bf16.msra.mxu0 %v3483
  %4041 = vmatpush.bf16.msra.mxu0 %v3476
  %4042 = vmatpush.bf16.msra.mxu0 %v3469
  %4043 = vmatmul.bf16.gmra.mxu0 %v2375
  %v4044 = vpop.f32.mrf.mxu0
  %v4045 = vadd.f32 %v4032, %v4044
  %v4046 = vpop.f32.mrf.mxu0
  %4047 = vdwg.mxu0
  %4048 = vmatpush.bf16.msra.mxu0 %v3574
  %4049 = vmatpush.bf16.msra.mxu0 %v3567
  %4050 = vmatpush.bf16.msra.mxu0 %v3560
  %4051 = vmatpush.bf16.msra.mxu0 %v3553
  %4052 = vmatpush.bf16.msra.mxu0 %v3546
  %4053 = vmatpush.bf16.msra.mxu0 %v3539
  %4054 = vmatpush.bf16.msra.mxu0 %v3532
  %4055 = vmatpush.bf16.msra.mxu0 %v3525
  %4056 = vmatmul.bf16.gmra.mxu0 %v2376
  %v4057 = vpop.f32.mrf.mxu0
  %v4058 = vadd.f32 %v4045, %v4057
  %v4059 = vpop.f32.mrf.mxu0
  %4060 = vdwg.mxu0
  %4061 = vmatpush.bf16.msra.mxu0 %v3407
  %4062 = vmatpush.bf16.msra.mxu0 %v3400
  %4063 = vmatpush.bf16.msra.mxu0 %v3393
  %4064 = vmatpush.bf16.msra.mxu0 %v3386
  %4065 = vmatpush.bf16.msra.mxu0 %v3379
  %4066 = vmatpush.bf16.msra.mxu0 %v3372
  %4067 = vmatpush.bf16.msra.mxu0 %v3365
  %4068 = vmatpush.bf16.msra.mxu0 %v3358
  %4069 = vmatmul.bf16.gmra.mxu0 %v2373
  %v4070 = vpop.f32.mrf.mxu0
  %v4071 = vadd.f32 %v2640, %v4070
  %v4072 = vpop.f32.mrf.mxu0
  %4073 = vdwg.mxu0
  %4074 = vmatpush.bf16.msra.mxu0 %v3463
  %4075 = vmatpush.bf16.msra.mxu0 %v3456
  %4076 = vmatpush.bf16.msra.mxu0 %v3449
  %4077 = vmatpush.bf16.msra.mxu0 %v3442
  %4078 = vmatpush.bf16.msra.mxu0 %v3435
  %4079 = vmatpush.bf16.msra.mxu0 %v3428
  %4080 = vmatpush.bf16.msra.mxu0 %v3421
  %4081 = vmatpush.bf16.msra.mxu0 %v3414
  %4082 = vmatmul.bf16.gmra.mxu0 %v2374
  %v4083 = vpop.f32.mrf.mxu0
  %v4084 = vadd.f32 %v4071, %v4083
  %v4085 = vpop.f32.mrf.mxu0
  %4086 = vdwg.mxu0
  %4087 = vmatpush.bf16.msra.mxu0 %v3519
  %4088 = vmatpush.bf16.msra.mxu0 %v3512
  %4089 = vmatpush.bf16.msra.mxu0 %v3505
  %4090 = vmatpush.bf16.msra.mxu0 %v3498
  %4091 = vmatpush.bf16.msra.mxu0 %v3491
  %4092 = vmatpush.bf16.msra.mxu0 %v3484
  %4093 = vmatpush.bf16.msra.mxu0 %v3477
  %4094 = vmatpush.bf16.msra.mxu0 %v3470
  %4095 = vmatmul.bf16.gmra.mxu0 %v2375
  %v4096 = vpop.f32.mrf.mxu0
  %v4097 = vadd.f32 %v4084, %v4096
  %v4098 = vpop.f32.mrf.mxu0
  %4099 = vdwg.mxu0
  %4100 = vmatpush.bf16.msra.mxu0 %v3575
  %4101 = vmatpush.bf16.msra.mxu0 %v3568
  %4102 = vmatpush.bf16.msra.mxu0 %v3561
  %4103 = vmatpush.bf16.msra.mxu0 %v3554
  %4104 = vmatpush.bf16.msra.mxu0 %v3547
  %4105 = vmatpush.bf16.msra.mxu0 %v3540
  %4106 = vmatpush.bf16.msra.mxu0 %v3533
  %4107 = vmatpush.bf16.msra.mxu0 %v3526
  %4108 = vmatmul.bf16.gmra.mxu0 %v2376
  %v4109 = vpop.f32.mrf.mxu0
  %v4110 = vadd.f32 %v4097, %v4109
  %v4111 = vpop.f32.mrf.mxu0
  %4112 = vdwg.mxu0
  %4113 = vmatpush.bf16.msra.mxu0 %v3408
  %4114 = vmatpush.bf16.msra.mxu0 %v3401
  %4115 = vmatpush.bf16.msra.mxu0 %v3394
  %4116 = vmatpush.bf16.msra.mxu0 %v3387
  %4117 = vmatpush.bf16.msra.mxu0 %v3380
  %4118 = vmatpush.bf16.msra.mxu0 %v3373
  %4119 = vmatpush.bf16.msra.mxu0 %v3366
  %4120 = vmatpush.bf16.msra.mxu0 %v3359
  %4121 = vmatmul.bf16.gmra.mxu0 %v2373
  %v4122 = vpop.f32.mrf.mxu0
  %v4123 = vadd.f32 %v2641, %v4122
  %v4124 = vpop.f32.mrf.mxu0
  %4125 = vdwg.mxu0
  %4126 = vmatpush.bf16.msra.mxu0 %v3464
  %4127 = vmatpush.bf16.msra.mxu0 %v3457
  %4128 = vmatpush.bf16.msra.mxu0 %v3450
  %4129 = vmatpush.bf16.msra.mxu0 %v3443
  %4130 = vmatpush.bf16.msra.mxu0 %v3436
  %4131 = vmatpush.bf16.msra.mxu0 %v3429
  %4132 = vmatpush.bf16.msra.mxu0 %v3422
  %4133 = vmatpush.bf16.msra.mxu0 %v3415
  %4134 = vmatmul.bf16.gmra.mxu0 %v2374
  %v4135 = vpop.f32.mrf.mxu0
  %v4136 = vadd.f32 %v4123, %v4135
  %v4137 = vpop.f32.mrf.mxu0
  %4138 = vdwg.mxu0
  %4139 = vmatpush.bf16.msra.mxu0 %v3520
  %4140 = vmatpush.bf16.msra.mxu0 %v3513
  %4141 = vmatpush.bf16.msra.mxu0 %v3506
  %4142 = vmatpush.bf16.msra.mxu0 %v3499
  %4143 = vmatpush.bf16.msra.mxu0 %v3492
  %4144 = vmatpush.bf16.msra.mxu0 %v3485
  %4145 = vmatpush.bf16.msra.mxu0 %v3478
  %4146 = vmatpush.bf16.msra.mxu0 %v3471
  %4147 = vmatmul.bf16.gmra.mxu0 %v2375
  %v4148 = vpop.f32.mrf.mxu0
  %v4149 = vadd.f32 %v4136, %v4148
  %v4150 = vpop.f32.mrf.mxu0
  %4151 = vdwg.mxu0
  %4152 = vmatpush.bf16.msra.mxu0 %v3576
  %4153 = vmatpush.bf16.msra.mxu0 %v3569
  %4154 = vmatpush.bf16.msra.mxu0 %v3562
  %4155 = vmatpush.bf16.msra.mxu0 %v3555
  %4156 = vmatpush.bf16.msra.mxu0 %v3548
  %4157 = vmatpush.bf16.msra.mxu0 %v3541
  %4158 = vmatpush.bf16.msra.mxu0 %v3534
  %4159 = vmatpush.bf16.msra.mxu0 %v3527
  %4160 = vmatmul.bf16.gmra.mxu0 %v2376
  %v4161 = vpop.f32.mrf.mxu0
  %v4162 = vadd.f32 %v4149, %v4161
  %v4163 = vpop.f32.mrf.mxu0
  %4164 = vdwg.mxu0
  %v4165 = vxor.u32 %v3850, 2147483648
  %v4166 = vxor.u32 %v3902, 2147483648
  %v4167 = vxor.u32 %v3954, 2147483648
  %v4168 = vxor.u32 %v4006, 2147483648
  %v4169 = vxor.u32 %v4058, 2147483648
  %v4170 = vxor.u32 %v4110, 2147483648
  %v4171 = vxor.u32 %v4162, 2147483648
  %v4172 = vmul.f32 %v4165, 1.442695
  %v4173 = vpow.pop %v4172
  %v4174 = vmul.f32 %v4166, 1.442695
  %v4175 = vpow.pop %v4174
  %v4176 = vmul.f32 %v4167, 1.442695
  %v4177 = vpow.pop %v4176
  %v4178 = vmul.f32 %v4168, 1.442695
  %v4179 = vpow.pop %v4178
  %v4180 = vmul.f32 %v4169, 1.442695
  %v4181 = vpow.pop %v4180
  %v4182 = vmul.f32 %v4170, 1.442695
  %v4183 = vpow.pop %v4182
  %v4184 = vmul.f32 %v4171, 1.442695
  %v4185 = vpow.pop %v4184
  %v4186 = vadd.f32 %v4173, 1.0
  %v4187 = vadd.f32 %v4175, 1.0
  %v4188 = vadd.f32 %v4177, 1.0
  %v4189 = vadd.f32 %v4179, 1.0
  %v4190 = vadd.f32 %v4181, 1.0
  %v4191 = vadd.f32 %v4183, 1.0
  %v4192 = vadd.f32 %v4185, 1.0
  %v4193 = vrcp.pop %v4186
  %v4194 = vmul.f32 %v4186, %v4193
  %v4195 = vsub.f32 1.0, %v4194
  %v4196 = vmul.f32 %v4193, %v4195
  %v4197 = vadd.f32 %v4193, %v4196
  %vm4198 = vweird.f32 %v4186
  %vm4199 = vweird.f32 %v4193
  %vm4200 = vmor %vm4198, %vm4199
  %v4201 = vsel %vm4200, %v4193, %v4197
  %v4202 = vand.u32 2147483647, %v4186
  %vm4203 = vcmp.eq.f32.partialorder %v4202, 8.507059e+37
  %v4204 = vand.u32 %v4186, 2147483648
  %v4205 = vor.u32 1.1754944e-38, %v4204
  %v4206 = vsel %vm4203, %v4205, %v4201
  %v4207 = vmul.f32 1.0, %v4206
  %v4208 = vrcp.pop %v4187
  %v4209 = vmul.f32 %v4187, %v4208
  %v4210 = vsub.f32 1.0, %v4209
  %v4211 = vmul.f32 %v4208, %v4210
  %v4212 = vadd.f32 %v4208, %v4211
  %vm4213 = vweird.f32 %v4187
  %vm4214 = vweird.f32 %v4208
  %vm4215 = vmor %vm4213, %vm4214
  %v4216 = vsel %vm4215, %v4208, %v4212
  %v4217 = vand.u32 2147483647, %v4187
  %vm4218 = vcmp.eq.f32.partialorder %v4217, 8.507059e+37
  %v4219 = vand.u32 %v4187, 2147483648
  %v4220 = vor.u32 1.1754944e-38, %v4219
  %v4221 = vsel %vm4218, %v4220, %v4216
  %v4222 = vmul.f32 1.0, %v4221
  %v4223 = vrcp.pop %v4188
  %v4224 = vmul.f32 %v4188, %v4223
  %v4225 = vsub.f32 1.0, %v4224
  %v4226 = vmul.f32 %v4223, %v4225
  %v4227 = vadd.f32 %v4223, %v4226
  %vm4228 = vweird.f32 %v4188
  %vm4229 = vweird.f32 %v4223
  %vm4230 = vmor %vm4228, %vm4229
  %v4231 = vsel %vm4230, %v4223, %v4227
  %v4232 = vand.u32 2147483647, %v4188
  %vm4233 = vcmp.eq.f32.partialorder %v4232, 8.507059e+37
  %v4234 = vand.u32 %v4188, 2147483648
  %v4235 = vor.u32 1.1754944e-38, %v4234
  %v4236 = vsel %vm4233, %v4235, %v4231
  %v4237 = vmul.f32 1.0, %v4236
  %v4238 = vrcp.pop %v4189
  %v4239 = vmul.f32 %v4189, %v4238
  %v4240 = vsub.f32 1.0, %v4239
  %v4241 = vmul.f32 %v4238, %v4240
  %v4242 = vadd.f32 %v4238, %v4241
  %vm4243 = vweird.f32 %v4189
  %vm4244 = vweird.f32 %v4238
  %vm4245 = vmor %vm4243, %vm4244
  %v4246 = vsel %vm4245, %v4238, %v4242
  %v4247 = vand.u32 2147483647, %v4189
  %vm4248 = vcmp.eq.f32.partialorder %v4247, 8.507059e+37
  %v4249 = vand.u32 %v4189, 2147483648
  %v4250 = vor.u32 1.1754944e-38, %v4249
  %v4251 = vsel %vm4248, %v4250, %v4246
  %v4252 = vmul.f32 1.0, %v4251
  %v4253 = vrcp.pop %v4190
  %v4254 = vmul.f32 %v4190, %v4253
  %v4255 = vsub.f32 1.0, %v4254
  %v4256 = vmul.f32 %v4253, %v4255
  %v4257 = vadd.f32 %v4253, %v4256
  %vm4258 = vweird.f32 %v4190
  %vm4259 = vweird.f32 %v4253
  %vm4260 = vmor %vm4258, %vm4259
  %v4261 = vsel %vm4260, %v4253, %v4257
  %v4262 = vand.u32 2147483647, %v4190
  %vm4263 = vcmp.eq.f32.partialorder %v4262, 8.507059e+37
  %v4264 = vand.u32 %v4190, 2147483648
  %v4265 = vor.u32 1.1754944e-38, %v4264
  %v4266 = vsel %vm4263, %v4265, %v4261
  %v4267 = vmul.f32 1.0, %v4266
  %v4268 = vrcp.pop %v4191
  %v4269 = vmul.f32 %v4191, %v4268
  %v4270 = vsub.f32 1.0, %v4269
  %v4271 = vmul.f32 %v4268, %v4270
  %v4272 = vadd.f32 %v4268, %v4271
  %vm4273 = vweird.f32 %v4191
  %vm4274 = vweird.f32 %v4268
  %vm4275 = vmor %vm4273, %vm4274
  %v4276 = vsel %vm4275, %v4268, %v4272
  %v4277 = vand.u32 2147483647, %v4191
  %vm4278 = vcmp.eq.f32.partialorder %v4277, 8.507059e+37
  %v4279 = vand.u32 %v4191, 2147483648
  %v4280 = vor.u32 1.1754944e-38, %v4279
  %v4281 = vsel %vm4278, %v4280, %v4276
  %v4282 = vmul.f32 1.0, %v4281
  %v4283 = vrcp.pop %v4192
  %v4284 = vmul.f32 %v4192, %v4283
  %v4285 = vsub.f32 1.0, %v4284
  %v4286 = vmul.f32 %v4283, %v4285
  %v4287 = vadd.f32 %v4283, %v4286
  %vm4288 = vweird.f32 %v4192
  %vm4289 = vweird.f32 %v4283
  %vm4290 = vmor %vm4288, %vm4289
  %v4291 = vsel %vm4290, %v4283, %v4287
  %v4292 = vand.u32 2147483647, %v4192
  %vm4293 = vcmp.eq.f32.partialorder %v4292, 8.507059e+37
  %v4294 = vand.u32 %v4192, 2147483648
  %v4295 = vor.u32 1.1754944e-38, %v4294
  %v4296 = vsel %vm4293, %v4295, %v4291
  %v4297 = vmul.f32 1.0, %v4296
  %4298 = vst [vmem:[%s10] sm:$0xff] %v4207
  %4299 = vst [vmem:[%s10 + $0x8] sm:$0xff] %v4222
  %4300 = vst [vmem:[%s10 + $0x10] sm:$0xff] %v4237
  %4301 = vst [vmem:[%s10 + $0x18] sm:$0xff] %v4252
  %4302 = vst [vmem:[%s10 + $0x20] sm:$0xff] %v4267
  %4303 = vst [vmem:[%s10 + $0x28] sm:$0xff] %v4282
  %4304 = vst.msk [vmem:[%s10 + $0x30] sm:$0xff] %vm1238, %v4297
  %4305 = vst [vmem:[%s11] sm:$0xff] %v2053
  %4306 = vst [vmem:[%s11 + $0x8] sm:$0xff] %v2105
  // Predicated region
  $region42: #{vae_forward.1} parent=0 // pred_check
    _
  $region43: #{vae_forward.1} parent=0 // pred_check_branch
    %4308 = sbr.rel (0) target = $region45
  $region44: #{vae_forward.1} parent=0 // pred_region
    _
  $region45: #{vae_forward.1} parent=0 // pred_fallthru
    _
  // Predicated region
  $region46: #{vae_forward.1} parent=0 // pred_check
    _
  $region47: #{vae_forward.1} parent=0 // pred_check_branch
    %4310 = sbr.rel (0) target = $region49
  $region48: #{vae_forward.1} parent=0 // pred_region
    _
  $region49: #{vae_forward.1} parent=0 // pred_fallthru
    _
  // Predicated region
  $region50: #{vae_forward.1} parent=0 // pred_check
    _
  $region51: #{vae_forward.1} parent=0 // pred_check_branch
    %4312 = sbr.rel (0) target = $region53
  $region52: #{vae_forward.1} parent=0 // pred_region
    _
  $region53: #{vae_forward.1} parent=0 // pred_fallthru
    _
  // Predicated region
  $region54: #{vae_forward.1} parent=0 // pred_check
    _
  $region55: #{vae_forward.1} parent=0 // pred_check_branch
    %4314 = sbr.rel (0) target = $region57
  $region56: #{vae_forward.1} parent=0 // pred_region
    _
  $region57: #{vae_forward.1} parent=0 // pred_fallthru
    _

</llo_original>
